<compile_context>
chip_gen: v5e
topology: v5e:2x2
jax: 0.10.0
libtpu: 0.0.40
codegen_flags: <defaults>
</compile_context>

<pallas_src>
import functools

import numpy as np
import jax
import jax.numpy as jnp
from jax import lax
from jax.experimental import pallas as pl
from jax.experimental.pallas import tpu as pltpu

EPS = 1e-5


# ----------------------------------------------------------------------------
# In-kernel helpers
# ----------------------------------------------------------------------------
def _mm(a, b, use_bf16):
    if use_bf16:
        a = a.astype(jnp.bfloat16)
        b = b.astype(jnp.bfloat16)
    return jnp.dot(a, b, preferred_element_type=jnp.float32)


# ----------------------------------------------------------------------------
# Fused kernels (one image per grid step, everything stays in VMEM)
# ----------------------------------------------------------------------------
def _fused_s1_kernel(x_ref, col_ref, w1_ref, b1_ref, wd_ref, b2_ref,
                     w3_ref, b3_ref, s_ref, o_ref, pad_ref,
                     *, W, has_pass, use_bf16):
    """Whole InvertedResidual block, stride 1.

    x_ref:   (1, M, Cin)    flattened NHWC image (M = H*W)
    col_ref: (M, 1)         float column index (p mod W), precomputed
    w1_ref:  (Cin, Nk)      1x1 expand conv, BN1 scale folded in
    wd_ref:  (25, Nk)       5x5 depthwise taps (BN2 scale folded), row-major
    w3_ref:  (Nk, Cout)     1x1 project conv, BN3 + concat + shuffle folded
    s_ref:   (Cin, Cout)    0/1 passthrough selection (shuffle folded)
    o_ref:   (1, M, Cout)   shuffled NHWC-flat output
    pad_ref: VMEM scratch (M + 4*W + 4, Nk): row-padded flat intermediate
    """
    M = o_ref.shape[1]
    nk = w1_ref.shape[1]
    off = 2 * W + 2

    x = x_ref[0]                                           # (M, Cin)
    y1 = _mm(x, w1_ref[...], use_bf16)
    y1 = jnp.maximum(y1 + b1_ref[...], 0.0)

    pad_ref[...] = jnp.zeros_like(pad_ref)                 # zero halo rows
    pad_ref[off:off + M, :] = y1

    col = col_ref[...]                                     # (M, 1) float
    wd = wd_ref[...]                                       # (25, Nk)
    acc = jnp.zeros((M, nk), jnp.float32)
    for dj in range(5):
        dc = dj - 2
        part = jnp.zeros((M, nk), jnp.float32)
        for di in range(5):
            start = di * W + dj
            part = part + pad_ref[start:start + M, :] * wd[di * 5 + dj]
        if dc != 0:
            valid = jnp.logical_and(col + dc >= 0, col + dc <= W - 1)
            part = jnp.where(valid, part, 0.0)
        acc = acc + part
    y2 = jnp.maximum(acc + b2_ref[...], 0.0)

    out = _mm(y2, w3_ref[...], use_bf16) + b3_ref[...]
    if has_pass:
        # passthrough channels: exact f32 copy via 0/1 selection matmul
        out = out + jnp.dot(x, s_ref[...], preferred_element_type=jnp.float32)
    o_ref[0] = out.astype(o_ref.dtype)


def _fused_s2_kernel(x_ref, col_ref, w1_ref, b1_ref, wd_ref, b2_ref,
                     w3_ref, b3_ref, o_ref, pad_ref, *, Wh, use_bf16):
    """Whole InvertedResidual block, stride 2 (block_type 2).

    The wrapper pre-splits the image into its 4 row/col parity phases
    (phase 2*p+q holds x[p::2, q::2]) concatenated along the pixel axis, so the
    stride-2 depthwise conv becomes a stride-1 stencil over per-phase buffers.

    x_ref:   (1, 4*Mo, Cin)   Mo = (H//2)*(W//2)
    col_ref: (Mo, 1)          float column index (p mod Wh)
    o_ref:   (1, Mo, Cout)
    pad_ref: VMEM scratch (4*(Mo + 2*(Wh+1)), Nk)
    """
    Mo = o_ref.shape[1]
    nk = w1_ref.shape[1]
    off = Wh + 1
    plen = Mo + 2 * off

    x_all = x_ref[0]                                       # (4*Mo, Cin)
    y1 = _mm(x_all, w1_ref[...], use_bf16)
    y1 = jnp.maximum(y1 + b1_ref[...], 0.0)

    pad_ref[...] = jnp.zeros_like(pad_ref)
    for ph in range(4):
        pad_ref[ph * plen + off:ph * plen + off + Mo, :] = \
            y1[ph * Mo:(ph + 1) * Mo, :]

    col = col_ref[...]
    wd = wd_ref[...]
    acc = jnp.zeros((Mo, nk), jnp.float32)
    for dj in range(5):
        q = dj % 2
        oj = (dj - 2) // 2            # column offset within the column phase
        part = jnp.zeros((Mo, nk), jnp.float32)
        for di in range(5):
            p = di % 2
            oi = (di - 2) // 2        # row offset within the row phase
            start = (2 * p + q) * plen + off + oi * Wh + oj
            part = part + pad_ref[start:start + Mo, :] * wd[di * 5 + dj]
        if oj != 0:
            valid = jnp.logical_and(col + oj >= 0, col + oj <= Wh - 1)
            part = jnp.where(valid, part, 0.0)
        acc = acc + part
    y2 = jnp.maximum(acc + b2_ref[...], 0.0)

    out = _mm(y2, w3_ref[...], use_bf16) + b3_ref[...]
    o_ref[0] = out.astype(o_ref.dtype)


# ----------------------------------------------------------------------------
# pallas_call wrappers
# ----------------------------------------------------------------------------
def _compiler_params(vmem_est_bytes):
    # Explicit scoped-VMEM budget: generous headroom, but stays <= v7x's 64 MiB.
    limit = int(min(max(4 * vmem_est_bytes, 32 * 1024 * 1024), 48 * 1024 * 1024))
    return pltpu.CompilerParams(dimension_semantics=("parallel",),
                                vmem_limit_bytes=limit)


def _fused_block_s1(x_flat, col, params, *, W, has_pass, use_bf16):
    B, M, Cin = x_flat.shape
    nk = params["w1"].shape[1]
    Cout = params["w3"].shape[1]
    pad_len = M + 4 * W + 4
    est = 4 * (2 * M * Cin + 2 * M * Cout + pad_len * nk + 6 * M * nk)
    kern = functools.partial(_fused_s1_kernel, W=W, has_pass=has_pass,
                             use_bf16=use_bf16)
    return pl.pallas_call(
        kern,
        out_shape=jax.ShapeDtypeStruct((B, M, Cout), jnp.float32),
        grid=(B,),
        in_specs=[
            pl.BlockSpec((1, M, Cin), lambda b: (b, 0, 0)),
            pl.BlockSpec((M, 1), lambda b: (0, 0)),
            pl.BlockSpec(params["w1"].shape, lambda b: (0, 0)),
            pl.BlockSpec(params["b1"].shape, lambda b: (0, 0)),
            pl.BlockSpec(params["wd"].shape, lambda b: (0, 0)),
            pl.BlockSpec(params["b2"].shape, lambda b: (0, 0)),
            pl.BlockSpec(params["w3"].shape, lambda b: (0, 0)),
            pl.BlockSpec(params["b3"].shape, lambda b: (0, 0)),
            pl.BlockSpec(params["s"].shape, lambda b: (0, 0)),
        ],
        out_specs=pl.BlockSpec((1, M, Cout), lambda b: (b, 0, 0)),
        scratch_shapes=[pltpu.VMEM((pad_len, nk), jnp.float32)],
        compiler_params=_compiler_params(est),
    )(x_flat, col, params["w1"], params["b1"], params["wd"], params["b2"],
      params["w3"], params["b3"], params["s"])


def _fused_block_s2(x_ph, col, params, *, Wh, use_bf16):
    B, M4, Cin = x_ph.shape
    Mo = M4 // 4
    nk = params["w1"].shape[1]
    Cout = params["w3"].shape[1]
    pad_len = 4 * (Mo + 2 * (Wh + 1))
    est = 4 * (2 * M4 * Cin + 2 * Mo * Cout + pad_len * nk + 6 * Mo * nk)
    kern = functools.partial(_fused_s2_kernel, Wh=Wh, use_bf16=use_bf16)
    return pl.pallas_call(
        kern,
        out_shape=jax.ShapeDtypeStruct((B, Mo, Cout), jnp.float32),
        grid=(B,),
        in_specs=[
            pl.BlockSpec((1, M4, Cin), lambda b: (b, 0, 0)),
            pl.BlockSpec((Mo, 1), lambda b: (0, 0)),
            pl.BlockSpec(params["w1"].shape, lambda b: (0, 0)),
            pl.BlockSpec(params["b1"].shape, lambda b: (0, 0)),
            pl.BlockSpec(params["wd"].shape, lambda b: (0, 0)),
            pl.BlockSpec(params["b2"].shape, lambda b: (0, 0)),
            pl.BlockSpec(params["w3"].shape, lambda b: (0, 0)),
            pl.BlockSpec(params["b3"].shape, lambda b: (0, 0)),
        ],
        out_specs=pl.BlockSpec((1, Mo, Cout), lambda b: (b, 0, 0)),
        scratch_shapes=[pltpu.VMEM((pad_len, nk), jnp.float32)],
        compiler_params=_compiler_params(est),
    )(x_ph, col, params["w1"], params["b1"], params["wd"], params["b2"],
      params["w3"], params["b3"])


# ----------------------------------------------------------------------------
# Parameter setup (deterministic), BN folding, shuffle folding
# ----------------------------------------------------------------------------
def _fold_bn(gamma, beta, mean, var):
    scale = gamma / jnp.sqrt(var + EPS)
    bias = beta - mean * scale
    return scale, bias


def _init_bn(key, c):
    k1, k2, k3, k4 = jax.random.split(key, 4)
    gamma = jax.random.uniform(k1, (c,), jnp.float32, 0.5, 1.5)
    beta = jax.random.normal(k2, (c,), jnp.float32) * 0.1
    mean = jax.random.normal(k3, (c,), jnp.float32) * 0.1
    var = jax.random.uniform(k4, (c,), jnp.float32, 0.5, 1.5)
    return _fold_bn(gamma, beta, mean, var)


def _init_branch(key, cin, cneck, cout):
    ks = jax.random.split(key, 6)
    return dict(
        w1=jax.random.normal(ks[0], (cin, cneck), jnp.float32) * 0.2,
        bn1=_init_bn(ks[1], cneck),
        wd=jax.random.normal(ks[2], (5, 5, cneck), jnp.float32) * 0.1,
        bn2=_init_bn(ks[3], cneck),
        w3=jax.random.normal(ks[4], (cneck, cout), jnp.float32) * 0.2,
        bn3=_init_bn(ks[5], cout),
    )


def _fold_branch(raw):
    s1, b1 = raw["bn1"]
    s2, b2 = raw["bn2"]
    s3, b3 = raw["bn3"]
    w1 = raw["w1"] * s1[None, :]
    wd = (raw["wd"] * s2[None, None, :]).reshape(25, -1)
    w3 = raw["w3"] * s3[None, :]
    return w1, b1, wd, b2, w3, b3


def _shuffle_perm(c, groups, mini_size):
    cpg = c // groups
    mnpg = cpg // mini_size
    assert groups * mnpg * mini_size == c
    perm = []
    for m in range(mnpg):
        for g in range(groups):
            for s in range(mini_size):
                perm.append((g * mnpg + m) * mini_size + s)
    return jnp.array(perm, dtype=jnp.int32)


def _build_fused(block_type, channel_in, channel_out, raw1, raw2, mini_size):
    cin, cout = channel_in, channel_out
    w1a, b1a, wda, b2a, w3a, b3a = _fold_branch(raw1)
    nk = w1a.shape[1]
    inc = w3a.shape[1]
    if block_type == 2:
        w1b, b1b, wdb, b2b, w3b, b3b = _fold_branch(raw2)
        cbr = cin // 2
        W1 = jnp.zeros((cin, 2 * nk), jnp.float32)
        W1 = W1.at[:cbr, :nk].set(w1a).at[cbr:, nk:].set(w1b)
        B1 = jnp.concatenate([b1a, b1b])
        WD = jnp.concatenate([wda, wdb], axis=1)
        B2 = jnp.concatenate([b2a, b2b])
        W3 = jnp.zeros((2 * nk, cout), jnp.float32)
        W3 = W3.at[:nk, :inc].set(w3a).at[nk:, inc:].set(w3b)
        B3 = jnp.concatenate([b3a, b3b])
        S = jnp.zeros((cin, cout), jnp.float32)
        has_pass = False
    elif block_type == 1:
        W1, B1, WD, B2 = w1a, b1a, wda, b2a
        W3 = jnp.zeros((nk, cout), jnp.float32).at[:, :inc].set(w3a)
        B3 = jnp.zeros((cout,), jnp.float32).at[:inc].set(b3a)
        S = jnp.zeros((cin, cout), jnp.float32)
        S = S.at[jnp.arange(cin), inc + jnp.arange(cin)].set(1.0)
        has_pass = True
    else:  # block_type == 3
        cbr = cin // 2
        W1 = jnp.zeros((cin, nk), jnp.float32).at[:cbr, :].set(w1a)
        B1, WD, B2 = b1a, wda, b2a
        W3 = jnp.zeros((nk, cout), jnp.float32).at[:, :inc].set(w3a)
        B3 = jnp.zeros((cout,), jnp.float32).at[:inc].set(b3a)
        npass = cin - cbr
        S = jnp.zeros((cin, cout), jnp.float32)
        S = S.at[cbr + jnp.arange(npass), inc + jnp.arange(npass)].set(1.0)
        has_pass = True
    # fold concat ordering + channel shuffle (groups=2) into the output channels
    perm = _shuffle_perm(cout, 2, mini_size)
    W3 = W3[:, perm]
    B3 = B3[perm]
    S = S[:, perm]
    params = dict(w1=W1, b1=B1.reshape(1, -1), wd=WD, b2=B2.reshape(1, -1),
                  w3=W3, b3=B3.reshape(1, -1), s=S)
    return params, has_pass


# ----------------------------------------------------------------------------
# Module wrapper (NCHW in / NCHW out, like the PyTorch reference)
# ----------------------------------------------------------------------------
class InvertedResidualPallas:
    def __init__(self, key, channel_in, channel_out, channel_neck, stride,
                 block_type, mini_size=4, use_bf16=True):
        assert stride in (1, 2)
        assert channel_out % (2 * mini_size) == 0, \
            "channel shuffle needs channel_out % (groups*mini_size) == 0"
        self.mini_size = mini_size
        self.block_type = block_type
        self.stride = stride
        self.channel_in = channel_in
        self.channel_out = channel_out
        self.use_bf16 = use_bf16
        k1, k2 = jax.random.split(key)
        self.branch2 = None
        if block_type == 1:
            assert stride == 1
            self.channel_branch_in = channel_in
            self.branch1 = _init_branch(k1, channel_in, channel_neck,
                                        channel_out - channel_in)
        elif block_type == 2:
            self.channel_branch_in = channel_in // 2
            self.branch1 = _init_branch(k1, self.channel_branch_in, channel_neck,
                                        channel_out - channel_in)
            self.branch2 = _init_branch(k2, self.channel_branch_in, channel_neck,
                                        channel_in)
        elif block_type == 3:
            assert stride == 1
            self.channel_branch_in = channel_in // 2
            self.branch1 = _init_branch(k1, self.channel_branch_in, channel_neck,
                                        channel_out - self.channel_branch_in)
        else:
            raise TypeError("unsupported block type")
        self.params, self.has_pass = _build_fused(
            block_type, channel_in, channel_out, self.branch1, self.branch2,
            mini_size)

    def __call__(self, x_nchw):
        B, C, H, W = x_nchw.shape
        assert C == self.channel_in
        x_nhwc = jnp.transpose(x_nchw, (0, 2, 3, 1)).astype(jnp.float32)
        if self.stride == 1:
            M = H * W
            x_flat = x_nhwc.reshape(B, M, C)
            col = jnp.asarray((np.arange(M) % W).reshape(M, 1), jnp.float32)
            out_flat = _fused_block_s1(x_flat, col, self.params, W=W,
                                       has_pass=self.has_pass,
                                       use_bf16=self.use_bf16)
            Ho, Wo = H, W
        else:
            assert H % 2 == 0 and W % 2 == 0, "stride-2 path assumes even H, W"
            Hh, Wh = H // 2, W // 2
            Mo = Hh * Wh
            phases = [x_nhwc[:, p::2, q::2, :].reshape(B, Mo, C)
                      for p in (0, 1) for q in (0, 1)]
            x_ph = jnp.concatenate(phases, axis=1)          # (B, 4*Mo, C)
            col = jnp.asarray((np.arange(Mo) % Wh).reshape(Mo, 1), jnp.float32)
            out_flat = _fused_block_s2(x_ph, col, self.params, Wh=Wh,
                                       use_bf16=self.use_bf16)
            Ho, Wo = Hh, Wh
        out = out_flat.reshape(B, Ho, Wo, self.channel_out)
        return jnp.transpose(out, (0, 3, 1, 2))


# ----------------------------------------------------------------------------
# Pure-JAX (lax.conv) reference for correctness checking
# ----------------------------------------------------------------------------
def channel_shuffle_nchw(x, groups, mini_size=4):
    B, C, H, W = x.shape
    cpg = C // groups
    mnpg = cpg // mini_size
    x = x.reshape(B, groups, mnpg, mini_size, H, W)
    x = jnp.transpose(x, (0, 2, 1, 3, 4, 5))
    return x.reshape(B, C, H, W)


def _ref_branch(params, x_nchw, stride):
    dn = ("NCHW", "OIHW", "NCHW")
    w1 = jnp.transpose(params["w1"], (1, 0))[:, :, None, None]
    s1, b1 = params["bn1"]
    y = lax.conv_general_dilated(x_nchw, w1, (1, 1), "VALID", dimension_numbers=dn)
    y = jnp.maximum(y * s1[None, :, None, None] + b1[None, :, None, None], 0.0)
    C = y.shape[1]
    wd = jnp.transpose(params["wd"], (2, 0, 1))[:, None, :, :]
    s2, b2 = params["bn2"]
    y = lax.conv_general_dilated(y, wd, (stride, stride), ((2, 2), (2, 2)),
                                 dimension_numbers=dn, feature_group_count=C)
    y = jnp.maximum(y * s2[None, :, None, None] + b2[None, :, None, None], 0.0)
    w3 = jnp.transpose(params["w3"], (1, 0))[:, :, None, None]
    s3, b3 = params["bn3"]
    y = lax.conv_general_dilated(y, w3, (1, 1), "VALID", dimension_numbers=dn)
    return y * s3[None, :, None, None] + b3[None, :, None, None]


def _ref_forward(mod, x_nchw):
    if mod.block_type == 1:
        out = jnp.concatenate([_ref_branch(mod.branch1, x_nchw, mod.stride),
                               x_nchw], axis=1)
    elif mod.block_type == 2:
        x1 = x_nchw[:, :mod.channel_branch_in]
        x2 = x_nchw[:, mod.channel_branch_in:]
        out = jnp.concatenate([_ref_branch(mod.branch1, x1, mod.stride),
                               _ref_branch(mod.branch2, x2, mod.stride)], axis=1)
    else:
        x1 = x_nchw[:, :mod.channel_branch_in]
        x2 = x_nchw[:, mod.channel_branch_in:]
        out = jnp.concatenate([_ref_branch(mod.branch1, x1, mod.stride), x2], axis=1)
    return channel_shuffle_nchw(out, 2, mod.mini_size)


if __name__ == "__main__":
    key = jax.random.PRNGKey(0)
    kx, kp = jax.random.split(key)
    B, Cin, H, W = 2, 8, 16, 16
    Cout, Cneck = 16, 8
    x = jax.random.normal(kx, (B, Cin, H, W), jnp.float32)

    # bf16 MXU path (default): all supported (block_type, stride) configurations
    for block_type, stride in [(1, 1), (2, 1), (2, 2), (3, 1)]:
        mod = InvertedResidualPallas(kp, Cin, Cout, Cneck, stride, block_type,
                                     mini_size=4, use_bf16=True)
        out = jax.block_until_ready(mod(x))
        ref = _ref_forward(mod, x)
        assert out.shape == ref.shape, (out.shape, ref.shape)
        err = float(jnp.max(jnp.abs(out - ref)))
        assert jnp.allclose(out, ref, rtol=5e-2, atol=5e-2), (block_type, stride, err)

    # exact f32 path, tight tolerance (checks the fused math itself)
    mod = InvertedResidualPallas(kp, Cin, Cout, Cneck, 2, 2, mini_size=4,
                                 use_bf16=False)
    out = jax.block_until_ready(mod(x))
    ref = _ref_forward(mod, x)
    err = float(jnp.max(jnp.abs(out - ref)))
    assert jnp.allclose(out, ref, rtol=1e-4, atol=1e-4), err

    print("KERNEL_OK")
</pallas_src>

<mosaic_0001>
module attributes {stable_mosaic.version = 11 : i64} {
  func.func @_fused_s1_kernel(%arg0: i32, %arg1: memref<1x256x8xf32, #tpu.memory_space<vmem>>, %arg2: memref<256x1xf32, #tpu.memory_space<vmem>>, %arg3: memref<8x8xf32, #tpu.memory_space<vmem>>, %arg4: memref<1x8xf32, #tpu.memory_space<vmem>>, %arg5: memref<25x8xf32, #tpu.memory_space<vmem>>, %arg6: memref<1x8xf32, #tpu.memory_space<vmem>>, %arg7: memref<8x16xf32, #tpu.memory_space<vmem>>, %arg8: memref<1x16xf32, #tpu.memory_space<vmem>>, %arg9: memref<8x16xf32, #tpu.memory_space<vmem>>, %arg10: memref<1x256x16xf32, #tpu.memory_space<vmem>>, %arg11: memref<324x8xf32, #tpu.memory_space<vmem>>) attributes {dimension_semantics = [#tpu.dimension_semantics<parallel>], iteration_bounds = array<i64: 2>, scalar_prefetch = 0 : i64, scratch_operands = 1 : i64, tpu.core_type = #tpu.core_type<tc>, window_params = [{transform_indices = @transform_0, window_bounds = array<i64: 1, 256, 8>}, {pipeline_mode = #tpu.pipeline_mode<synchronous>, transform_indices = @transform_1, window_bounds = array<i64: 256, 1>}, {pipeline_mode = #tpu.pipeline_mode<synchronous>, transform_indices = @transform_2, window_bounds = array<i64: 8, 8>}, {pipeline_mode = #tpu.pipeline_mode<synchronous>, transform_indices = @transform_3, window_bounds = array<i64: 1, 8>}, {pipeline_mode = #tpu.pipeline_mode<synchronous>, transform_indices = @transform_4, window_bounds = array<i64: 25, 8>}, {pipeline_mode = #tpu.pipeline_mode<synchronous>, transform_indices = @transform_5, window_bounds = array<i64: 1, 8>}, {pipeline_mode = #tpu.pipeline_mode<synchronous>, transform_indices = @transform_6, window_bounds = array<i64: 8, 16>}, {pipeline_mode = #tpu.pipeline_mode<synchronous>, transform_indices = @transform_7, window_bounds = array<i64: 1, 16>}, {pipeline_mode = #tpu.pipeline_mode<synchronous>, transform_indices = @transform_8, window_bounds = array<i64: 8, 16>}, {transform_indices = @transform_9, window_bounds = array<i64: 1, 256, 16>}]} {
    %c0 = arith.constant 0 : index
    %c0_0 = arith.constant 0 : index
    %c0_1 = arith.constant 0 : index
    %0 = vector.load %arg1[%c0, %c0_0, %c0_1] : memref<1x256x8xf32, #tpu.memory_space<vmem>>, vector<1x256x8xf32>
    %1 = vector.shape_cast %0 : vector<1x256x8xf32> to vector<256x8xf32>
    %c0_2 = arith.constant 0 : index
    %c0_3 = arith.constant 0 : index
    %2 = vector.load %arg3[%c0_2, %c0_3] : memref<8x8xf32, #tpu.memory_space<vmem>>, vector<8x8xf32>
    %3 = arith.truncf %1 : vector<256x8xf32> to vector<256x8xbf16>
    %4 = arith.truncf %2 : vector<8x8xf32> to vector<8x8xbf16>
    %cst = arith.constant dense<0.000000e+00> : vector<256x8xf32>
    %5 = tpu.matmul %3, %4, %cst {dimension_numbers = #tpu.dot_dimension_numbers<[1], [0], [0], [1], [0, 0, 1, 1], [], []>} : vector<256x8xbf16>, vector<8x8xbf16>, vector<256x8xf32> -> vector<256x8xf32>
    %c0_4 = arith.constant 0 : index
    %c0_5 = arith.constant 0 : index
    %6 = vector.load %arg4[%c0_4, %c0_5] : memref<1x8xf32, #tpu.memory_space<vmem>>, vector<1x8xf32>
    %7 = vector.broadcast %6 : vector<1x8xf32> to vector<256x8xf32>
    %8 = arith.addf %5, %7 : vector<256x8xf32>
    %cst_6 = arith.constant 0.000000e+00 : f32
    %9 = vector.broadcast %cst_6 : f32 to vector<256x8xf32>
    %10 = arith.maximumf %8, %9 : vector<256x8xf32>
    %cst_7 = arith.constant 0.000000e+00 : f32
    %11 = vector.broadcast %cst_7 : f32 to vector<324x8xf32>
    %c0_8 = arith.constant 0 : index
    %c0_9 = arith.constant 0 : index
    %12 = vector.load %arg11[%c0_8, %c0_9] : memref<324x8xf32, #tpu.memory_space<vmem>>, vector<324x8xf32>
    tpu.vector_store %arg11[%c0_8, %c0_9], %11 {strides = array<i32>} : memref<324x8xf32, #tpu.memory_space<vmem>>, vector<324x8xf32>,
    %c34 = arith.constant 34 : index
    %c0_10 = arith.constant 0 : index
    %13 = vector.load %arg11[%c34, %c0_10] : memref<324x8xf32, #tpu.memory_space<vmem>>, vector<256x8xf32>
    tpu.vector_store %arg11[%c34, %c0_10], %10 {strides = array<i32>} : memref<324x8xf32, #tpu.memory_space<vmem>>, vector<256x8xf32>,
    %c0_11 = arith.constant 0 : index
    %c0_12 = arith.constant 0 : index
    %14 = vector.load %arg2[%c0_11, %c0_12] : memref<256x1xf32, #tpu.memory_space<vmem>>, vector<256x1xf32>
    %c0_13 = arith.constant 0 : index
    %c0_14 = arith.constant 0 : index
    %15 = vector.load %arg5[%c0_13, %c0_14] : memref<25x8xf32, #tpu.memory_space<vmem>>, vector<25x8xf32>
    %cst_15 = arith.constant 0.000000e+00 : f32
    %16 = vector.broadcast %cst_15 : f32 to vector<256x8xf32>
    %cst_16 = arith.constant 0.000000e+00 : f32
    %17 = vector.broadcast %cst_16 : f32 to vector<256x8xf32>
    %c0_17 = arith.constant 0 : index
    %c0_18 = arith.constant 0 : index
    %18 = vector.load %arg11[%c0_17, %c0_18] : memref<324x8xf32, #tpu.memory_space<vmem>>, vector<256x8xf32>
    %19 = vector.extract_strided_slice %15 {offsets = [0, 0], sizes = [1, 8], strides = [1, 1]} : vector<25x8xf32> to vector<1x8xf32>
    %20 = vector.shape_cast %19 : vector<1x8xf32> to vector<8xf32>
    %21 = vector.shape_cast %20 : vector<8xf32> to vector<1x8xf32>
    %22 = vector.broadcast %21 : vector<1x8xf32> to vector<256x8xf32>
    %23 = arith.mulf %18, %22 : vector<256x8xf32>
    %24 = arith.addf %17, %23 : vector<256x8xf32>
    %c16 = arith.constant 16 : index
    %c0_19 = arith.constant 0 : index
    %25 = vector.load %arg11[%c16, %c0_19] : memref<324x8xf32, #tpu.memory_space<vmem>>, vector<256x8xf32>
    %26 = vector.extract_strided_slice %15 {offsets = [5, 0], sizes = [1, 8], strides = [1, 1]} : vector<25x8xf32> to vector<1x8xf32>
    %27 = vector.shape_cast %26 : vector<1x8xf32> to vector<8xf32>
    %28 = vector.shape_cast %27 : vector<8xf32> to vector<1x8xf32>
    %29 = vector.broadcast %28 : vector<1x8xf32> to vector<256x8xf32>
    %30 = arith.mulf %25, %29 : vector<256x8xf32>
    %31 = arith.addf %24, %30 : vector<256x8xf32>
    %c32 = arith.constant 32 : index
    %c0_20 = arith.constant 0 : index
    %32 = vector.load %arg11[%c32, %c0_20] : memref<324x8xf32, #tpu.memory_space<vmem>>, vector<256x8xf32>
    %33 = vector.extract_strided_slice %15 {offsets = [10, 0], sizes = [1, 8], strides = [1, 1]} : vector<25x8xf32> to vector<1x8xf32>
    %34 = vector.shape_cast %33 : vector<1x8xf32> to vector<8xf32>
    %35 = vector.shape_cast %34 : vector<8xf32> to vector<1x8xf32>
    %36 = vector.broadcast %35 : vector<1x8xf32> to vector<256x8xf32>
    %37 = arith.mulf %32, %36 : vector<256x8xf32>
    %38 = arith.addf %31, %37 : vector<256x8xf32>
    %c48 = arith.constant 48 : index
    %c0_21 = arith.constant 0 : index
    %39 = vector.load %arg11[%c48, %c0_21] : memref<324x8xf32, #tpu.memory_space<vmem>>, vector<256x8xf32>
    %40 = vector.extract_strided_slice %15 {offsets = [15, 0], sizes = [1, 8], strides = [1, 1]} : vector<25x8xf32> to vector<1x8xf32>
    %41 = vector.shape_cast %40 : vector<1x8xf32> to vector<8xf32>
    %42 = vector.shape_cast %41 : vector<8xf32> to vector<1x8xf32>
    %43 = vector.broadcast %42 : vector<1x8xf32> to vector<256x8xf32>
    %44 = arith.mulf %39, %43 : vector<256x8xf32>
    %45 = arith.addf %38, %44 : vector<256x8xf32>
    %c64 = arith.constant 64 : index
    %c0_22 = arith.constant 0 : index
    %46 = vector.load %arg11[%c64, %c0_22] : memref<324x8xf32, #tpu.memory_space<vmem>>, vector<256x8xf32>
    %47 = vector.extract_strided_slice %15 {offsets = [20, 0], sizes = [1, 8], strides = [1, 1]} : vector<25x8xf32> to vector<1x8xf32>
    %48 = vector.shape_cast %47 : vector<1x8xf32> to vector<8xf32>
    %49 = vector.shape_cast %48 : vector<8xf32> to vector<1x8xf32>
    %50 = vector.broadcast %49 : vector<1x8xf32> to vector<256x8xf32>
    %51 = arith.mulf %46, %50 : vector<256x8xf32>
    %52 = arith.addf %45, %51 : vector<256x8xf32>
    %cst_23 = arith.constant -2.000000e+00 : f32
    %53 = vector.broadcast %cst_23 : f32 to vector<256x1xf32>
    %54 = arith.addf %14, %53 : vector<256x1xf32>
    %cst_24 = arith.constant 0.000000e+00 : f32
    %55 = vector.broadcast %cst_24 : f32 to vector<256x1xf32>
    %56 = arith.cmpf oge, %54, %55 : vector<256x1xf32>
    %cst_25 = arith.constant -2.000000e+00 : f32
    %57 = vector.broadcast %cst_25 : f32 to vector<256x1xf32>
    %58 = arith.addf %14, %57 : vector<256x1xf32>
    %cst_26 = arith.constant 1.500000e+01 : f32
    %59 = vector.broadcast %cst_26 : f32 to vector<256x1xf32>
    %60 = arith.cmpf ole, %58, %59 : vector<256x1xf32>
    %61 = arith.andi %56, %60 : vector<256x1xi1>
    %cst_27 = arith.constant 0.000000e+00 : f32
    %62 = vector.shape_cast %61 : vector<256x1xi1> to vector<256x1xi1>
    %63 = vector.broadcast %62 : vector<256x1xi1> to vector<256x8xi1>
    %64 = vector.broadcast %cst_27 : f32 to vector<256x8xf32>
    %65 = arith.select %63, %52, %64 : vector<256x8xi1>, vector<256x8xf32>
    %66 = arith.addf %16, %65 : vector<256x8xf32>
    %cst_28 = arith.constant 0.000000e+00 : f32
    %67 = vector.broadcast %cst_28 : f32 to vector<256x8xf32>
    %c1 = arith.constant 1 : index
    %c0_29 = arith.constant 0 : index
    %68 = vector.load %arg11[%c1, %c0_29] : memref<324x8xf32, #tpu.memory_space<vmem>>, vector<256x8xf32>
    %69 = vector.extract_strided_slice %15 {offsets = [1, 0], sizes = [1, 8], strides = [1, 1]} : vector<25x8xf32> to vector<1x8xf32>
    %70 = vector.shape_cast %69 : vector<1x8xf32> to vector<8xf32>
    %71 = vector.shape_cast %70 : vector<8xf32> to vector<1x8xf32>
    %72 = vector.broadcast %71 : vector<1x8xf32> to vector<256x8xf32>
    %73 = arith.mulf %68, %72 : vector<256x8xf32>
    %74 = arith.addf %67, %73 : vector<256x8xf32>
    %c17 = arith.constant 17 : index
    %c0_30 = arith.constant 0 : index
    %75 = vector.load %arg11[%c17, %c0_30] : memref<324x8xf32, #tpu.memory_space<vmem>>, vector<256x8xf32>
    %76 = vector.extract_strided_slice %15 {offsets = [6, 0], sizes = [1, 8], strides = [1, 1]} : vector<25x8xf32> to vector<1x8xf32>
    %77 = vector.shape_cast %76 : vector<1x8xf32> to vector<8xf32>
    %78 = vector.shape_cast %77 : vector<8xf32> to vector<1x8xf32>
    %79 = vector.broadcast %78 : vector<1x8xf32> to vector<256x8xf32>
    %80 = arith.mulf %75, %79 : vector<256x8xf32>
    %81 = arith.addf %74, %80 : vector<256x8xf32>
    %c33 = arith.constant 33 : index
    %c0_31 = arith.constant 0 : index
    %82 = vector.load %arg11[%c33, %c0_31] : memref<324x8xf32, #tpu.memory_space<vmem>>, vector<256x8xf32>
    %83 = vector.extract_strided_slice %15 {offsets = [11, 0], sizes = [1, 8], strides = [1, 1]} : vector<25x8xf32> to vector<1x8xf32>
    %84 = vector.shape_cast %83 : vector<1x8xf32> to vector<8xf32>
    %85 = vector.shape_cast %84 : vector<8xf32> to vector<1x8xf32>
    %86 = vector.broadcast %85 : vector<1x8xf32> to vector<256x8xf32>
    %87 = arith.mulf %82, %86 : vector<256x8xf32>
    %88 = arith.addf %81, %87 : vector<256x8xf32>
    %c49 = arith.constant 49 : index
    %c0_32 = arith.constant 0 : index
    %89 = vector.load %arg11[%c49, %c0_32] : memref<324x8xf32, #tpu.memory_space<vmem>>, vector<256x8xf32>
    %90 = vector.extract_strided_slice %15 {offsets = [16, 0], sizes = [1, 8], strides = [1, 1]} : vector<25x8xf32> to vector<1x8xf32>
    %91 = vector.shape_cast %90 : vector<1x8xf32> to vector<8xf32>
    %92 = vector.shape_cast %91 : vector<8xf32> to vector<1x8xf32>
    %93 = vector.broadcast %92 : vector<1x8xf32> to vector<256x8xf32>
    %94 = arith.mulf %89, %93 : vector<256x8xf32>
    %95 = arith.addf %88, %94 : vector<256x8xf32>
    %c65 = arith.constant 65 : index
    %c0_33 = arith.constant 0 : index
    %96 = vector.load %arg11[%c65, %c0_33] : memref<324x8xf32, #tpu.memory_space<vmem>>, vector<256x8xf32>
    %97 = vector.extract_strided_slice %15 {offsets = [21, 0], sizes = [1, 8], strides = [1, 1]} : vector<25x8xf32> to vector<1x8xf32>
    %98 = vector.shape_cast %97 : vector<1x8xf32> to vector<8xf32>
    %99 = vector.shape_cast %98 : vector<8xf32> to vector<1x8xf32>
    %100 = vector.broadcast %99 : vector<1x8xf32> to vector<256x8xf32>
    %101 = arith.mulf %96, %100 : vector<256x8xf32>
    %102 = arith.addf %95, %101 : vector<256x8xf32>
    %cst_34 = arith.constant -1.000000e+00 : f32
    %103 = vector.broadcast %cst_34 : f32 to vector<256x1xf32>
    %104 = arith.addf %14, %103 : vector<256x1xf32>
    %cst_35 = arith.constant 0.000000e+00 : f32
    %105 = vector.broadcast %cst_35 : f32 to vector<256x1xf32>
    %106 = arith.cmpf oge, %104, %105 : vector<256x1xf32>
    %cst_36 = arith.constant -1.000000e+00 : f32
    %107 = vector.broadcast %cst_36 : f32 to vector<256x1xf32>
    %108 = arith.addf %14, %107 : vector<256x1xf32>
    %cst_37 = arith.constant 1.500000e+01 : f32
    %109 = vector.broadcast %cst_37 : f32 to vector<256x1xf32>
    %110 = arith.cmpf ole, %108, %109 : vector<256x1xf32>
    %111 = arith.andi %106, %110 : vector<256x1xi1>
    %cst_38 = arith.constant 0.000000e+00 : f32
    %112 = vector.shape_cast %111 : vector<256x1xi1> to vector<256x1xi1>
    %113 = vector.broadcast %112 : vector<256x1xi1> to vector<256x8xi1>
    %114 = vector.broadcast %cst_38 : f32 to vector<256x8xf32>
    %115 = arith.select %113, %102, %114 : vector<256x8xi1>, vector<256x8xf32>
    %116 = arith.addf %66, %115 : vector<256x8xf32>
    %cst_39 = arith.constant 0.000000e+00 : f32
    %117 = vector.broadcast %cst_39 : f32 to vector<256x8xf32>
    %c2 = arith.constant 2 : index
    %c0_40 = arith.constant 0 : index
    %118 = vector.load %arg11[%c2, %c0_40] : memref<324x8xf32, #tpu.memory_space<vmem>>, vector<256x8xf32>
    %119 = vector.extract_strided_slice %15 {offsets = [2, 0], sizes = [1, 8], strides = [1, 1]} : vector<25x8xf32> to vector<1x8xf32>
    %120 = vector.shape_cast %119 : vector<1x8xf32> to vector<8xf32>
    %121 = vector.shape_cast %120 : vector<8xf32> to vector<1x8xf32>
    %122 = vector.broadcast %121 : vector<1x8xf32> to vector<256x8xf32>
    %123 = arith.mulf %118, %122 : vector<256x8xf32>
    %124 = arith.addf %117, %123 : vector<256x8xf32>
    %c18 = arith.constant 18 : index
    %c0_41 = arith.constant 0 : index
    %125 = vector.load %arg11[%c18, %c0_41] : memref<324x8xf32, #tpu.memory_space<vmem>>, vector<256x8xf32>
    %126 = vector.extract_strided_slice %15 {offsets = [7, 0], sizes = [1, 8], strides = [1, 1]} : vector<25x8xf32> to vector<1x8xf32>
    %127 = vector.shape_cast %126 : vector<1x8xf32> to vector<8xf32>
    %128 = vector.shape_cast %127 : vector<8xf32> to vector<1x8xf32>
    %129 = vector.broadcast %128 : vector<1x8xf32> to vector<256x8xf32>
    %130 = arith.mulf %125, %129 : vector<256x8xf32>
    %131 = arith.addf %124, %130 : vector<256x8xf32>
    %c34_42 = arith.constant 34 : index
    %c0_43 = arith.constant 0 : index
    %132 = vector.load %arg11[%c34_42, %c0_43] : memref<324x8xf32, #tpu.memory_space<vmem>>, vector<256x8xf32>
    %133 = vector.extract_strided_slice %15 {offsets = [12, 0], sizes = [1, 8], strides = [1, 1]} : vector<25x8xf32> to vector<1x8xf32>
    %134 = vector.shape_cast %133 : vector<1x8xf32> to vector<8xf32>
    %135 = vector.shape_cast %134 : vector<8xf32> to vector<1x8xf32>
    %136 = vector.broadcast %135 : vector<1x8xf32> to vector<256x8xf32>
    %137 = arith.mulf %132, %136 : vector<256x8xf32>
    %138 = arith.addf %131, %137 : vector<256x8xf32>
    %c50 = arith.constant 50 : index
    %c0_44 = arith.constant 0 : index
    %139 = vector.load %arg11[%c50, %c0_44] : memref<324x8xf32, #tpu.memory_space<vmem>>, vector<256x8xf32>
    %140 = vector.extract_strided_slice %15 {offsets = [17, 0], sizes = [1, 8], strides = [1, 1]} : vector<25x8xf32> to vector<1x8xf32>
    %141 = vector.shape_cast %140 : vector<1x8xf32> to vector<8xf32>
    %142 = vector.shape_cast %141 : vector<8xf32> to vector<1x8xf32>
    %143 = vector.broadcast %142 : vector<1x8xf32> to vector<256x8xf32>
    %144 = arith.mulf %139, %143 : vector<256x8xf32>
    %145 = arith.addf %138, %144 : vector<256x8xf32>
    %c66 = arith.constant 66 : index
    %c0_45 = arith.constant 0 : index
    %146 = vector.load %arg11[%c66, %c0_45] : memref<324x8xf32, #tpu.memory_space<vmem>>, vector<256x8xf32>
    %147 = vector.extract_strided_slice %15 {offsets = [22, 0], sizes = [1, 8], strides = [1, 1]} : vector<25x8xf32> to vector<1x8xf32>
    %148 = vector.shape_cast %147 : vector<1x8xf32> to vector<8xf32>
    %149 = vector.shape_cast %148 : vector<8xf32> to vector<1x8xf32>
    %150 = vector.broadcast %149 : vector<1x8xf32> to vector<256x8xf32>
    %151 = arith.mulf %146, %150 : vector<256x8xf32>
    %152 = arith.addf %145, %151 : vector<256x8xf32>
    %153 = arith.addf %116, %152 : vector<256x8xf32>
    %cst_46 = arith.constant 0.000000e+00 : f32
    %154 = vector.broadcast %cst_46 : f32 to vector<256x8xf32>
    %c3 = arith.constant 3 : index
    %c0_47 = arith.constant 0 : index
    %155 = vector.load %arg11[%c3, %c0_47] : memref<324x8xf32, #tpu.memory_space<vmem>>, vector<256x8xf32>
    %156 = vector.extract_strided_slice %15 {offsets = [3, 0], sizes = [1, 8], strides = [1, 1]} : vector<25x8xf32> to vector<1x8xf32>
    %157 = vector.shape_cast %156 : vector<1x8xf32> to vector<8xf32>
    %158 = vector.shape_cast %157 : vector<8xf32> to vector<1x8xf32>
    %159 = vector.broadcast %158 : vector<1x8xf32> to vector<256x8xf32>
    %160 = arith.mulf %155, %159 : vector<256x8xf32>
    %161 = arith.addf %154, %160 : vector<256x8xf32>
    %c19 = arith.constant 19 : index
    %c0_48 = arith.constant 0 : index
    %162 = vector.load %arg11[%c19, %c0_48] : memref<324x8xf32, #tpu.memory_space<vmem>>, vector<256x8xf32>
    %163 = vector.extract_strided_slice %15 {offsets = [8, 0], sizes = [1, 8], strides = [1, 1]} : vector<25x8xf32> to vector<1x8xf32>
    %164 = vector.shape_cast %163 : vector<1x8xf32> to vector<8xf32>
    %165 = vector.shape_cast %164 : vector<8xf32> to vector<1x8xf32>
    %166 = vector.broadcast %165 : vector<1x8xf32> to vector<256x8xf32>
    %167 = arith.mulf %162, %166 : vector<256x8xf32>
    %168 = arith.addf %161, %167 : vector<256x8xf32>
    %c35 = arith.constant 35 : index
    %c0_49 = arith.constant 0 : index
    %169 = vector.load %arg11[%c35, %c0_49] : memref<324x8xf32, #tpu.memory_space<vmem>>, vector<256x8xf32>
    %170 = vector.extract_strided_slice %15 {offsets = [13, 0], sizes = [1, 8], strides = [1, 1]} : vector<25x8xf32> to vector<1x8xf32>
    %171 = vector.shape_cast %170 : vector<1x8xf32> to vector<8xf32>
    %172 = vector.shape_cast %171 : vector<8xf32> to vector<1x8xf32>
    %173 = vector.broadcast %172 : vector<1x8xf32> to vector<256x8xf32>
    %174 = arith.mulf %169, %173 : vector<256x8xf32>
    %175 = arith.addf %168, %174 : vector<256x8xf32>
    %c51 = arith.constant 51 : index
    %c0_50 = arith.constant 0 : index
    %176 = vector.load %arg11[%c51, %c0_50] : memref<324x8xf32, #tpu.memory_space<vmem>>, vector<256x8xf32>
    %177 = vector.extract_strided_slice %15 {offsets = [18, 0], sizes = [1, 8], strides = [1, 1]} : vector<25x8xf32> to vector<1x8xf32>
    %178 = vector.shape_cast %177 : vector<1x8xf32> to vector<8xf32>
    %179 = vector.shape_cast %178 : vector<8xf32> to vector<1x8xf32>
    %180 = vector.broadcast %179 : vector<1x8xf32> to vector<256x8xf32>
    %181 = arith.mulf %176, %180 : vector<256x8xf32>
    %182 = arith.addf %175, %181 : vector<256x8xf32>
    %c67 = arith.constant 67 : index
    %c0_51 = arith.constant 0 : index
    %183 = vector.load %arg11[%c67, %c0_51] : memref<324x8xf32, #tpu.memory_space<vmem>>, vector<256x8xf32>
    %184 = vector.extract_strided_slice %15 {offsets = [23, 0], sizes = [1, 8], strides = [1, 1]} : vector<25x8xf32> to vector<1x8xf32>
    %185 = vector.shape_cast %184 : vector<1x8xf32> to vector<8xf32>
    %186 = vector.shape_cast %185 : vector<8xf32> to vector<1x8xf32>
    %187 = vector.broadcast %186 : vector<1x8xf32> to vector<256x8xf32>
    %188 = arith.mulf %183, %187 : vector<256x8xf32>
    %189 = arith.addf %182, %188 : vector<256x8xf32>
    %cst_52 = arith.constant 1.000000e+00 : f32
    %190 = vector.broadcast %cst_52 : f32 to vector<256x1xf32>
    %191 = arith.addf %14, %190 : vector<256x1xf32>
    %cst_53 = arith.constant 0.000000e+00 : f32
    %192 = vector.broadcast %cst_53 : f32 to vector<256x1xf32>
    %193 = arith.cmpf oge, %191, %192 : vector<256x1xf32>
    %cst_54 = arith.constant 1.000000e+00 : f32
    %194 = vector.broadcast %cst_54 : f32 to vector<256x1xf32>
    %195 = arith.addf %14, %194 : vector<256x1xf32>
    %cst_55 = arith.constant 1.500000e+01 : f32
    %196 = vector.broadcast %cst_55 : f32 to vector<256x1xf32>
    %197 = arith.cmpf ole, %195, %196 : vector<256x1xf32>
    %198 = arith.andi %193, %197 : vector<256x1xi1>
    %cst_56 = arith.constant 0.000000e+00 : f32
    %199 = vector.shape_cast %198 : vector<256x1xi1> to vector<256x1xi1>
    %200 = vector.broadcast %199 : vector<256x1xi1> to vector<256x8xi1>
    %201 = vector.broadcast %cst_56 : f32 to vector<256x8xf32>
    %202 = arith.select %200, %189, %201 : vector<256x8xi1>, vector<256x8xf32>
    %203 = arith.addf %153, %202 : vector<256x8xf32>
    %cst_57 = arith.constant 0.000000e+00 : f32
    %204 = vector.broadcast %cst_57 : f32 to vector<256x8xf32>
    %c4 = arith.constant 4 : index
    %c0_58 = arith.constant 0 : index
    %205 = vector.load %arg11[%c4, %c0_58] : memref<324x8xf32, #tpu.memory_space<vmem>>, vector<256x8xf32>
    %206 = vector.extract_strided_slice %15 {offsets = [4, 0], sizes = [1, 8], strides = [1, 1]} : vector<25x8xf32> to vector<1x8xf32>
    %207 = vector.shape_cast %206 : vector<1x8xf32> to vector<8xf32>
    %208 = vector.shape_cast %207 : vector<8xf32> to vector<1x8xf32>
    %209 = vector.broadcast %208 : vector<1x8xf32> to vector<256x8xf32>
    %210 = arith.mulf %205, %209 : vector<256x8xf32>
    %211 = arith.addf %204, %210 : vector<256x8xf32>
    %c20 = arith.constant 20 : index
    %c0_59 = arith.constant 0 : index
    %212 = vector.load %arg11[%c20, %c0_59] : memref<324x8xf32, #tpu.memory_space<vmem>>, vector<256x8xf32>
    %213 = vector.extract_strided_slice %15 {offsets = [9, 0], sizes = [1, 8], strides = [1, 1]} : vector<25x8xf32> to vector<1x8xf32>
    %214 = vector.shape_cast %213 : vector<1x8xf32> to vector<8xf32>
    %215 = vector.shape_cast %214 : vector<8xf32> to vector<1x8xf32>
    %216 = vector.broadcast %215 : vector<1x8xf32> to vector<256x8xf32>
    %217 = arith.mulf %212, %216 : vector<256x8xf32>
    %218 = arith.addf %211, %217 : vector<256x8xf32>
    %c36 = arith.constant 36 : index
    %c0_60 = arith.constant 0 : index
    %219 = vector.load %arg11[%c36, %c0_60] : memref<324x8xf32, #tpu.memory_space<vmem>>, vector<256x8xf32>
    %220 = vector.extract_strided_slice %15 {offsets = [14, 0], sizes = [1, 8], strides = [1, 1]} : vector<25x8xf32> to vector<1x8xf32>
    %221 = vector.shape_cast %220 : vector<1x8xf32> to vector<8xf32>
    %222 = vector.shape_cast %221 : vector<8xf32> to vector<1x8xf32>
    %223 = vector.broadcast %222 : vector<1x8xf32> to vector<256x8xf32>
    %224 = arith.mulf %219, %223 : vector<256x8xf32>
    %225 = arith.addf %218, %224 : vector<256x8xf32>
    %c52 = arith.constant 52 : index
    %c0_61 = arith.constant 0 : index
    %226 = vector.load %arg11[%c52, %c0_61] : memref<324x8xf32, #tpu.memory_space<vmem>>, vector<256x8xf32>
    %227 = vector.extract_strided_slice %15 {offsets = [19, 0], sizes = [1, 8], strides = [1, 1]} : vector<25x8xf32> to vector<1x8xf32>
    %228 = vector.shape_cast %227 : vector<1x8xf32> to vector<8xf32>
    %229 = vector.shape_cast %228 : vector<8xf32> to vector<1x8xf32>
    %230 = vector.broadcast %229 : vector<1x8xf32> to vector<256x8xf32>
    %231 = arith.mulf %226, %230 : vector<256x8xf32>
    %232 = arith.addf %225, %231 : vector<256x8xf32>
    %c68 = arith.constant 68 : index
    %c0_62 = arith.constant 0 : index
    %233 = vector.load %arg11[%c68, %c0_62] : memref<324x8xf32, #tpu.memory_space<vmem>>, vector<256x8xf32>
    %234 = vector.extract_strided_slice %15 {offsets = [24, 0], sizes = [1, 8], strides = [1, 1]} : vector<25x8xf32> to vector<1x8xf32>
    %235 = vector.shape_cast %234 : vector<1x8xf32> to vector<8xf32>
    %236 = vector.shape_cast %235 : vector<8xf32> to vector<1x8xf32>
    %237 = vector.broadcast %236 : vector<1x8xf32> to vector<256x8xf32>
    %238 = arith.mulf %233, %237 : vector<256x8xf32>
    %239 = arith.addf %232, %238 : vector<256x8xf32>
    %cst_63 = arith.constant 2.000000e+00 : f32
    %240 = vector.broadcast %cst_63 : f32 to vector<256x1xf32>
    %241 = arith.addf %14, %240 : vector<256x1xf32>
    %cst_64 = arith.constant 0.000000e+00 : f32
    %242 = vector.broadcast %cst_64 : f32 to vector<256x1xf32>
    %243 = arith.cmpf oge, %241, %242 : vector<256x1xf32>
    %cst_65 = arith.constant 2.000000e+00 : f32
    %244 = vector.broadcast %cst_65 : f32 to vector<256x1xf32>
    %245 = arith.addf %14, %244 : vector<256x1xf32>
    %cst_66 = arith.constant 1.500000e+01 : f32
    %246 = vector.broadcast %cst_66 : f32 to vector<256x1xf32>
    %247 = arith.cmpf ole, %245, %246 : vector<256x1xf32>
    %248 = arith.andi %243, %247 : vector<256x1xi1>
    %cst_67 = arith.constant 0.000000e+00 : f32
    %249 = vector.shape_cast %248 : vector<256x1xi1> to vector<256x1xi1>
    %250 = vector.broadcast %249 : vector<256x1xi1> to vector<256x8xi1>
    %251 = vector.broadcast %cst_67 : f32 to vector<256x8xf32>
    %252 = arith.select %250, %239, %251 : vector<256x8xi1>, vector<256x8xf32>
    %253 = arith.addf %203, %252 : vector<256x8xf32>
    %c0_68 = arith.constant 0 : index
    %c0_69 = arith.constant 0 : index
    %254 = vector.load %arg6[%c0_68, %c0_69] : memref<1x8xf32, #tpu.memory_space<vmem>>, vector<1x8xf32>
    %255 = vector.broadcast %254 : vector<1x8xf32> to vector<256x8xf32>
    %256 = arith.addf %253, %255 : vector<256x8xf32>
    %cst_70 = arith.constant 0.000000e+00 : f32
    %257 = vector.broadcast %cst_70 : f32 to vector<256x8xf32>
    %258 = arith.maximumf %256, %257 : vector<256x8xf32>
    %c0_71 = arith.constant 0 : index
    %c0_72 = arith.constant 0 : index
    %259 = vector.load %arg7[%c0_71, %c0_72] : memref<8x16xf32, #tpu.memory_space<vmem>>, vector<8x16xf32>
    %260 = arith.truncf %258 : vector<256x8xf32> to vector<256x8xbf16>
    %261 = arith.truncf %259 : vector<8x16xf32> to vector<8x16xbf16>
    %cst_73 = arith.constant dense<0.000000e+00> : vector<256x16xf32>
    %262 = tpu.matmul %260, %261, %cst_73 {dimension_numbers = #tpu.dot_dimension_numbers<[1], [0], [0], [1], [0, 0, 1, 1], [], []>} : vector<256x8xbf16>, vector<8x16xbf16>, vector<256x16xf32> -> vector<256x16xf32>
    %c0_74 = arith.constant 0 : index
    %c0_75 = arith.constant 0 : index
    %263 = vector.load %arg8[%c0_74, %c0_75] : memref<1x16xf32, #tpu.memory_space<vmem>>, vector<1x16xf32>
    %264 = vector.broadcast %263 : vector<1x16xf32> to vector<256x16xf32>
    %265 = arith.addf %262, %264 : vector<256x16xf32>
    %c0_76 = arith.constant 0 : index
    %c0_77 = arith.constant 0 : index
    %266 = vector.load %arg9[%c0_76, %c0_77] : memref<8x16xf32, #tpu.memory_space<vmem>>, vector<8x16xf32>
    %cst_78 = arith.constant dense<0.000000e+00> : vector<256x16xf32>
    %267 = tpu.matmul %1, %266, %cst_78 {dimension_numbers = #tpu.dot_dimension_numbers<[1], [0], [0], [1], [0, 0, 1, 1], [], []>} : vector<256x8xf32>, vector<8x16xf32>, vector<256x16xf32> -> vector<256x16xf32>
    %268 = arith.addf %265, %267 : vector<256x16xf32>
    %c0_79 = arith.constant 0 : index
    %c0_80 = arith.constant 0 : index
    %c0_81 = arith.constant 0 : index
    %269 = vector.load %arg10[%c0_79, %c0_80, %c0_81] : memref<1x256x16xf32, #tpu.memory_space<vmem>>, vector<1x256x16xf32>
    %270 = vector.shape_cast %269 : vector<1x256x16xf32> to vector<256x16xf32>
    %271 = vector.shape_cast %268 : vector<256x16xf32> to vector<1x256x16xf32>
    tpu.vector_store %arg10[%c0_79, %c0_80, %c0_81], %271 {strides = array<i32>} : memref<1x256x16xf32, #tpu.memory_space<vmem>>, vector<1x256x16xf32>,
    return
  }
  func.func @transform_0(%arg0: i32) -> (i32, i32, i32) {
    %c0_i32 = arith.constant 0 : i32
    %c0_i32_0 = arith.constant 0 : i32
    %c0_i32_1 = arith.constant 0 : i32
    return %arg0, %c0_i32, %c0_i32_0 : i32, i32, i32
  }
  func.func @transform_1(%arg0: i32) -> (i32, i32) {
    %c0_i32 = arith.constant 0 : i32
    %c0_i32_0 = arith.constant 0 : i32
    %c0_i32_1 = arith.constant 0 : i32
    return %c0_i32, %c0_i32_0 : i32, i32
  }
  func.func @transform_2(%arg0: i32) -> (i32, i32) {
    %c0_i32 = arith.constant 0 : i32
    %c0_i32_0 = arith.constant 0 : i32
    %c0_i32_1 = arith.constant 0 : i32
    return %c0_i32, %c0_i32_0 : i32, i32
  }
  func.func @transform_3(%arg0: i32) -> (i32, i32) {
    %c0_i32 = arith.constant 0 : i32
    %c0_i32_0 = arith.constant 0 : i32
    %c0_i32_1 = arith.constant 0 : i32
    return %c0_i32, %c0_i32_0 : i32, i32
  }
  func.func @transform_4(%arg0: i32) -> (i32, i32) {
    %c0_i32 = arith.constant 0 : i32
    %c0_i32_0 = arith.constant 0 : i32
    %c0_i32_1 = arith.constant 0 : i32
    return %c0_i32, %c0_i32_0 : i32, i32
  }
  func.func @transform_5(%arg0: i32) -> (i32, i32) {
    %c0_i32 = arith.constant 0 : i32
    %c0_i32_0 = arith.constant 0 : i32
    %c0_i32_1 = arith.constant 0 : i32
    return %c0_i32, %c0_i32_0 : i32, i32
  }
  func.func @transform_6(%arg0: i32) -> (i32, i32) {
    %c0_i32 = arith.constant 0 : i32
    %c0_i32_0 = arith.constant 0 : i32
    %c0_i32_1 = arith.constant 0 : i32
    return %c0_i32, %c0_i32_0 : i32, i32
  }
  func.func @transform_7(%arg0: i32) -> (i32, i32) {
    %c0_i32 = arith.constant 0 : i32
    %c0_i32_0 = arith.constant 0 : i32
    %c0_i32_1 = arith.constant 0 : i32
    return %c0_i32, %c0_i32_0 : i32, i32
  }
  func.func @transform_8(%arg0: i32) -> (i32, i32) {
    %c0_i32 = arith.constant 0 : i32
    %c0_i32_0 = arith.constant 0 : i32
    %c0_i32_1 = arith.constant 0 : i32
    return %c0_i32, %c0_i32_0 : i32, i32
  }
  func.func @transform_9(%arg0: i32) -> (i32, i32, i32) {
    %c0_i32 = arith.constant 0 : i32
    %c0_i32_0 = arith.constant 0 : i32
    %c0_i32_1 = arith.constant 0 : i32
    return %arg0, %c0_i32, %c0_i32_0 : i32, i32, i32
  }
}

</mosaic_0001>

<llo_original>
// kernel: tpu_custom_call.1
$region0: #{tpu_custom_call.1}
  #allocation0 [shape = 'u32[]', space=smem, size = 0x4, offset = 0x4, fixed_abs, tag = 'smem constant byte address 0x4 - core index']
  #allocation1 [shape = 'u32[72,128]{1,0:T(1,128)}', space=vmem, size = 0x9000, scoped, tag = 'internal scratch']
  #allocation2 [shape = 'f32[324,8]{1,0:T(8,128)}', space=vmem, size = 0x29000, scoped, tag = 'scratch operand']
  %s0 = inlined_call_operand.vmem [shape: f32[2,256,8], index: 0, kind: input, shape index: {}]
  %s1 = inlined_call_operand.vmem [shape: f32[256,1], index: 1, kind: input, shape index: {}]
  %s2 = inlined_call_operand.vmem [shape: f32[8,8], index: 2, kind: input, shape index: {}]
  %s3 = inlined_call_operand.vmem [shape: f32[1,8], index: 3, kind: input, shape index: {}]
  %s4 = inlined_call_operand.vmem [shape: f32[25,8], index: 4, kind: input, shape index: {}]
  %s5 = inlined_call_operand.vmem [shape: f32[1,8], index: 5, kind: input, shape index: {}]
  %s6 = inlined_call_operand.vmem [shape: f32[8,16], index: 6, kind: input, shape index: {}]
  %s7 = inlined_call_operand.vmem [shape: f32[1,16], index: 7, kind: input, shape index: {}]
  %s8 = inlined_call_operand.vmem [shape: f32[8,16], index: 8, kind: input, shape index: {}]
  %s9 = inlined_call_operand.vmem [shape: f32[2,256,16], index: 9, kind: output, shape index: {}]
  %s10 = sld [smem:[#allocation0]]
  $region69: #{tpu_custom_call.1} parent=0
    _
  %s12 = ssub.s32 1, %s10
  %s13 = scalar_select 0, %s12, %s10
  loop: start=0, step=1, limit=4
  $region2: #{tpu_custom_call.1} parent=0 // loop_pre_header
    _
  $region3: #{tpu_custom_call.1} parent=0 // loop_header
    %s15 = sphi 0, %s19
    %p16 = scmp.ge.s32.totalorder %s15, 4
    %s25 = sphi 0, %s27
    %s28 = sphi 0, %s25
    %s29 = sphi 0, %s28
    %s45 = sphi 0, %s29
    %s49 = sphi 0, %s49
    %s51 = sphi 0, %s49
    %s52 = sphi 0, %s51
    %s66 = sphi 0, %s52
    %s70 = sphi 0, %s70
    %s72 = sphi 0, %s70
    %s73 = sphi 0, %s72
    %s87 = sphi 0, %s73
    %s91 = sphi 0, %s91
    %s93 = sphi 0, %s91
    %s94 = sphi 0, %s93
    %s108 = sphi 0, %s94
    %s112 = sphi 0, %s112
    %s114 = sphi 0, %s112
    %s115 = sphi 0, %s114
    %s129 = sphi 0, %s115
    %s133 = sphi 0, %s133
    %s135 = sphi 0, %s133
    %s136 = sphi 0, %s135
    %s150 = sphi 0, %s136
    %s154 = sphi 0, %s154
    %s156 = sphi 0, %s154
    %s157 = sphi 0, %s156
    %s171 = sphi 0, %s157
    %s175 = sphi 0, %s175
    %s177 = sphi 0, %s175
    %s178 = sphi 0, %s177
    %s192 = sphi 0, %s178
    %s196 = sphi 0, %s196
    %s198 = sphi 0, %s196
    %s199 = sphi 0, %s198
    %s213 = sphi 0, %s199
    %s219 = sphi 0, %s221
    %s222 = sphi 0, %s219
    %s223 = sphi 0, %s222
    %s239 = sphi 0, %s223
  $region4: #{tpu_custom_call.1} parent=0 // loop_header_branch
    %18 = sbr.rel (%p16) target = $region8
  $region5: #{tpu_custom_call.1} parent=0 // loop_body
    %s20 = ssub.s32 %s15, 1
    %s21 = ssub.s32 %s15, 2
    %s22 = sadd.s32 %s15, 1
    %s23 = ssub.s32 %s15, %s22
    %p24 = scmp.eq.s32.totalorder %s23, 0
    %s26 = sadd.s32 %s25, 1
    %s27 = scalar_select %p24, %s25, %s26
    %p30 = pneg %p24
    %p31 = scmp.eq.s32.totalorder %s15, 1
    %p32 = por %p30, %p31
    %p33 = scmp.ne.s32.totalorder %s25, %s28
    %p34 = scmp.eq.s32.totalorder %s15, 0
    %p35 = por %p33, %p34
    %p36 = scmp.ne.s32.totalorder %s25, %s28
    %p37 = scmp.eq.s32.totalorder %s20, 1
    %p38 = por %p36, %p37
    %p39 = scmp.ne.s32.totalorder %s28, %s29
    %p40 = scmp.eq.s32.totalorder %s20, 0
    %p41 = por %p39, %p40
    %p42 = scmp.ne.s32.totalorder %s28, %s29
    %p43 = scmp.eq.s32.totalorder %s21, 1
    %p44 = por %p42, %p43
    %p46 = scmp.ne.s32.totalorder %s29, %s45
    %p47 = scmp.eq.s32.totalorder %s21, 0
    %p48 = por %p46, %p47
    %s50 = sadd.s32 %s49, 1
    %p53 = scmp.eq.s32.totalorder %s15, 1
    %p54 = scmp.ne.s32.totalorder %s49, %s51
    %p55 = scmp.eq.s32.totalorder %s15, 0
    %p56 = por %p54, %p55
    %p57 = scmp.ne.s32.totalorder %s49, %s51
    %p58 = scmp.eq.s32.totalorder %s20, 1
    %p59 = por %p57, %p58
    %p60 = scmp.ne.s32.totalorder %s51, %s52
    %p61 = scmp.eq.s32.totalorder %s20, 0
    %p62 = por %p60, %p61
    %p63 = scmp.ne.s32.totalorder %s51, %s52
    %p64 = scmp.eq.s32.totalorder %s21, 1
    %p65 = por %p63, %p64
    %p67 = scmp.ne.s32.totalorder %s52, %s66
    %p68 = scmp.eq.s32.totalorder %s21, 0
    %p69 = por %p67, %p68
    %s71 = sadd.s32 %s70, 1
    %p74 = scmp.eq.s32.totalorder %s15, 1
    %p75 = scmp.ne.s32.totalorder %s70, %s72
    %p76 = scmp.eq.s32.totalorder %s15, 0
    %p77 = por %p75, %p76
    %p78 = scmp.ne.s32.totalorder %s70, %s72
    %p79 = scmp.eq.s32.totalorder %s20, 1
    %p80 = por %p78, %p79
    %p81 = scmp.ne.s32.totalorder %s72, %s73
    %p82 = scmp.eq.s32.totalorder %s20, 0
    %p83 = por %p81, %p82
    %p84 = scmp.ne.s32.totalorder %s72, %s73
    %p85 = scmp.eq.s32.totalorder %s21, 1
    %p86 = por %p84, %p85
    %p88 = scmp.ne.s32.totalorder %s73, %s87
    %p89 = scmp.eq.s32.totalorder %s21, 0
    %p90 = por %p88, %p89
    %s92 = sadd.s32 %s91, 1
    %p95 = scmp.eq.s32.totalorder %s15, 1
    %p96 = scmp.ne.s32.totalorder %s91, %s93
    %p97 = scmp.eq.s32.totalorder %s15, 0
    %p98 = por %p96, %p97
    %p99 = scmp.ne.s32.totalorder %s91, %s93
    %p100 = scmp.eq.s32.totalorder %s20, 1
    %p101 = por %p99, %p100
    %p102 = scmp.ne.s32.totalorder %s93, %s94
    %p103 = scmp.eq.s32.totalorder %s20, 0
    %p104 = por %p102, %p103
    %p105 = scmp.ne.s32.totalorder %s93, %s94
    %p106 = scmp.eq.s32.totalorder %s21, 1
    %p107 = por %p105, %p106
    %p109 = scmp.ne.s32.totalorder %s94, %s108
    %p110 = scmp.eq.s32.totalorder %s21, 0
    %p111 = por %p109, %p110
    %s113 = sadd.s32 %s112, 1
    %p116 = scmp.eq.s32.totalorder %s15, 1
    %p117 = scmp.ne.s32.totalorder %s112, %s114
    %p118 = scmp.eq.s32.totalorder %s15, 0
    %p119 = por %p117, %p118
    %p120 = scmp.ne.s32.totalorder %s112, %s114
    %p121 = scmp.eq.s32.totalorder %s20, 1
    %p122 = por %p120, %p121
    %p123 = scmp.ne.s32.totalorder %s114, %s115
    %p124 = scmp.eq.s32.totalorder %s20, 0
    %p125 = por %p123, %p124
    %p126 = scmp.ne.s32.totalorder %s114, %s115
    %p127 = scmp.eq.s32.totalorder %s21, 1
    %p128 = por %p126, %p127
    %p130 = scmp.ne.s32.totalorder %s115, %s129
    %p131 = scmp.eq.s32.totalorder %s21, 0
    %p132 = por %p130, %p131
    %s134 = sadd.s32 %s133, 1
    %p137 = scmp.eq.s32.totalorder %s15, 1
    %p138 = scmp.ne.s32.totalorder %s133, %s135
    %p139 = scmp.eq.s32.totalorder %s15, 0
    %p140 = por %p138, %p139
    %p141 = scmp.ne.s32.totalorder %s133, %s135
    %p142 = scmp.eq.s32.totalorder %s20, 1
    %p143 = por %p141, %p142
    %p144 = scmp.ne.s32.totalorder %s135, %s136
    %p145 = scmp.eq.s32.totalorder %s20, 0
    %p146 = por %p144, %p145
    %p147 = scmp.ne.s32.totalorder %s135, %s136
    %p148 = scmp.eq.s32.totalorder %s21, 1
    %p149 = por %p147, %p148
    %p151 = scmp.ne.s32.totalorder %s136, %s150
    %p152 = scmp.eq.s32.totalorder %s21, 0
    %p153 = por %p151, %p152
    %s155 = sadd.s32 %s154, 1
    %p158 = scmp.eq.s32.totalorder %s15, 1
    %p159 = scmp.ne.s32.totalorder %s154, %s156
    %p160 = scmp.eq.s32.totalorder %s15, 0
    %p161 = por %p159, %p160
    %p162 = scmp.ne.s32.totalorder %s154, %s156
    %p163 = scmp.eq.s32.totalorder %s20, 1
    %p164 = por %p162, %p163
    %p165 = scmp.ne.s32.totalorder %s156, %s157
    %p166 = scmp.eq.s32.totalorder %s20, 0
    %p167 = por %p165, %p166
    %p168 = scmp.ne.s32.totalorder %s156, %s157
    %p169 = scmp.eq.s32.totalorder %s21, 1
    %p170 = por %p168, %p169
    %p172 = scmp.ne.s32.totalorder %s157, %s171
    %p173 = scmp.eq.s32.totalorder %s21, 0
    %p174 = por %p172, %p173
    %s176 = sadd.s32 %s175, 1
    %p179 = scmp.eq.s32.totalorder %s15, 1
    %p180 = scmp.ne.s32.totalorder %s175, %s177
    %p181 = scmp.eq.s32.totalorder %s15, 0
    %p182 = por %p180, %p181
    %p183 = scmp.ne.s32.totalorder %s175, %s177
    %p184 = scmp.eq.s32.totalorder %s20, 1
    %p185 = por %p183, %p184
    %p186 = scmp.ne.s32.totalorder %s177, %s178
    %p187 = scmp.eq.s32.totalorder %s20, 0
    %p188 = por %p186, %p187
    %p189 = scmp.ne.s32.totalorder %s177, %s178
    %p190 = scmp.eq.s32.totalorder %s21, 1
    %p191 = por %p189, %p190
    %p193 = scmp.ne.s32.totalorder %s178, %s192
    %p194 = scmp.eq.s32.totalorder %s21, 0
    %p195 = por %p193, %p194
    %s197 = sadd.s32 %s196, 1
    %p200 = scmp.eq.s32.totalorder %s15, 1
    %p201 = scmp.ne.s32.totalorder %s196, %s198
    %p202 = scmp.eq.s32.totalorder %s15, 0
    %p203 = por %p201, %p202
    %p204 = scmp.ne.s32.totalorder %s196, %s198
    %p205 = scmp.eq.s32.totalorder %s20, 1
    %p206 = por %p204, %p205
    %p207 = scmp.ne.s32.totalorder %s198, %s199
    %p208 = scmp.eq.s32.totalorder %s20, 0
    %p209 = por %p207, %p208
    %p210 = scmp.ne.s32.totalorder %s198, %s199
    %p211 = scmp.eq.s32.totalorder %s21, 1
    %p212 = por %p210, %p211
    %p214 = scmp.ne.s32.totalorder %s199, %s213
    %p215 = scmp.eq.s32.totalorder %s21, 0
    %p216 = por %p214, %p215
    %s217 = ssub.s32 %s15, %s22
    %p218 = scmp.eq.s32.totalorder %s217, 0
    %s220 = sadd.s32 %s219, 1
    %s221 = scalar_select %p218, %s219, %s220
    %p224 = pneg %p218
    %p225 = scmp.eq.s32.totalorder %s15, 1
    %p226 = por %p224, %p225
    %p227 = scmp.ne.s32.totalorder %s219, %s222
    %p228 = scmp.eq.s32.totalorder %s15, 0
    %p229 = por %p227, %p228
    %p230 = scmp.ne.s32.totalorder %s219, %s222
    %p231 = scmp.eq.s32.totalorder %s20, 1
    %p232 = por %p230, %p231
    %p233 = scmp.ne.s32.totalorder %s222, %s223
    %p234 = scmp.eq.s32.totalorder %s20, 0
    %p235 = por %p233, %p234
    %p236 = scmp.ne.s32.totalorder %s222, %s223
    %p237 = scmp.eq.s32.totalorder %s21, 1
    %p238 = por %p236, %p237
    %p240 = scmp.ne.s32.totalorder %s223, %s239
    %p241 = scmp.eq.s32.totalorder %s21, 0
    %p242 = por %p240, %p241
    %p243 = scmp.le.s32.totalorder 1, %s15
    %p244 = scmp.lt.s32.totalorder %s15, 3
    %p245 = pnand %p243, %p244
    %p246 = pneg %p245
    // Predicated region
    $region9: #{tpu_custom_call.1} parent=5 // pred_check
      _
    $region10: #{tpu_custom_call.1} parent=5 // pred_check_branch
      %248 = sbr.rel (%p245) target = $region12
    $region11: #{tpu_custom_call.1} parent=5 // pred_region
      %s249 = ssub.s32 %s15, 1
      // Predicated region
      $region13: #{tpu_custom_call.1} parent=11 // pred_check
        %p250 = pneg %p62
      $region14: #{tpu_custom_call.1} parent=11 // pred_check_branch
        %252 = sbr.rel (%p250) target = $region16
      $region15: #{tpu_custom_call.1} parent=11 // pred_region
        _
      $region16: #{tpu_custom_call.1} parent=11 // pred_fallthru
        _
      // Predicated region
      $region17: #{tpu_custom_call.1} parent=11 // pred_check
        %p253 = pneg %p83
      $region18: #{tpu_custom_call.1} parent=11 // pred_check_branch
        %255 = sbr.rel (%p253) target = $region20
      $region19: #{tpu_custom_call.1} parent=11 // pred_region
        _
      $region20: #{tpu_custom_call.1} parent=11 // pred_fallthru
        _
      // Predicated region
      $region21: #{tpu_custom_call.1} parent=11 // pred_check
        %p256 = pneg %p104
      $region22: #{tpu_custom_call.1} parent=11 // pred_check_branch
        %258 = sbr.rel (%p256) target = $region24
      $region23: #{tpu_custom_call.1} parent=11 // pred_region
        _
      $region24: #{tpu_custom_call.1} parent=11 // pred_fallthru
        _
      // Predicated region
      $region25: #{tpu_custom_call.1} parent=11 // pred_check
        %p259 = pneg %p125
      $region26: #{tpu_custom_call.1} parent=11 // pred_check_branch
        %261 = sbr.rel (%p259) target = $region28
      $region27: #{tpu_custom_call.1} parent=11 // pred_region
        _
      $region28: #{tpu_custom_call.1} parent=11 // pred_fallthru
        _
      // Predicated region
      $region29: #{tpu_custom_call.1} parent=11 // pred_check
        %p262 = pneg %p146
      $region30: #{tpu_custom_call.1} parent=11 // pred_check_branch
        %264 = sbr.rel (%p262) target = $region32
      $region31: #{tpu_custom_call.1} parent=11 // pred_region
        _
      $region32: #{tpu_custom_call.1} parent=11 // pred_fallthru
        _
      // Predicated region
      $region33: #{tpu_custom_call.1} parent=11 // pred_check
        %p265 = pneg %p167
      $region34: #{tpu_custom_call.1} parent=11 // pred_check_branch
        %267 = sbr.rel (%p265) target = $region36
      $region35: #{tpu_custom_call.1} parent=11 // pred_region
        _
      $region36: #{tpu_custom_call.1} parent=11 // pred_fallthru
        _
      // Predicated region
      $region37: #{tpu_custom_call.1} parent=11 // pred_check
        %p268 = pneg %p188
      $region38: #{tpu_custom_call.1} parent=11 // pred_check_branch
        %270 = sbr.rel (%p268) target = $region40
      $region39: #{tpu_custom_call.1} parent=11 // pred_region
        _
      $region40: #{tpu_custom_call.1} parent=11 // pred_fallthru
        _
      // Predicated region
      $region41: #{tpu_custom_call.1} parent=11 // pred_check
        %p271 = pneg %p209
      $region42: #{tpu_custom_call.1} parent=11 // pred_check_branch
        %273 = sbr.rel (%p271) target = $region44
      $region43: #{tpu_custom_call.1} parent=11 // pred_region
        _
      $region44: #{tpu_custom_call.1} parent=11 // pred_fallthru
        _
    $region12: #{tpu_custom_call.1} parent=5 // pred_fallthru
      _
    %p274 = scmp.lt.s32.totalorder %s15, 2
    // Predicated region
    $region45: #{tpu_custom_call.1} parent=5 // pred_check
      %p275 = pneg %p274
    $region46: #{tpu_custom_call.1} parent=5 // pred_check_branch
      %277 = sbr.rel (%p275) target = $region48
    $region47: #{tpu_custom_call.1} parent=5 // pred_region
      // Predicated region
      $region49: #{tpu_custom_call.1} parent=47 // pred_check
        %p278 = pneg %p35
      $region50: #{tpu_custom_call.1} parent=47 // pred_check_branch
        %280 = sbr.rel (%p278) target = $region52
      $region51: #{tpu_custom_call.1} parent=47 // pred_region
        %p281 = scmp.lt.s32.totalorder %s15, 1
        %s282 = scalar_select %p281, %s15, 1
        %s283 = smul.addr %s282, 32
        %s284 = smul.addr %s283, 8
        %s285 = scalar_lea.vmem %s0, %s284
      $region52: #{tpu_custom_call.1} parent=47 // pred_fallthru
        _
    $region48: #{tpu_custom_call.1} parent=5 // pred_fallthru
      _
    %p286 = scmp.le.s32.totalorder 1, %s15
    %p287 = scmp.lt.s32.totalorder %s15, 3
    %p288 = pnand %p286, %p287
    %p289 = pneg %p288
    // Predicated region
    $region53: #{tpu_custom_call.1} parent=5 // pred_check
      _
    $region54: #{tpu_custom_call.1} parent=5 // pred_check_branch
      %291 = sbr.rel (%p288) target = $region56
    $region55: #{tpu_custom_call.1} parent=5 // pred_region
      %s292 = ssub.s32 %s15, 1
      %p293 = scmp.lt.s32.totalorder %s20, 1
      %s294 = scalar_select %p293, %s20, 1
      %s295 = smul.addr %s294, 32
      %s296 = smul.addr %s295, 8
      %s297 = scalar_lea.vmem %s0, %s296
      %p298 = pneg %p41
      %p299 = pneg %p38
      %p300 = pneg %p62
      %p301 = pneg %p59
      %p302 = pneg %p83
      %p303 = pneg %p80
      %p304 = pneg %p104
      %p305 = pneg %p101
      %p306 = pneg %p125
      %p307 = pneg %p122
      %p308 = pneg %p146
      %p309 = pneg %p143
      %p310 = pneg %p167
      %p311 = pneg %p164
      %p312 = pneg %p188
      %p313 = pneg %p185
      %p314 = pneg %p209
      %p315 = pneg %p206
      %p316 = pneg %p235
      %p317 = pneg %p232
      %p318 = scmp.lt.s32.totalorder %s20, 1
      %s319 = scalar_select %p318, %s20, 1
      %s320 = smul.addr %s319, 32
      %s321 = smul.addr %s320, 8
      %s322 = scalar_lea.vmem %s9, %s321
      %p323 = scmp.lt.s32.totalorder %s20, 1
      %s324 = scalar_select %p323, %s20, 1
      %s325 = smul.addr %s324, 32
      %s326 = smul.addr %s325, 8
      %s327 = scalar_lea.vmem %s0, %s326
      %p328 = scmp.lt.s32.totalorder %s20, 1
      %s329 = scalar_select %p328, %s20, 1
      %s330 = smul.addr %s329, 32
      %s331 = smul.addr %s330, 8
      %s332 = scalar_lea.vmem %s9, %s331
      %v334 = vld [vmem:[%s327] sm:$0xff]
      %v335 = vld [vmem:[%s327 + $0x8] sm:$0xff]
      %v336 = vld [vmem:[%s327 + $0x10] sm:$0xff]
      %v337 = vld [vmem:[%s327 + $0x18] sm:$0xff]
      %v338 = vld [vmem:[%s327 + $0x20] sm:$0xff]
      %v339 = vld [vmem:[%s327 + $0x28] sm:$0xff]
      %v340 = vld [vmem:[%s327 + $0x30] sm:$0xff]
      %v341 = vld [vmem:[%s327 + $0x38] sm:$0xff]
      %v342 = vld [vmem:[%s327 + $0x40] sm:$0xff]
      %v343 = vld [vmem:[%s327 + $0x48] sm:$0xff]
      %v344 = vld [vmem:[%s327 + $0x50] sm:$0xff]
      %v345 = vld [vmem:[%s327 + $0x58] sm:$0xff]
      %v346 = vld [vmem:[%s327 + $0x60] sm:$0xff]
      %v347 = vld [vmem:[%s327 + $0x68] sm:$0xff]
      %v348 = vld [vmem:[%s327 + $0x70] sm:$0xff]
      %v349 = vld [vmem:[%s327 + $0x78] sm:$0xff]
      %v350 = vld [vmem:[%s327 + $0x80] sm:$0xff]
      %v351 = vld [vmem:[%s327 + $0x88] sm:$0xff]
      %v352 = vld [vmem:[%s327 + $0x90] sm:$0xff]
      %v353 = vld [vmem:[%s327 + $0x98] sm:$0xff]
      %v354 = vld [vmem:[%s327 + $0xa0] sm:$0xff]
      %v355 = vld [vmem:[%s327 + $0xa8] sm:$0xff]
      %v356 = vld [vmem:[%s327 + $0xb0] sm:$0xff]
      %v357 = vld [vmem:[%s327 + $0xb8] sm:$0xff]
      %v358 = vld [vmem:[%s327 + $0xc0] sm:$0xff]
      %v359 = vld [vmem:[%s327 + $0xc8] sm:$0xff]
      %v360 = vld [vmem:[%s327 + $0xd0] sm:$0xff]
      %v361 = vld [vmem:[%s327 + $0xd8] sm:$0xff]
      %v362 = vld [vmem:[%s327 + $0xe0] sm:$0xff]
      %v363 = vld [vmem:[%s327 + $0xe8] sm:$0xff]
      %v364 = vld [vmem:[%s327 + $0xf0] sm:$0xff]
      %v365 = vld [vmem:[%s327 + $0xf8] sm:$0xff]
      %v366 = vld [vmem:[%s2] sm:$0xff]
      %v367 = vpack.c.bf16 %v335, %v334
      %v368 = vpack.c.bf16 %v337, %v336
      %v369 = vpack.c.bf16 %v339, %v338
      %v370 = vpack.c.bf16 %v341, %v340
      %v371 = vpack.c.bf16 %v343, %v342
      %v372 = vpack.c.bf16 %v345, %v344
      %v373 = vpack.c.bf16 %v347, %v346
      %v374 = vpack.c.bf16 %v349, %v348
      %v375 = vpack.c.bf16 %v351, %v350
      %v376 = vpack.c.bf16 %v353, %v352
      %v377 = vpack.c.bf16 %v355, %v354
      %v378 = vpack.c.bf16 %v357, %v356
      %v379 = vpack.c.bf16 %v359, %v358
      %v380 = vpack.c.bf16 %v361, %v360
      %v381 = vpack.c.bf16 %v363, %v362
      %v382 = vpack.c.bf16 %v365, %v364
      %v383 = vpack.c.bf16 %v366, %v366
      %v384 = vld [vmem:[%s3] sm:$0x1]
      %v386 = vperm.slane %v384, 0
      %vm388 = vcmask 64512
      %v390 = vsel %vm388, %v367, 0
      %v393 = vsel %vm388, %v368, 0
      %v396 = vsel %vm388, %v369, 0
      %v399 = vsel %vm388, %v370, 0
      %v402 = vsel %vm388, %v371, 0
      %v405 = vsel %vm388, %v372, 0
      %v408 = vsel %vm388, %v373, 0
      %v411 = vsel %vm388, %v374, 0
      %v414 = vsel %vm388, %v375, 0
      %v417 = vsel %vm388, %v376, 0
      %v420 = vsel %vm388, %v377, 0
      %v423 = vsel %vm388, %v378, 0
      %v426 = vsel %vm388, %v379, 0
      %v429 = vsel %vm388, %v380, 0
      %v432 = vsel %vm388, %v381, 0
      %v435 = vsel %vm388, %v382, 0
      %vm437 = vcmask 1043456
      %v439 = vsel %vm437, %v383, 0
      %441 = vmatpush.bf16.msra.mxu0 0
      %442 = vmatpush.bf16.msra.mxu0 0
      %443 = vmatpush.bf16.msra.mxu0 0
      %444 = vmatpush.bf16.msra.mxu0 0
      %445 = vmatpush.bf16.msra.mxu0 0
      %446 = vmatpush.bf16.msra.mxu0 0
      %447 = vmatpush.bf16.msra.mxu0 0
      %448 = vmatpush.bf16.msra.mxu0 %v439
      %449 = vmatmul.bf16.gmra.mxu0 %v390
      %v450 = vpop.f32.mrf.mxu0
      %v451 = vadd.f32 %v386, %v450
      %v452 = vpop.f32.mrf.mxu0
      %v453 = vadd.f32 %v386, %v452
      %454 = vmatmul.bf16.gmra.mxu0 %v393
      %v455 = vpop.f32.mrf.mxu0
      %v456 = vadd.f32 %v386, %v455
      %v457 = vpop.f32.mrf.mxu0
      %v458 = vadd.f32 %v386, %v457
      %459 = vmatmul.bf16.gmra.mxu0 %v396
      %v460 = vpop.f32.mrf.mxu0
      %v461 = vadd.f32 %v386, %v460
      %v462 = vpop.f32.mrf.mxu0
      %v463 = vadd.f32 %v386, %v462
      %464 = vmatmul.bf16.gmra.mxu0 %v399
      %v465 = vpop.f32.mrf.mxu0
      %v466 = vadd.f32 %v386, %v465
      %v467 = vpop.f32.mrf.mxu0
      %v468 = vadd.f32 %v386, %v467
      %469 = vmatmul.bf16.gmra.mxu0 %v402
      %v470 = vpop.f32.mrf.mxu0
      %v471 = vadd.f32 %v386, %v470
      %v472 = vpop.f32.mrf.mxu0
      %v473 = vadd.f32 %v386, %v472
      %474 = vmatmul.bf16.gmra.mxu0 %v405
      %v475 = vpop.f32.mrf.mxu0
      %v476 = vadd.f32 %v386, %v475
      %v477 = vpop.f32.mrf.mxu0
      %v478 = vadd.f32 %v386, %v477
      %479 = vmatmul.bf16.gmra.mxu0 %v408
      %v480 = vpop.f32.mrf.mxu0
      %v481 = vadd.f32 %v386, %v480
      %v482 = vpop.f32.mrf.mxu0
      %v483 = vadd.f32 %v386, %v482
      %484 = vmatmul.bf16.gmra.mxu0 %v411
      %v485 = vpop.f32.mrf.mxu0
      %v486 = vadd.f32 %v386, %v485
      %v487 = vpop.f32.mrf.mxu0
      %v488 = vadd.f32 %v386, %v487
      %489 = vmatmul.bf16.gmra.mxu0 %v414
      %v490 = vpop.f32.mrf.mxu0
      %v491 = vadd.f32 %v386, %v490
      %v492 = vpop.f32.mrf.mxu0
      %v493 = vadd.f32 %v386, %v492
      %494 = vmatmul.bf16.gmra.mxu0 %v417
      %v495 = vpop.f32.mrf.mxu0
      %v496 = vadd.f32 %v386, %v495
      %v497 = vpop.f32.mrf.mxu0
      %v498 = vadd.f32 %v386, %v497
      %499 = vmatmul.bf16.gmra.mxu0 %v420
      %v500 = vpop.f32.mrf.mxu0
      %v501 = vadd.f32 %v386, %v500
      %v502 = vpop.f32.mrf.mxu0
      %v503 = vadd.f32 %v386, %v502
      %504 = vmatmul.bf16.gmra.mxu0 %v423
      %v505 = vpop.f32.mrf.mxu0
      %v506 = vadd.f32 %v386, %v505
      %v507 = vpop.f32.mrf.mxu0
      %v508 = vadd.f32 %v386, %v507
      %509 = vmatmul.bf16.gmra.mxu0 %v426
      %v510 = vpop.f32.mrf.mxu0
      %v511 = vadd.f32 %v386, %v510
      %v512 = vpop.f32.mrf.mxu0
      %v513 = vadd.f32 %v386, %v512
      %514 = vmatmul.bf16.gmra.mxu0 %v429
      %v515 = vpop.f32.mrf.mxu0
      %v516 = vadd.f32 %v386, %v515
      %v517 = vpop.f32.mrf.mxu0
      %v518 = vadd.f32 %v386, %v517
      %519 = vmatmul.bf16.gmra.mxu0 %v432
      %v520 = vpop.f32.mrf.mxu0
      %v521 = vadd.f32 %v386, %v520
      %v522 = vpop.f32.mrf.mxu0
      %v523 = vadd.f32 %v386, %v522
      %524 = vmatmul.bf16.gmra.mxu0 %v435
      %v525 = vpop.f32.mrf.mxu0
      %v526 = vadd.f32 %v386, %v525
      %v527 = vpop.f32.mrf.mxu0
      %v528 = vadd.f32 %v386, %v527
      %529 = vdwg.mxu0
      %v530 = vmax.f32 %v451, 0.0
      %v531 = vmax.f32 %v453, 0.0
      %v532 = vmax.f32 %v456, 0.0
      %v533 = vmax.f32 %v458, 0.0
      %v534 = vmax.f32 %v461, 0.0
      %v535 = vmax.f32 %v463, 0.0
      %v536 = vmax.f32 %v466, 0.0
      %v537 = vmax.f32 %v468, 0.0
      %v538 = vmax.f32 %v471, 0.0
      %v539 = vmax.f32 %v473, 0.0
      %v540 = vmax.f32 %v476, 0.0
      %v541 = vmax.f32 %v478, 0.0
      %v542 = vmax.f32 %v481, 0.0
      %v543 = vmax.f32 %v483, 0.0
      %v544 = vmax.f32 %v486, 0.0
      %v545 = vmax.f32 %v488, 0.0
      %v546 = vmax.f32 %v491, 0.0
      %v547 = vmax.f32 %v493, 0.0
      %v548 = vmax.f32 %v496, 0.0
      %v549 = vmax.f32 %v498, 0.0
      %v550 = vmax.f32 %v501, 0.0
      %v551 = vmax.f32 %v503, 0.0
      %v552 = vmax.f32 %v506, 0.0
      %v553 = vmax.f32 %v508, 0.0
      %v554 = vmax.f32 %v511, 0.0
      %v555 = vmax.f32 %v513, 0.0
      %v556 = vmax.f32 %v516, 0.0
      %v557 = vmax.f32 %v518, 0.0
      %v558 = vmax.f32 %v521, 0.0
      %v559 = vmax.f32 %v523, 0.0
      %v560 = vmax.f32 %v526, 0.0
      %v561 = vmax.f32 %v528, 0.0
      %562 = vst.msk [vmem:[#allocation2] sm:$0xff] %vm388, 0.0
      %563 = vst.msk [vmem:[#allocation2 + $0x8] sm:$0xff] %vm388, 0.0
      %564 = vst.msk [vmem:[#allocation2 + $0x10] sm:$0xff] %vm388, 0.0
      %565 = vst.msk [vmem:[#allocation2 + $0x18] sm:$0xff] %vm388, 0.0
      %566 = vst.msk [vmem:[#allocation2 + $0x20] sm:$0xff] %vm388, 0.0
      %567 = vst.msk [vmem:[#allocation2 + $0x28] sm:$0xff] %vm388, 0.0
      %568 = vst.msk [vmem:[#allocation2 + $0x30] sm:$0xff] %vm388, 0.0
      %569 = vst.msk [vmem:[#allocation2 + $0x38] sm:$0xff] %vm388, 0.0
      %570 = vst.msk [vmem:[#allocation2 + $0x40] sm:$0xff] %vm388, 0.0
      %571 = vst.msk [vmem:[#allocation2 + $0x48] sm:$0xff] %vm388, 0.0
      %572 = vst.msk [vmem:[#allocation2 + $0x50] sm:$0xff] %vm388, 0.0
      %573 = vst.msk [vmem:[#allocation2 + $0x58] sm:$0xff] %vm388, 0.0
      %574 = vst.msk [vmem:[#allocation2 + $0x60] sm:$0xff] %vm388, 0.0
      %575 = vst.msk [vmem:[#allocation2 + $0x68] sm:$0xff] %vm388, 0.0
      %576 = vst.msk [vmem:[#allocation2 + $0x70] sm:$0xff] %vm388, 0.0
      %577 = vst.msk [vmem:[#allocation2 + $0x78] sm:$0xff] %vm388, 0.0
      %578 = vst.msk [vmem:[#allocation2 + $0x80] sm:$0xff] %vm388, 0.0
      %579 = vst.msk [vmem:[#allocation2 + $0x88] sm:$0xff] %vm388, 0.0
      %580 = vst.msk [vmem:[#allocation2 + $0x90] sm:$0xff] %vm388, 0.0
      %581 = vst.msk [vmem:[#allocation2 + $0x98] sm:$0xff] %vm388, 0.0
      %582 = vst.msk [vmem:[#allocation2 + $0xa0] sm:$0xff] %vm388, 0.0
      %583 = vst.msk [vmem:[#allocation2 + $0xa8] sm:$0xff] %vm388, 0.0
      %584 = vst.msk [vmem:[#allocation2 + $0xb0] sm:$0xff] %vm388, 0.0
      %585 = vst.msk [vmem:[#allocation2 + $0xb8] sm:$0xff] %vm388, 0.0
      %586 = vst.msk [vmem:[#allocation2 + $0xc0] sm:$0xff] %vm388, 0.0
      %587 = vst.msk [vmem:[#allocation2 + $0xc8] sm:$0xff] %vm388, 0.0
      %588 = vst.msk [vmem:[#allocation2 + $0xd0] sm:$0xff] %vm388, 0.0
      %589 = vst.msk [vmem:[#allocation2 + $0xd8] sm:$0xff] %vm388, 0.0
      %590 = vst.msk [vmem:[#allocation2 + $0xe0] sm:$0xff] %vm388, 0.0
      %591 = vst.msk [vmem:[#allocation2 + $0xe8] sm:$0xff] %vm388, 0.0
      %592 = vst.msk [vmem:[#allocation2 + $0xf0] sm:$0xff] %vm388, 0.0
      %593 = vst.msk [vmem:[#allocation2 + $0xf8] sm:$0xff] %vm388, 0.0
      %594 = vst.msk [vmem:[#allocation2 + $0x100] sm:$0xff] %vm388, 0.0
      %595 = vst.msk [vmem:[#allocation2 + $0x108] sm:$0xff] %vm388, 0.0
      %596 = vst.msk [vmem:[#allocation2 + $0x110] sm:$0xff] %vm388, 0.0
      %597 = vst.msk [vmem:[#allocation2 + $0x118] sm:$0xff] %vm388, 0.0
      %598 = vst.msk [vmem:[#allocation2 + $0x120] sm:$0xff] %vm388, 0.0
      %599 = vst.msk [vmem:[#allocation2 + $0x128] sm:$0xff] %vm388, 0.0
      %600 = vst.msk [vmem:[#allocation2 + $0x130] sm:$0xff] %vm388, 0.0
      %601 = vst.msk [vmem:[#allocation2 + $0x138] sm:$0xff] %vm388, 0.0
      %vm602 = vcmask 60416
      %603 = vst.msk [vmem:[#allocation2 + $0x140] sm:$0xf] %vm602, 0.0
      %604 = vst.msk [vmem:[#allocation2 + $0x22] sm:$0xff] %vm388, %v530
      %605 = vst.msk [vmem:[#allocation2 + $0x2a] sm:$0xff] %vm388, %v531
      %606 = vst.msk [vmem:[#allocation2 + $0x32] sm:$0xff] %vm388, %v532
      %607 = vst.msk [vmem:[#allocation2 + $0x3a] sm:$0xff] %vm388, %v533
      %608 = vst.msk [vmem:[#allocation2 + $0x42] sm:$0xff] %vm388, %v534
      %609 = vst.msk [vmem:[#allocation2 + $0x4a] sm:$0xff] %vm388, %v535
      %610 = vst.msk [vmem:[#allocation2 + $0x52] sm:$0xff] %vm388, %v536
      %611 = vst.msk [vmem:[#allocation2 + $0x5a] sm:$0xff] %vm388, %v537
      %612 = vst.msk [vmem:[#allocation2 + $0x62] sm:$0xff] %vm388, %v538
      %613 = vst.msk [vmem:[#allocation2 + $0x6a] sm:$0xff] %vm388, %v539
      %614 = vst.msk [vmem:[#allocation2 + $0x72] sm:$0xff] %vm388, %v540
      %615 = vst.msk [vmem:[#allocation2 + $0x7a] sm:$0xff] %vm388, %v541
      %616 = vst.msk [vmem:[#allocation2 + $0x82] sm:$0xff] %vm388, %v542
      %617 = vst.msk [vmem:[#allocation2 + $0x8a] sm:$0xff] %vm388, %v543
      %618 = vst.msk [vmem:[#allocation2 + $0x92] sm:$0xff] %vm388, %v544
      %619 = vst.msk [vmem:[#allocation2 + $0x9a] sm:$0xff] %vm388, %v545
      %620 = vst.msk [vmem:[#allocation2 + $0xa2] sm:$0xff] %vm388, %v546
      %621 = vst.msk [vmem:[#allocation2 + $0xaa] sm:$0xff] %vm388, %v547
      %622 = vst.msk [vmem:[#allocation2 + $0xb2] sm:$0xff] %vm388, %v548
      %623 = vst.msk [vmem:[#allocation2 + $0xba] sm:$0xff] %vm388, %v549
      %624 = vst.msk [vmem:[#allocation2 + $0xc2] sm:$0xff] %vm388, %v550
      %625 = vst.msk [vmem:[#allocation2 + $0xca] sm:$0xff] %vm388, %v551
      %626 = vst.msk [vmem:[#allocation2 + $0xd2] sm:$0xff] %vm388, %v552
      %627 = vst.msk [vmem:[#allocation2 + $0xda] sm:$0xff] %vm388, %v553
      %628 = vst.msk [vmem:[#allocation2 + $0xe2] sm:$0xff] %vm388, %v554
      %629 = vst.msk [vmem:[#allocation2 + $0xea] sm:$0xff] %vm388, %v555
      %630 = vst.msk [vmem:[#allocation2 + $0xf2] sm:$0xff] %vm388, %v556
      %631 = vst.msk [vmem:[#allocation2 + $0xfa] sm:$0xff] %vm388, %v557
      %632 = vst.msk [vmem:[#allocation2 + $0x102] sm:$0xff] %vm388, %v558
      %633 = vst.msk [vmem:[#allocation2 + $0x10a] sm:$0xff] %vm388, %v559
      %634 = vst.msk [vmem:[#allocation2 + $0x112] sm:$0xff] %vm388, %v560
      %635 = vst.msk [vmem:[#allocation2 + $0x11a] sm:$0xff] %vm388, %v561
      %v636 = vld [vmem:[%s1] sm:$0xff]
      %v637 = vld [vmem:[%s1 + $0x8] sm:$0xff]
      %v638 = vld [vmem:[%s1 + $0x10] sm:$0xff]
      %v639 = vld [vmem:[%s1 + $0x18] sm:$0xff]
      %v640 = vld [vmem:[%s1 + $0x20] sm:$0xff]
      %v641 = vld [vmem:[%s1 + $0x28] sm:$0xff]
      %v642 = vld [vmem:[%s1 + $0x30] sm:$0xff]
      %v643 = vld [vmem:[%s1 + $0x38] sm:$0xff]
      %v644 = vld [vmem:[%s1 + $0x40] sm:$0xff]
      %v645 = vld [vmem:[%s1 + $0x48] sm:$0xff]
      %v646 = vld [vmem:[%s1 + $0x50] sm:$0xff]
      %v647 = vld [vmem:[%s1 + $0x58] sm:$0xff]
      %v648 = vld [vmem:[%s1 + $0x60] sm:$0xff]
      %v649 = vld [vmem:[%s1 + $0x68] sm:$0xff]
      %v650 = vld [vmem:[%s1 + $0x70] sm:$0xff]
      %v651 = vld [vmem:[%s1 + $0x78] sm:$0xff]
      %v652 = vld [vmem:[%s1 + $0x80] sm:$0xff]
      %v653 = vld [vmem:[%s1 + $0x88] sm:$0xff]
      %v654 = vld [vmem:[%s1 + $0x90] sm:$0xff]
      %v655 = vld [vmem:[%s1 + $0x98] sm:$0xff]
      %v656 = vld [vmem:[%s1 + $0xa0] sm:$0xff]
      %v657 = vld [vmem:[%s1 + $0xa8] sm:$0xff]
      %v658 = vld [vmem:[%s1 + $0xb0] sm:$0xff]
      %v659 = vld [vmem:[%s1 + $0xb8] sm:$0xff]
      %v660 = vld [vmem:[%s1 + $0xc0] sm:$0xff]
      %v661 = vld [vmem:[%s1 + $0xc8] sm:$0xff]
      %v662 = vld [vmem:[%s1 + $0xd0] sm:$0xff]
      %v663 = vld [vmem:[%s1 + $0xd8] sm:$0xff]
      %v664 = vld [vmem:[%s1 + $0xe0] sm:$0xff]
      %v665 = vld [vmem:[%s1 + $0xe8] sm:$0xff]
      %v666 = vld [vmem:[%s1 + $0xf0] sm:$0xff]
      %v667 = vld [vmem:[%s1 + $0xf8] sm:$0xff]
      %v668 = vld [vmem:[%s4] sm:$0xff]
      %v669 = vld [vmem:[%s4 + $0x8] sm:$0xff]
      %v670 = vld [vmem:[%s4 + $0x10] sm:$0xff]
      %v671 = vld [vmem:[%s4 + $0x18] sm:$0x1]
      %v672 = vld [vmem:[#allocation2] sm:$0xff]
      %v673 = vld [vmem:[#allocation2 + $0x8] sm:$0xff]
      %v674 = vld [vmem:[#allocation2 + $0x10] sm:$0xff]
      %v675 = vld [vmem:[#allocation2 + $0x18] sm:$0xff]
      %v676 = vld [vmem:[#allocation2 + $0x20] sm:$0xff]
      %v677 = vld [vmem:[#allocation2 + $0x28] sm:$0xff]
      %v678 = vld [vmem:[#allocation2 + $0x30] sm:$0xff]
      %v679 = vld [vmem:[#allocation2 + $0x38] sm:$0xff]
      %v680 = vld [vmem:[#allocation2 + $0x40] sm:$0xff]
      %v681 = vld [vmem:[#allocation2 + $0x48] sm:$0xff]
      %v682 = vld [vmem:[#allocation2 + $0x50] sm:$0xff]
      %v683 = vld [vmem:[#allocation2 + $0x58] sm:$0xff]
      %v684 = vld [vmem:[#allocation2 + $0x60] sm:$0xff]
      %v685 = vld [vmem:[#allocation2 + $0x68] sm:$0xff]
      %v686 = vld [vmem:[#allocation2 + $0x70] sm:$0xff]
      %v687 = vld [vmem:[#allocation2 + $0x78] sm:$0xff]
      %v688 = vld [vmem:[#allocation2 + $0x80] sm:$0xff]
      %v689 = vld [vmem:[#allocation2 + $0x88] sm:$0xff]
      %v690 = vld [vmem:[#allocation2 + $0x90] sm:$0xff]
      %v691 = vld [vmem:[#allocation2 + $0x98] sm:$0xff]
      %v692 = vld [vmem:[#allocation2 + $0xa0] sm:$0xff]
      %v693 = vld [vmem:[#allocation2 + $0xa8] sm:$0xff]
      %v694 = vld [vmem:[#allocation2 + $0xb0] sm:$0xff]
      %v695 = vld [vmem:[#allocation2 + $0xb8] sm:$0xff]
      %v696 = vld [vmem:[#allocation2 + $0xc0] sm:$0xff]
      %v697 = vld [vmem:[#allocation2 + $0xc8] sm:$0xff]
      %v698 = vld [vmem:[#allocation2 + $0xd0] sm:$0xff]
      %v699 = vld [vmem:[#allocation2 + $0xd8] sm:$0xff]
      %v700 = vld [vmem:[#allocation2 + $0xe0] sm:$0xff]
      %v701 = vld [vmem:[#allocation2 + $0xe8] sm:$0xff]
      %v702 = vld [vmem:[#allocation2 + $0xf0] sm:$0xff]
      %v703 = vld [vmem:[#allocation2 + $0xf8] sm:$0xff]
      %v704 = vperm.slane %v668, 0
      %v705 = vmul.f32 %v672, %v704
      %v706 = vmul.f32 %v673, %v704
      %v707 = vmul.f32 %v674, %v704
      %v708 = vmul.f32 %v675, %v704
      %v709 = vmul.f32 %v676, %v704
      %v710 = vmul.f32 %v677, %v704
      %v711 = vmul.f32 %v678, %v704
      %v712 = vmul.f32 %v679, %v704
      %v713 = vmul.f32 %v680, %v704
      %v714 = vmul.f32 %v681, %v704
      %v715 = vmul.f32 %v682, %v704
      %v716 = vmul.f32 %v683, %v704
      %v717 = vmul.f32 %v684, %v704
      %v718 = vmul.f32 %v685, %v704
      %v719 = vmul.f32 %v686, %v704
      %v720 = vmul.f32 %v687, %v704
      %v721 = vmul.f32 %v688, %v704
      %v722 = vmul.f32 %v689, %v704
      %v723 = vmul.f32 %v690, %v704
      %v724 = vmul.f32 %v691, %v704
      %v725 = vmul.f32 %v692, %v704
      %v726 = vmul.f32 %v693, %v704
      %v727 = vmul.f32 %v694, %v704
      %v728 = vmul.f32 %v695, %v704
      %v729 = vmul.f32 %v696, %v704
      %v730 = vmul.f32 %v697, %v704
      %v731 = vmul.f32 %v698, %v704
      %v732 = vmul.f32 %v699, %v704
      %v733 = vmul.f32 %v700, %v704
      %v734 = vmul.f32 %v701, %v704
      %v735 = vmul.f32 %v702, %v704
      %v736 = vmul.f32 %v703, %v704
      %v737 = vadd.f32 %v705, 0.0
      %v738 = vadd.f32 %v706, 0.0
      %v739 = vadd.f32 %v707, 0.0
      %v740 = vadd.f32 %v708, 0.0
      %v741 = vadd.f32 %v709, 0.0
      %v742 = vadd.f32 %v710, 0.0
      %v743 = vadd.f32 %v711, 0.0
      %v744 = vadd.f32 %v712, 0.0
      %v745 = vadd.f32 %v713, 0.0
      %v746 = vadd.f32 %v714, 0.0
      %v747 = vadd.f32 %v715, 0.0
      %v748 = vadd.f32 %v716, 0.0
      %v749 = vadd.f32 %v717, 0.0
      %v750 = vadd.f32 %v718, 0.0
      %v751 = vadd.f32 %v719, 0.0
      %v752 = vadd.f32 %v720, 0.0
      %v753 = vadd.f32 %v721, 0.0
      %v754 = vadd.f32 %v722, 0.0
      %v755 = vadd.f32 %v723, 0.0
      %v756 = vadd.f32 %v724, 0.0
      %v757 = vadd.f32 %v725, 0.0
      %v758 = vadd.f32 %v726, 0.0
      %v759 = vadd.f32 %v727, 0.0
      %v760 = vadd.f32 %v728, 0.0
      %v761 = vadd.f32 %v729, 0.0
      %v762 = vadd.f32 %v730, 0.0
      %v763 = vadd.f32 %v731, 0.0
      %v764 = vadd.f32 %v732, 0.0
      %v765 = vadd.f32 %v733, 0.0
      %v766 = vadd.f32 %v734, 0.0
      %v767 = vadd.f32 %v735, 0.0
      %v768 = vadd.f32 %v736, 0.0
      %v769 = vld [vmem:[#allocation2 + $0x100] sm:$0xff]
      %v770 = vld [vmem:[#allocation2 + $0x108] sm:$0xff]
      %v771 = vperm.slane %v668, 5
      %v772 = vmul.f32 %v674, %v771
      %v773 = vmul.f32 %v675, %v771
      %v774 = vmul.f32 %v676, %v771
      %v775 = vmul.f32 %v677, %v771
      %v776 = vmul.f32 %v678, %v771
      %v777 = vmul.f32 %v679, %v771
      %v778 = vmul.f32 %v680, %v771
      %v779 = vmul.f32 %v681, %v771
      %v780 = vmul.f32 %v682, %v771
      %v781 = vmul.f32 %v683, %v771
      %v782 = vmul.f32 %v684, %v771
      %v783 = vmul.f32 %v685, %v771
      %v784 = vmul.f32 %v686, %v771
      %v785 = vmul.f32 %v687, %v771
      %v786 = vmul.f32 %v688, %v771
      %v787 = vmul.f32 %v689, %v771
      %v788 = vmul.f32 %v690, %v771
      %v789 = vmul.f32 %v691, %v771
      %v790 = vmul.f32 %v692, %v771
      %v791 = vmul.f32 %v693, %v771
      %v792 = vmul.f32 %v694, %v771
      %v793 = vmul.f32 %v695, %v771
      %v794 = vmul.f32 %v696, %v771
      %v795 = vmul.f32 %v697, %v771
      %v796 = vmul.f32 %v698, %v771
      %v797 = vmul.f32 %v699, %v771
      %v798 = vmul.f32 %v700, %v771
      %v799 = vmul.f32 %v701, %v771
      %v800 = vmul.f32 %v702, %v771
      %v801 = vmul.f32 %v703, %v771
      %v802 = vmul.f32 %v769, %v771
      %v803 = vmul.f32 %v770, %v771
      %v804 = vadd.f32 %v737, %v772
      %v805 = vadd.f32 %v738, %v773
      %v806 = vadd.f32 %v739, %v774
      %v807 = vadd.f32 %v740, %v775
      %v808 = vadd.f32 %v741, %v776
      %v809 = vadd.f32 %v742, %v777
      %v810 = vadd.f32 %v743, %v778
      %v811 = vadd.f32 %v744, %v779
      %v812 = vadd.f32 %v745, %v780
      %v813 = vadd.f32 %v746, %v781
      %v814 = vadd.f32 %v747, %v782
      %v815 = vadd.f32 %v748, %v783
      %v816 = vadd.f32 %v749, %v784
      %v817 = vadd.f32 %v750, %v785
      %v818 = vadd.f32 %v751, %v786
      %v819 = vadd.f32 %v752, %v787
      %v820 = vadd.f32 %v753, %v788
      %v821 = vadd.f32 %v754, %v789
      %v822 = vadd.f32 %v755, %v790
      %v823 = vadd.f32 %v756, %v791
      %v824 = vadd.f32 %v757, %v792
      %v825 = vadd.f32 %v758, %v793
      %v826 = vadd.f32 %v759, %v794
      %v827 = vadd.f32 %v760, %v795
      %v828 = vadd.f32 %v761, %v796
      %v829 = vadd.f32 %v762, %v797
      %v830 = vadd.f32 %v763, %v798
      %v831 = vadd.f32 %v764, %v799
      %v832 = vadd.f32 %v765, %v800
      %v833 = vadd.f32 %v766, %v801
      %v834 = vadd.f32 %v767, %v802
      %v835 = vadd.f32 %v768, %v803
      %v836 = vld [vmem:[#allocation2 + $0x110] sm:$0xff]
      %v837 = vld [vmem:[#allocation2 + $0x118] sm:$0xff]
      %v838 = vperm.slane %v669, 2
      %v839 = vmul.f32 %v676, %v838
      %v840 = vmul.f32 %v677, %v838
      %v841 = vmul.f32 %v678, %v838
      %v842 = vmul.f32 %v679, %v838
      %v843 = vmul.f32 %v680, %v838
      %v844 = vmul.f32 %v681, %v838
      %v845 = vmul.f32 %v682, %v838
      %v846 = vmul.f32 %v683, %v838
      %v847 = vmul.f32 %v684, %v838
      %v848 = vmul.f32 %v685, %v838
      %v849 = vmul.f32 %v686, %v838
      %v850 = vmul.f32 %v687, %v838
      %v851 = vmul.f32 %v688, %v838
      %v852 = vmul.f32 %v689, %v838
      %v853 = vmul.f32 %v690, %v838
      %v854 = vmul.f32 %v691, %v838
      %v855 = vmul.f32 %v692, %v838
      %v856 = vmul.f32 %v693, %v838
      %v857 = vmul.f32 %v694, %v838
      %v858 = vmul.f32 %v695, %v838
      %v859 = vmul.f32 %v696, %v838
      %v860 = vmul.f32 %v697, %v838
      %v861 = vmul.f32 %v698, %v838
      %v862 = vmul.f32 %v699, %v838
      %v863 = vmul.f32 %v700, %v838
      %v864 = vmul.f32 %v701, %v838
      %v865 = vmul.f32 %v702, %v838
      %v866 = vmul.f32 %v703, %v838
      %v867 = vmul.f32 %v769, %v838
      %v868 = vmul.f32 %v770, %v838
      %v869 = vmul.f32 %v836, %v838
      %v870 = vmul.f32 %v837, %v838
      %v871 = vadd.f32 %v804, %v839
      %v872 = vadd.f32 %v805, %v840
      %v873 = vadd.f32 %v806, %v841
      %v874 = vadd.f32 %v807, %v842
      %v875 = vadd.f32 %v808, %v843
      %v876 = vadd.f32 %v809, %v844
      %v877 = vadd.f32 %v810, %v845
      %v878 = vadd.f32 %v811, %v846
      %v879 = vadd.f32 %v812, %v847
      %v880 = vadd.f32 %v813, %v848
      %v881 = vadd.f32 %v814, %v849
      %v882 = vadd.f32 %v815, %v850
      %v883 = vadd.f32 %v816, %v851
      %v884 = vadd.f32 %v817, %v852
      %v885 = vadd.f32 %v818, %v853
      %v886 = vadd.f32 %v819, %v854
      %v887 = vadd.f32 %v820, %v855
      %v888 = vadd.f32 %v821, %v856
      %v889 = vadd.f32 %v822, %v857
      %v890 = vadd.f32 %v823, %v858
      %v891 = vadd.f32 %v824, %v859
      %v892 = vadd.f32 %v825, %v860
      %v893 = vadd.f32 %v826, %v861
      %v894 = vadd.f32 %v827, %v862
      %v895 = vadd.f32 %v828, %v863
      %v896 = vadd.f32 %v829, %v864
      %v897 = vadd.f32 %v830, %v865
      %v898 = vadd.f32 %v831, %v866
      %v899 = vadd.f32 %v832, %v867
      %v900 = vadd.f32 %v833, %v868
      %v901 = vadd.f32 %v834, %v869
      %v902 = vadd.f32 %v835, %v870
      %v903 = vld [vmem:[#allocation2 + $0x120] sm:$0xff]
      %v904 = vld [vmem:[#allocation2 + $0x128] sm:$0xff]
      %v905 = vperm.slane %v669, 7
      %v906 = vmul.f32 %v678, %v905
      %v907 = vmul.f32 %v679, %v905
      %v908 = vmul.f32 %v680, %v905
      %v909 = vmul.f32 %v681, %v905
      %v910 = vmul.f32 %v682, %v905
      %v911 = vmul.f32 %v683, %v905
      %v912 = vmul.f32 %v684, %v905
      %v913 = vmul.f32 %v685, %v905
      %v914 = vmul.f32 %v686, %v905
      %v915 = vmul.f32 %v687, %v905
      %v916 = vmul.f32 %v688, %v905
      %v917 = vmul.f32 %v689, %v905
      %v918 = vmul.f32 %v690, %v905
      %v919 = vmul.f32 %v691, %v905
      %v920 = vmul.f32 %v692, %v905
      %v921 = vmul.f32 %v693, %v905
      %v922 = vmul.f32 %v694, %v905
      %v923 = vmul.f32 %v695, %v905
      %v924 = vmul.f32 %v696, %v905
      %v925 = vmul.f32 %v697, %v905
      %v926 = vmul.f32 %v698, %v905
      %v927 = vmul.f32 %v699, %v905
      %v928 = vmul.f32 %v700, %v905
      %v929 = vmul.f32 %v701, %v905
      %v930 = vmul.f32 %v702, %v905
      %v931 = vmul.f32 %v703, %v905
      %v932 = vmul.f32 %v769, %v905
      %v933 = vmul.f32 %v770, %v905
      %v934 = vmul.f32 %v836, %v905
      %v935 = vmul.f32 %v837, %v905
      %v936 = vmul.f32 %v903, %v905
      %v937 = vmul.f32 %v904, %v905
      %v938 = vadd.f32 %v871, %v906
      %v939 = vadd.f32 %v872, %v907
      %v940 = vadd.f32 %v873, %v908
      %v941 = vadd.f32 %v874, %v909
      %v942 = vadd.f32 %v875, %v910
      %v943 = vadd.f32 %v876, %v911
      %v944 = vadd.f32 %v877, %v912
      %v945 = vadd.f32 %v878, %v913
      %v946 = vadd.f32 %v879, %v914
      %v947 = vadd.f32 %v880, %v915
      %v948 = vadd.f32 %v881, %v916
      %v949 = vadd.f32 %v882, %v917
      %v950 = vadd.f32 %v883, %v918
      %v951 = vadd.f32 %v884, %v919
      %v952 = vadd.f32 %v885, %v920
      %v953 = vadd.f32 %v886, %v921
      %v954 = vadd.f32 %v887, %v922
      %v955 = vadd.f32 %v888, %v923
      %v956 = vadd.f32 %v889, %v924
      %v957 = vadd.f32 %v890, %v925
      %v958 = vadd.f32 %v891, %v926
      %v959 = vadd.f32 %v892, %v927
      %v960 = vadd.f32 %v893, %v928
      %v961 = vadd.f32 %v894, %v929
      %v962 = vadd.f32 %v895, %v930
      %v963 = vadd.f32 %v896, %v931
      %v964 = vadd.f32 %v897, %v932
      %v965 = vadd.f32 %v898, %v933
      %v966 = vadd.f32 %v899, %v934
      %v967 = vadd.f32 %v900, %v935
      %v968 = vadd.f32 %v901, %v936
      %v969 = vadd.f32 %v902, %v937
      %v970 = vld [vmem:[#allocation2 + $0x130] sm:$0xff]
      %v971 = vld [vmem:[#allocation2 + $0x138] sm:$0xff]
      %v972 = vperm.slane %v670, 4
      %v973 = vmul.f32 %v680, %v972
      %v974 = vmul.f32 %v681, %v972
      %v975 = vmul.f32 %v682, %v972
      %v976 = vmul.f32 %v683, %v972
      %v977 = vmul.f32 %v684, %v972
      %v978 = vmul.f32 %v685, %v972
      %v979 = vmul.f32 %v686, %v972
      %v980 = vmul.f32 %v687, %v972
      %v981 = vmul.f32 %v688, %v972
      %v982 = vmul.f32 %v689, %v972
      %v983 = vmul.f32 %v690, %v972
      %v984 = vmul.f32 %v691, %v972
      %v985 = vmul.f32 %v692, %v972
      %v986 = vmul.f32 %v693, %v972
      %v987 = vmul.f32 %v694, %v972
      %v988 = vmul.f32 %v695, %v972
      %v989 = vmul.f32 %v696, %v972
      %v990 = vmul.f32 %v697, %v972
      %v991 = vmul.f32 %v698, %v972
      %v992 = vmul.f32 %v699, %v972
      %v993 = vmul.f32 %v700, %v972
      %v994 = vmul.f32 %v701, %v972
      %v995 = vmul.f32 %v702, %v972
      %v996 = vmul.f32 %v703, %v972
      %v997 = vmul.f32 %v769, %v972
      %v998 = vmul.f32 %v770, %v972
      %v999 = vmul.f32 %v836, %v972
      %v1000 = vmul.f32 %v837, %v972
      %v1001 = vmul.f32 %v903, %v972
      %v1002 = vmul.f32 %v904, %v972
      %v1003 = vmul.f32 %v970, %v972
      %v1004 = vmul.f32 %v971, %v972
      %v1005 = vadd.f32 %v938, %v973
      %v1006 = vadd.f32 %v939, %v974
      %v1007 = vadd.f32 %v940, %v975
      %v1008 = vadd.f32 %v941, %v976
      %v1009 = vadd.f32 %v942, %v977
      %v1010 = vadd.f32 %v943, %v978
      %v1011 = vadd.f32 %v944, %v979
      %v1012 = vadd.f32 %v945, %v980
      %v1013 = vadd.f32 %v946, %v981
      %v1014 = vadd.f32 %v947, %v982
      %v1015 = vadd.f32 %v948, %v983
      %v1016 = vadd.f32 %v949, %v984
      %v1017 = vadd.f32 %v950, %v985
      %v1018 = vadd.f32 %v951, %v986
      %v1019 = vadd.f32 %v952, %v987
      %v1020 = vadd.f32 %v953, %v988
      %v1021 = vadd.f32 %v954, %v989
      %v1022 = vadd.f32 %v955, %v990
      %v1023 = vadd.f32 %v956, %v991
      %v1024 = vadd.f32 %v957, %v992
      %v1025 = vadd.f32 %v958, %v993
      %v1026 = vadd.f32 %v959, %v994
      %v1027 = vadd.f32 %v960, %v995
      %v1028 = vadd.f32 %v961, %v996
      %v1029 = vadd.f32 %v962, %v997
      %v1030 = vadd.f32 %v963, %v998
      %v1031 = vadd.f32 %v964, %v999
      %v1032 = vadd.f32 %v965, %v1000
      %v1033 = vadd.f32 %v966, %v1001
      %v1034 = vadd.f32 %v967, %v1002
      %v1035 = vadd.f32 %v968, %v1003
      %v1036 = vadd.f32 %v969, %v1004
      %v1037 = vadd.f32 %v636, -2.0
      %v1038 = vadd.f32 %v637, -2.0
      %v1039 = vadd.f32 %v638, -2.0
      %v1040 = vadd.f32 %v639, -2.0
      %v1041 = vadd.f32 %v640, -2.0
      %v1042 = vadd.f32 %v641, -2.0
      %v1043 = vadd.f32 %v642, -2.0
      %v1044 = vadd.f32 %v643, -2.0
      %v1045 = vadd.f32 %v644, -2.0
      %v1046 = vadd.f32 %v645, -2.0
      %v1047 = vadd.f32 %v646, -2.0
      %v1048 = vadd.f32 %v647, -2.0
      %v1049 = vadd.f32 %v648, -2.0
      %v1050 = vadd.f32 %v649, -2.0
      %v1051 = vadd.f32 %v650, -2.0
      %v1052 = vadd.f32 %v651, -2.0
      %v1053 = vadd.f32 %v652, -2.0
      %v1054 = vadd.f32 %v653, -2.0
      %v1055 = vadd.f32 %v654, -2.0
      %v1056 = vadd.f32 %v655, -2.0
      %v1057 = vadd.f32 %v656, -2.0
      %v1058 = vadd.f32 %v657, -2.0
      %v1059 = vadd.f32 %v658, -2.0
      %v1060 = vadd.f32 %v659, -2.0
      %v1061 = vadd.f32 %v660, -2.0
      %v1062 = vadd.f32 %v661, -2.0
      %v1063 = vadd.f32 %v662, -2.0
      %v1064 = vadd.f32 %v663, -2.0
      %v1065 = vadd.f32 %v664, -2.0
      %v1066 = vadd.f32 %v665, -2.0
      %v1067 = vadd.f32 %v666, -2.0
      %v1068 = vadd.f32 %v667, -2.0
      %vm1069 = vcmp.ge.f32.partialorder %v1037, 0.0
      %vm1070 = vcmp.ge.f32.partialorder %v1038, 0.0
      %vm1071 = vcmp.ge.f32.partialorder %v1039, 0.0
      %vm1072 = vcmp.ge.f32.partialorder %v1040, 0.0
      %vm1073 = vcmp.ge.f32.partialorder %v1041, 0.0
      %vm1074 = vcmp.ge.f32.partialorder %v1042, 0.0
      %vm1075 = vcmp.ge.f32.partialorder %v1043, 0.0
      %vm1076 = vcmp.ge.f32.partialorder %v1044, 0.0
      %vm1077 = vcmp.ge.f32.partialorder %v1045, 0.0
      %vm1078 = vcmp.ge.f32.partialorder %v1046, 0.0
      %vm1079 = vcmp.ge.f32.partialorder %v1047, 0.0
      %vm1080 = vcmp.ge.f32.partialorder %v1048, 0.0
      %vm1081 = vcmp.ge.f32.partialorder %v1049, 0.0
      %vm1082 = vcmp.ge.f32.partialorder %v1050, 0.0
      %vm1083 = vcmp.ge.f32.partialorder %v1051, 0.0
      %vm1084 = vcmp.ge.f32.partialorder %v1052, 0.0
      %vm1085 = vcmp.ge.f32.partialorder %v1053, 0.0
      %vm1086 = vcmp.ge.f32.partialorder %v1054, 0.0
      %vm1087 = vcmp.ge.f32.partialorder %v1055, 0.0
      %vm1088 = vcmp.ge.f32.partialorder %v1056, 0.0
      %vm1089 = vcmp.ge.f32.partialorder %v1057, 0.0
      %vm1090 = vcmp.ge.f32.partialorder %v1058, 0.0
      %vm1091 = vcmp.ge.f32.partialorder %v1059, 0.0
      %vm1092 = vcmp.ge.f32.partialorder %v1060, 0.0
      %vm1093 = vcmp.ge.f32.partialorder %v1061, 0.0
      %vm1094 = vcmp.ge.f32.partialorder %v1062, 0.0
      %vm1095 = vcmp.ge.f32.partialorder %v1063, 0.0
      %vm1096 = vcmp.ge.f32.partialorder %v1064, 0.0
      %vm1097 = vcmp.ge.f32.partialorder %v1065, 0.0
      %vm1098 = vcmp.ge.f32.partialorder %v1066, 0.0
      %vm1099 = vcmp.ge.f32.partialorder %v1067, 0.0
      %vm1100 = vcmp.ge.f32.partialorder %v1068, 0.0
      %vm1101 = vcmp.le.f32.partialorder %v1037, 15.0
      %vm1102 = vcmp.le.f32.partialorder %v1038, 15.0
      %vm1103 = vcmp.le.f32.partialorder %v1039, 15.0
      %vm1104 = vcmp.le.f32.partialorder %v1040, 15.0
      %vm1105 = vcmp.le.f32.partialorder %v1041, 15.0
      %vm1106 = vcmp.le.f32.partialorder %v1042, 15.0
      %vm1107 = vcmp.le.f32.partialorder %v1043, 15.0
      %vm1108 = vcmp.le.f32.partialorder %v1044, 15.0
      %vm1109 = vcmp.le.f32.partialorder %v1045, 15.0
      %vm1110 = vcmp.le.f32.partialorder %v1046, 15.0
      %vm1111 = vcmp.le.f32.partialorder %v1047, 15.0
      %vm1112 = vcmp.le.f32.partialorder %v1048, 15.0
      %vm1113 = vcmp.le.f32.partialorder %v1049, 15.0
      %vm1114 = vcmp.le.f32.partialorder %v1050, 15.0
      %vm1115 = vcmp.le.f32.partialorder %v1051, 15.0
      %vm1116 = vcmp.le.f32.partialorder %v1052, 15.0
      %vm1117 = vcmp.le.f32.partialorder %v1053, 15.0
      %vm1118 = vcmp.le.f32.partialorder %v1054, 15.0
      %vm1119 = vcmp.le.f32.partialorder %v1055, 15.0
      %vm1120 = vcmp.le.f32.partialorder %v1056, 15.0
      %vm1121 = vcmp.le.f32.partialorder %v1057, 15.0
      %vm1122 = vcmp.le.f32.partialorder %v1058, 15.0
      %vm1123 = vcmp.le.f32.partialorder %v1059, 15.0
      %vm1124 = vcmp.le.f32.partialorder %v1060, 15.0
      %vm1125 = vcmp.le.f32.partialorder %v1061, 15.0
      %vm1126 = vcmp.le.f32.partialorder %v1062, 15.0
      %vm1127 = vcmp.le.f32.partialorder %v1063, 15.0
      %vm1128 = vcmp.le.f32.partialorder %v1064, 15.0
      %vm1129 = vcmp.le.f32.partialorder %v1065, 15.0
      %vm1130 = vcmp.le.f32.partialorder %v1066, 15.0
      %vm1131 = vcmp.le.f32.partialorder %v1067, 15.0
      %vm1132 = vcmp.le.f32.partialorder %v1068, 15.0
      %vm1133 = vmand %vm1069, %vm1101
      %vm1134 = vmand %vm1070, %vm1102
      %vm1135 = vmand %vm1071, %vm1103
      %vm1136 = vmand %vm1072, %vm1104
      %vm1137 = vmand %vm1073, %vm1105
      %vm1138 = vmand %vm1074, %vm1106
      %vm1139 = vmand %vm1075, %vm1107
      %vm1140 = vmand %vm1076, %vm1108
      %vm1141 = vmand %vm1077, %vm1109
      %vm1142 = vmand %vm1078, %vm1110
      %vm1143 = vmand %vm1079, %vm1111
      %vm1144 = vmand %vm1080, %vm1112
      %vm1145 = vmand %vm1081, %vm1113
      %vm1146 = vmand %vm1082, %vm1114
      %vm1147 = vmand %vm1083, %vm1115
      %vm1148 = vmand %vm1084, %vm1116
      %vm1149 = vmand %vm1085, %vm1117
      %vm1150 = vmand %vm1086, %vm1118
      %vm1151 = vmand %vm1087, %vm1119
      %vm1152 = vmand %vm1088, %vm1120
      %vm1153 = vmand %vm1089, %vm1121
      %vm1154 = vmand %vm1090, %vm1122
      %vm1155 = vmand %vm1091, %vm1123
      %vm1156 = vmand %vm1092, %vm1124
      %vm1157 = vmand %vm1093, %vm1125
      %vm1158 = vmand %vm1094, %vm1126
      %vm1159 = vmand %vm1095, %vm1127
      %vm1160 = vmand %vm1096, %vm1128
      %vm1161 = vmand %vm1097, %vm1129
      %vm1162 = vmand %vm1098, %vm1130
      %vm1163 = vmand %vm1099, %vm1131
      %vm1164 = vmand %vm1100, %vm1132
      %v1165 = vsel %vm1133, 1, 0
      %v1166 = vsel %vm1134, 1, 0
      %v1167 = vsel %vm1135, 1, 0
      %v1168 = vsel %vm1136, 1, 0
      %v1169 = vsel %vm1137, 1, 0
      %v1170 = vsel %vm1138, 1, 0
      %v1171 = vsel %vm1139, 1, 0
      %v1172 = vsel %vm1140, 1, 0
      %v1173 = vsel %vm1141, 1, 0
      %v1174 = vsel %vm1142, 1, 0
      %v1175 = vsel %vm1143, 1, 0
      %v1176 = vsel %vm1144, 1, 0
      %v1177 = vsel %vm1145, 1, 0
      %v1178 = vsel %vm1146, 1, 0
      %v1179 = vsel %vm1147, 1, 0
      %v1180 = vsel %vm1148, 1, 0
      %v1181 = vsel %vm1149, 1, 0
      %v1182 = vsel %vm1150, 1, 0
      %v1183 = vsel %vm1151, 1, 0
      %v1184 = vsel %vm1152, 1, 0
      %v1185 = vsel %vm1153, 1, 0
      %v1186 = vsel %vm1154, 1, 0
      %v1187 = vsel %vm1155, 1, 0
      %v1188 = vsel %vm1156, 1, 0
      %v1189 = vsel %vm1157, 1, 0
      %v1190 = vsel %vm1158, 1, 0
      %v1191 = vsel %vm1159, 1, 0
      %v1192 = vsel %vm1160, 1, 0
      %v1193 = vsel %vm1161, 1, 0
      %v1194 = vsel %vm1162, 1, 0
      %v1195 = vsel %vm1163, 1, 0
      %v1196 = vsel %vm1164, 1, 0
      %1197 = vset.pattern.permute.xlu0 0
      %1198 = vperm.xlu0 %1197, %v1165
      %v1199 = vpop.permute.xlu0 %1198
      %1200 = vset.pattern.permute.xlu0 0
      %1201 = vperm.xlu0 %1200, %v1166
      %v1202 = vpop.permute.xlu0 %1201
      %1203 = vset.pattern.permute.xlu0 0
      %1204 = vperm.xlu0 %1203, %v1167
      %v1205 = vpop.permute.xlu0 %1204
      %1206 = vset.pattern.permute.xlu0 0
      %1207 = vperm.xlu0 %1206, %v1168
      %v1208 = vpop.permute.xlu0 %1207
      %1209 = vset.pattern.permute.xlu0 0
      %1210 = vperm.xlu0 %1209, %v1169
      %v1211 = vpop.permute.xlu0 %1210
      %1212 = vset.pattern.permute.xlu0 0
      %1213 = vperm.xlu0 %1212, %v1170
      %v1214 = vpop.permute.xlu0 %1213
      %1215 = vset.pattern.permute.xlu0 0
      %1216 = vperm.xlu0 %1215, %v1171
      %v1217 = vpop.permute.xlu0 %1216
      %1218 = vset.pattern.permute.xlu0 0
      %1219 = vperm.xlu0 %1218, %v1172
      %v1220 = vpop.permute.xlu0 %1219
      %1221 = vset.pattern.permute.xlu0 0
      %1222 = vperm.xlu0 %1221, %v1173
      %v1223 = vpop.permute.xlu0 %1222
      %1224 = vset.pattern.permute.xlu0 0
      %1225 = vperm.xlu0 %1224, %v1174
      %v1226 = vpop.permute.xlu0 %1225
      %1227 = vset.pattern.permute.xlu0 0
      %1228 = vperm.xlu0 %1227, %v1175
      %v1229 = vpop.permute.xlu0 %1228
      %1230 = vset.pattern.permute.xlu0 0
      %1231 = vperm.xlu0 %1230, %v1176
      %v1232 = vpop.permute.xlu0 %1231
      %1233 = vset.pattern.permute.xlu0 0
      %1234 = vperm.xlu0 %1233, %v1177
      %v1235 = vpop.permute.xlu0 %1234
      %1236 = vset.pattern.permute.xlu0 0
      %1237 = vperm.xlu0 %1236, %v1178
      %v1238 = vpop.permute.xlu0 %1237
      %1239 = vset.pattern.permute.xlu0 0
      %1240 = vperm.xlu0 %1239, %v1179
      %v1241 = vpop.permute.xlu0 %1240
      %1242 = vset.pattern.permute.xlu0 0
      %1243 = vperm.xlu0 %1242, %v1180
      %v1244 = vpop.permute.xlu0 %1243
      %1245 = vset.pattern.permute.xlu0 0
      %1246 = vperm.xlu0 %1245, %v1181
      %v1247 = vpop.permute.xlu0 %1246
      %1248 = vset.pattern.permute.xlu0 0
      %1249 = vperm.xlu0 %1248, %v1182
      %v1250 = vpop.permute.xlu0 %1249
      %1251 = vset.pattern.permute.xlu0 0
      %1252 = vperm.xlu0 %1251, %v1183
      %v1253 = vpop.permute.xlu0 %1252
      %1254 = vset.pattern.permute.xlu0 0
      %1255 = vperm.xlu0 %1254, %v1184
      %v1256 = vpop.permute.xlu0 %1255
      %1257 = vset.pattern.permute.xlu0 0
      %1258 = vperm.xlu0 %1257, %v1185
      %v1259 = vpop.permute.xlu0 %1258
      %1260 = vset.pattern.permute.xlu0 0
      %1261 = vperm.xlu0 %1260, %v1186
      %v1262 = vpop.permute.xlu0 %1261
      %1263 = vset.pattern.permute.xlu0 0
      %1264 = vperm.xlu0 %1263, %v1187
      %v1265 = vpop.permute.xlu0 %1264
      %1266 = vset.pattern.permute.xlu0 0
      %1267 = vperm.xlu0 %1266, %v1188
      %v1268 = vpop.permute.xlu0 %1267
      %1269 = vset.pattern.permute.xlu0 0
      %1270 = vperm.xlu0 %1269, %v1189
      %v1271 = vpop.permute.xlu0 %1270
      %1272 = vset.pattern.permute.xlu0 0
      %1273 = vperm.xlu0 %1272, %v1190
      %v1274 = vpop.permute.xlu0 %1273
      %1275 = vset.pattern.permute.xlu0 0
      %1276 = vperm.xlu0 %1275, %v1191
      %v1277 = vpop.permute.xlu0 %1276
      %1278 = vset.pattern.permute.xlu0 0
      %1279 = vperm.xlu0 %1278, %v1192
      %v1280 = vpop.permute.xlu0 %1279
      %1281 = vset.pattern.permute.xlu0 0
      %1282 = vperm.xlu0 %1281, %v1193
      %v1283 = vpop.permute.xlu0 %1282
      %1284 = vset.pattern.permute.xlu0 0
      %1285 = vperm.xlu0 %1284, %v1194
      %v1286 = vpop.permute.xlu0 %1285
      %1287 = vset.pattern.permute.xlu0 0
      %1288 = vperm.xlu0 %1287, %v1195
      %v1289 = vpop.permute.xlu0 %1288
      %1290 = vset.pattern.permute.xlu0 0
      %1291 = vperm.xlu0 %1290, %v1196
      %v1292 = vpop.permute.xlu0 %1291
      %vm1293 = vcmp.eq.s32.totalorder %v1199, 1
      %vm1294 = vcmp.eq.s32.totalorder %v1202, 1
      %vm1295 = vcmp.eq.s32.totalorder %v1205, 1
      %vm1296 = vcmp.eq.s32.totalorder %v1208, 1
      %vm1297 = vcmp.eq.s32.totalorder %v1211, 1
      %vm1298 = vcmp.eq.s32.totalorder %v1214, 1
      %vm1299 = vcmp.eq.s32.totalorder %v1217, 1
      %vm1300 = vcmp.eq.s32.totalorder %v1220, 1
      %vm1301 = vcmp.eq.s32.totalorder %v1223, 1
      %vm1302 = vcmp.eq.s32.totalorder %v1226, 1
      %vm1303 = vcmp.eq.s32.totalorder %v1229, 1
      %vm1304 = vcmp.eq.s32.totalorder %v1232, 1
      %vm1305 = vcmp.eq.s32.totalorder %v1235, 1
      %vm1306 = vcmp.eq.s32.totalorder %v1238, 1
      %vm1307 = vcmp.eq.s32.totalorder %v1241, 1
      %vm1308 = vcmp.eq.s32.totalorder %v1244, 1
      %vm1309 = vcmp.eq.s32.totalorder %v1247, 1
      %vm1310 = vcmp.eq.s32.totalorder %v1250, 1
      %vm1311 = vcmp.eq.s32.totalorder %v1253, 1
      %vm1312 = vcmp.eq.s32.totalorder %v1256, 1
      %vm1313 = vcmp.eq.s32.totalorder %v1259, 1
      %vm1314 = vcmp.eq.s32.totalorder %v1262, 1
      %vm1315 = vcmp.eq.s32.totalorder %v1265, 1
      %vm1316 = vcmp.eq.s32.totalorder %v1268, 1
      %vm1317 = vcmp.eq.s32.totalorder %v1271, 1
      %vm1318 = vcmp.eq.s32.totalorder %v1274, 1
      %vm1319 = vcmp.eq.s32.totalorder %v1277, 1
      %vm1320 = vcmp.eq.s32.totalorder %v1280, 1
      %vm1321 = vcmp.eq.s32.totalorder %v1283, 1
      %vm1322 = vcmp.eq.s32.totalorder %v1286, 1
      %vm1323 = vcmp.eq.s32.totalorder %v1289, 1
      %vm1324 = vcmp.eq.s32.totalorder %v1292, 1
      %v1325 = vsel %vm1293, %v1005, 0.0
      %v1326 = vsel %vm1294, %v1006, 0.0
      %v1327 = vsel %vm1295, %v1007, 0.0
      %v1328 = vsel %vm1296, %v1008, 0.0
      %v1329 = vsel %vm1297, %v1009, 0.0
      %v1330 = vsel %vm1298, %v1010, 0.0
      %v1331 = vsel %vm1299, %v1011, 0.0
      %v1332 = vsel %vm1300, %v1012, 0.0
      %v1333 = vsel %vm1301, %v1013, 0.0
      %v1334 = vsel %vm1302, %v1014, 0.0
      %v1335 = vsel %vm1303, %v1015, 0.0
      %v1336 = vsel %vm1304, %v1016, 0.0
      %v1337 = vsel %vm1305, %v1017, 0.0
      %v1338 = vsel %vm1306, %v1018, 0.0
      %v1339 = vsel %vm1307, %v1019, 0.0
      %v1340 = vsel %vm1308, %v1020, 0.0
      %v1341 = vsel %vm1309, %v1021, 0.0
      %v1342 = vsel %vm1310, %v1022, 0.0
      %v1343 = vsel %vm1311, %v1023, 0.0
      %v1344 = vsel %vm1312, %v1024, 0.0
      %v1345 = vsel %vm1313, %v1025, 0.0
      %v1346 = vsel %vm1314, %v1026, 0.0
      %v1347 = vsel %vm1315, %v1027, 0.0
      %v1348 = vsel %vm1316, %v1028, 0.0
      %v1349 = vsel %vm1317, %v1029, 0.0
      %v1350 = vsel %vm1318, %v1030, 0.0
      %v1351 = vsel %vm1319, %v1031, 0.0
      %v1352 = vsel %vm1320, %v1032, 0.0
      %v1353 = vsel %vm1321, %v1033, 0.0
      %v1354 = vsel %vm1322, %v1034, 0.0
      %v1355 = vsel %vm1323, %v1035, 0.0
      %v1356 = vsel %vm1324, %v1036, 0.0
      %v1357 = vadd.f32 %v1325, 0.0
      %v1358 = vadd.f32 %v1326, 0.0
      %v1359 = vadd.f32 %v1327, 0.0
      %v1360 = vadd.f32 %v1328, 0.0
      %v1361 = vadd.f32 %v1329, 0.0
      %v1362 = vadd.f32 %v1330, 0.0
      %v1363 = vadd.f32 %v1331, 0.0
      %v1364 = vadd.f32 %v1332, 0.0
      %v1365 = vadd.f32 %v1333, 0.0
      %v1366 = vadd.f32 %v1334, 0.0
      %v1367 = vadd.f32 %v1335, 0.0
      %v1368 = vadd.f32 %v1336, 0.0
      %v1369 = vadd.f32 %v1337, 0.0
      %v1370 = vadd.f32 %v1338, 0.0
      %v1371 = vadd.f32 %v1339, 0.0
      %v1372 = vadd.f32 %v1340, 0.0
      %v1373 = vadd.f32 %v1341, 0.0
      %v1374 = vadd.f32 %v1342, 0.0
      %v1375 = vadd.f32 %v1343, 0.0
      %v1376 = vadd.f32 %v1344, 0.0
      %v1377 = vadd.f32 %v1345, 0.0
      %v1378 = vadd.f32 %v1346, 0.0
      %v1379 = vadd.f32 %v1347, 0.0
      %v1380 = vadd.f32 %v1348, 0.0
      %v1381 = vadd.f32 %v1349, 0.0
      %v1382 = vadd.f32 %v1350, 0.0
      %v1383 = vadd.f32 %v1351, 0.0
      %v1384 = vadd.f32 %v1352, 0.0
      %v1385 = vadd.f32 %v1353, 0.0
      %v1386 = vadd.f32 %v1354, 0.0
      %v1387 = vadd.f32 %v1355, 0.0
      %v1388 = vadd.f32 %v1356, 0.0
      %v1389 = vld [vmem:[#allocation2 + $0x1] sm:$0xff]
      %v1390 = vld [vmem:[#allocation2 + $0x9] sm:$0xff]
      %v1391 = vld [vmem:[#allocation2 + $0x11] sm:$0xff]
      %v1392 = vld [vmem:[#allocation2 + $0x19] sm:$0xff]
      %v1393 = vld [vmem:[#allocation2 + $0x21] sm:$0xff]
      %v1394 = vld [vmem:[#allocation2 + $0x29] sm:$0xff]
      %v1395 = vld [vmem:[#allocation2 + $0x31] sm:$0xff]
      %v1396 = vld [vmem:[#allocation2 + $0x39] sm:$0xff]
      %v1397 = vld [vmem:[#allocation2 + $0x41] sm:$0xff]
      %v1398 = vld [vmem:[#allocation2 + $0x49] sm:$0xff]
      %v1399 = vld [vmem:[#allocation2 + $0x51] sm:$0xff]
      %v1400 = vld [vmem:[#allocation2 + $0x59] sm:$0xff]
      %v1401 = vld [vmem:[#allocation2 + $0x61] sm:$0xff]
      %v1402 = vld [vmem:[#allocation2 + $0x69] sm:$0xff]
      %v1403 = vld [vmem:[#allocation2 + $0x71] sm:$0xff]
      %v1404 = vld [vmem:[#allocation2 + $0x79] sm:$0xff]
      %v1405 = vld [vmem:[#allocation2 + $0x81] sm:$0xff]
      %v1406 = vld [vmem:[#allocation2 + $0x89] sm:$0xff]
      %v1407 = vld [vmem:[#allocation2 + $0x91] sm:$0xff]
      %v1408 = vld [vmem:[#allocation2 + $0x99] sm:$0xff]
      %v1409 = vld [vmem:[#allocation2 + $0xa1] sm:$0xff]
      %v1410 = vld [vmem:[#allocation2 + $0xa9] sm:$0xff]
      %v1411 = vld [vmem:[#allocation2 + $0xb1] sm:$0xff]
      %v1412 = vld [vmem:[#allocation2 + $0xb9] sm:$0xff]
      %v1413 = vld [vmem:[#allocation2 + $0xc1] sm:$0xff]
      %v1414 = vld [vmem:[#allocation2 + $0xc9] sm:$0xff]
      %v1415 = vld [vmem:[#allocation2 + $0xd1] sm:$0xff]
      %v1416 = vld [vmem:[#allocation2 + $0xd9] sm:$0xff]
      %v1417 = vld [vmem:[#allocation2 + $0xe1] sm:$0xff]
      %v1418 = vld [vmem:[#allocation2 + $0xe9] sm:$0xff]
      %v1419 = vld [vmem:[#allocation2 + $0xf1] sm:$0xff]
      %v1420 = vld [vmem:[#allocation2 + $0xf9] sm:$0xff]
      %v1421 = vperm.slane %v668, 1
      %v1422 = vmul.f32 %v1389, %v1421
      %v1423 = vmul.f32 %v1390, %v1421
      %v1424 = vmul.f32 %v1391, %v1421
      %v1425 = vmul.f32 %v1392, %v1421
      %v1426 = vmul.f32 %v1393, %v1421
      %v1427 = vmul.f32 %v1394, %v1421
      %v1428 = vmul.f32 %v1395, %v1421
      %v1429 = vmul.f32 %v1396, %v1421
      %v1430 = vmul.f32 %v1397, %v1421
      %v1431 = vmul.f32 %v1398, %v1421
      %v1432 = vmul.f32 %v1399, %v1421
      %v1433 = vmul.f32 %v1400, %v1421
      %v1434 = vmul.f32 %v1401, %v1421
      %v1435 = vmul.f32 %v1402, %v1421
      %v1436 = vmul.f32 %v1403, %v1421
      %v1437 = vmul.f32 %v1404, %v1421
      %v1438 = vmul.f32 %v1405, %v1421
      %v1439 = vmul.f32 %v1406, %v1421
      %v1440 = vmul.f32 %v1407, %v1421
      %v1441 = vmul.f32 %v1408, %v1421
      %v1442 = vmul.f32 %v1409, %v1421
      %v1443 = vmul.f32 %v1410, %v1421
      %v1444 = vmul.f32 %v1411, %v1421
      %v1445 = vmul.f32 %v1412, %v1421
      %v1446 = vmul.f32 %v1413, %v1421
      %v1447 = vmul.f32 %v1414, %v1421
      %v1448 = vmul.f32 %v1415, %v1421
      %v1449 = vmul.f32 %v1416, %v1421
      %v1450 = vmul.f32 %v1417, %v1421
      %v1451 = vmul.f32 %v1418, %v1421
      %v1452 = vmul.f32 %v1419, %v1421
      %v1453 = vmul.f32 %v1420, %v1421
      %v1454 = vadd.f32 %v1422, 0.0
      %v1455 = vadd.f32 %v1423, 0.0
      %v1456 = vadd.f32 %v1424, 0.0
      %v1457 = vadd.f32 %v1425, 0.0
      %v1458 = vadd.f32 %v1426, 0.0
      %v1459 = vadd.f32 %v1427, 0.0
      %v1460 = vadd.f32 %v1428, 0.0
      %v1461 = vadd.f32 %v1429, 0.0
      %v1462 = vadd.f32 %v1430, 0.0
      %v1463 = vadd.f32 %v1431, 0.0
      %v1464 = vadd.f32 %v1432, 0.0
      %v1465 = vadd.f32 %v1433, 0.0
      %v1466 = vadd.f32 %v1434, 0.0
      %v1467 = vadd.f32 %v1435, 0.0
      %v1468 = vadd.f32 %v1436, 0.0
      %v1469 = vadd.f32 %v1437, 0.0
      %v1470 = vadd.f32 %v1438, 0.0
      %v1471 = vadd.f32 %v1439, 0.0
      %v1472 = vadd.f32 %v1440, 0.0
      %v1473 = vadd.f32 %v1441, 0.0
      %v1474 = vadd.f32 %v1442, 0.0
      %v1475 = vadd.f32 %v1443, 0.0
      %v1476 = vadd.f32 %v1444, 0.0
      %v1477 = vadd.f32 %v1445, 0.0
      %v1478 = vadd.f32 %v1446, 0.0
      %v1479 = vadd.f32 %v1447, 0.0
      %v1480 = vadd.f32 %v1448, 0.0
      %v1481 = vadd.f32 %v1449, 0.0
      %v1482 = vadd.f32 %v1450, 0.0
      %v1483 = vadd.f32 %v1451, 0.0
      %v1484 = vadd.f32 %v1452, 0.0
      %v1485 = vadd.f32 %v1453, 0.0
      %v1486 = vld [vmem:[#allocation2 + $0x101] sm:$0xff]
      %v1487 = vld [vmem:[#allocation2 + $0x109] sm:$0xff]
      %v1488 = vperm.slane %v668, 6
      %v1489 = vmul.f32 %v1391, %v1488
      %v1490 = vmul.f32 %v1392, %v1488
      %v1491 = vmul.f32 %v1393, %v1488
      %v1492 = vmul.f32 %v1394, %v1488
      %v1493 = vmul.f32 %v1395, %v1488
      %v1494 = vmul.f32 %v1396, %v1488
      %v1495 = vmul.f32 %v1397, %v1488
      %v1496 = vmul.f32 %v1398, %v1488
      %v1497 = vmul.f32 %v1399, %v1488
      %v1498 = vmul.f32 %v1400, %v1488
      %v1499 = vmul.f32 %v1401, %v1488
      %v1500 = vmul.f32 %v1402, %v1488
      %v1501 = vmul.f32 %v1403, %v1488
      %v1502 = vmul.f32 %v1404, %v1488
      %v1503 = vmul.f32 %v1405, %v1488
      %v1504 = vmul.f32 %v1406, %v1488
      %v1505 = vmul.f32 %v1407, %v1488
      %v1506 = vmul.f32 %v1408, %v1488
      %v1507 = vmul.f32 %v1409, %v1488
      %v1508 = vmul.f32 %v1410, %v1488
      %v1509 = vmul.f32 %v1411, %v1488
      %v1510 = vmul.f32 %v1412, %v1488
      %v1511 = vmul.f32 %v1413, %v1488
      %v1512 = vmul.f32 %v1414, %v1488
      %v1513 = vmul.f32 %v1415, %v1488
      %v1514 = vmul.f32 %v1416, %v1488
      %v1515 = vmul.f32 %v1417, %v1488
      %v1516 = vmul.f32 %v1418, %v1488
      %v1517 = vmul.f32 %v1419, %v1488
      %v1518 = vmul.f32 %v1420, %v1488
      %v1519 = vmul.f32 %v1486, %v1488
      %v1520 = vmul.f32 %v1487, %v1488
      %v1521 = vadd.f32 %v1454, %v1489
      %v1522 = vadd.f32 %v1455, %v1490
      %v1523 = vadd.f32 %v1456, %v1491
      %v1524 = vadd.f32 %v1457, %v1492
      %v1525 = vadd.f32 %v1458, %v1493
      %v1526 = vadd.f32 %v1459, %v1494
      %v1527 = vadd.f32 %v1460, %v1495
      %v1528 = vadd.f32 %v1461, %v1496
      %v1529 = vadd.f32 %v1462, %v1497
      %v1530 = vadd.f32 %v1463, %v1498
      %v1531 = vadd.f32 %v1464, %v1499
      %v1532 = vadd.f32 %v1465, %v1500
      %v1533 = vadd.f32 %v1466, %v1501
      %v1534 = vadd.f32 %v1467, %v1502
      %v1535 = vadd.f32 %v1468, %v1503
      %v1536 = vadd.f32 %v1469, %v1504
      %v1537 = vadd.f32 %v1470, %v1505
      %v1538 = vadd.f32 %v1471, %v1506
      %v1539 = vadd.f32 %v1472, %v1507
      %v1540 = vadd.f32 %v1473, %v1508
      %v1541 = vadd.f32 %v1474, %v1509
      %v1542 = vadd.f32 %v1475, %v1510
      %v1543 = vadd.f32 %v1476, %v1511
      %v1544 = vadd.f32 %v1477, %v1512
      %v1545 = vadd.f32 %v1478, %v1513
      %v1546 = vadd.f32 %v1479, %v1514
      %v1547 = vadd.f32 %v1480, %v1515
      %v1548 = vadd.f32 %v1481, %v1516
      %v1549 = vadd.f32 %v1482, %v1517
      %v1550 = vadd.f32 %v1483, %v1518
      %v1551 = vadd.f32 %v1484, %v1519
      %v1552 = vadd.f32 %v1485, %v1520
      %v1553 = vld [vmem:[#allocation2 + $0x111] sm:$0xff]
      %v1554 = vld [vmem:[#allocation2 + $0x119] sm:$0xff]
      %v1555 = vperm.slane %v669, 3
      %v1556 = vmul.f32 %v1393, %v1555
      %v1557 = vmul.f32 %v1394, %v1555
      %v1558 = vmul.f32 %v1395, %v1555
      %v1559 = vmul.f32 %v1396, %v1555
      %v1560 = vmul.f32 %v1397, %v1555
      %v1561 = vmul.f32 %v1398, %v1555
      %v1562 = vmul.f32 %v1399, %v1555
      %v1563 = vmul.f32 %v1400, %v1555
      %v1564 = vmul.f32 %v1401, %v1555
      %v1565 = vmul.f32 %v1402, %v1555
      %v1566 = vmul.f32 %v1403, %v1555
      %v1567 = vmul.f32 %v1404, %v1555
      %v1568 = vmul.f32 %v1405, %v1555
      %v1569 = vmul.f32 %v1406, %v1555
      %v1570 = vmul.f32 %v1407, %v1555
      %v1571 = vmul.f32 %v1408, %v1555
      %v1572 = vmul.f32 %v1409, %v1555
      %v1573 = vmul.f32 %v1410, %v1555
      %v1574 = vmul.f32 %v1411, %v1555
      %v1575 = vmul.f32 %v1412, %v1555
      %v1576 = vmul.f32 %v1413, %v1555
      %v1577 = vmul.f32 %v1414, %v1555
      %v1578 = vmul.f32 %v1415, %v1555
      %v1579 = vmul.f32 %v1416, %v1555
      %v1580 = vmul.f32 %v1417, %v1555
      %v1581 = vmul.f32 %v1418, %v1555
      %v1582 = vmul.f32 %v1419, %v1555
      %v1583 = vmul.f32 %v1420, %v1555
      %v1584 = vmul.f32 %v1486, %v1555
      %v1585 = vmul.f32 %v1487, %v1555
      %v1586 = vmul.f32 %v1553, %v1555
      %v1587 = vmul.f32 %v1554, %v1555
      %v1588 = vadd.f32 %v1521, %v1556
      %v1589 = vadd.f32 %v1522, %v1557
      %v1590 = vadd.f32 %v1523, %v1558
      %v1591 = vadd.f32 %v1524, %v1559
      %v1592 = vadd.f32 %v1525, %v1560
      %v1593 = vadd.f32 %v1526, %v1561
      %v1594 = vadd.f32 %v1527, %v1562
      %v1595 = vadd.f32 %v1528, %v1563
      %v1596 = vadd.f32 %v1529, %v1564
      %v1597 = vadd.f32 %v1530, %v1565
      %v1598 = vadd.f32 %v1531, %v1566
      %v1599 = vadd.f32 %v1532, %v1567
      %v1600 = vadd.f32 %v1533, %v1568
      %v1601 = vadd.f32 %v1534, %v1569
      %v1602 = vadd.f32 %v1535, %v1570
      %v1603 = vadd.f32 %v1536, %v1571
      %v1604 = vadd.f32 %v1537, %v1572
      %v1605 = vadd.f32 %v1538, %v1573
      %v1606 = vadd.f32 %v1539, %v1574
      %v1607 = vadd.f32 %v1540, %v1575
      %v1608 = vadd.f32 %v1541, %v1576
      %v1609 = vadd.f32 %v1542, %v1577
      %v1610 = vadd.f32 %v1543, %v1578
      %v1611 = vadd.f32 %v1544, %v1579
      %v1612 = vadd.f32 %v1545, %v1580
      %v1613 = vadd.f32 %v1546, %v1581
      %v1614 = vadd.f32 %v1547, %v1582
      %v1615 = vadd.f32 %v1548, %v1583
      %v1616 = vadd.f32 %v1549, %v1584
      %v1617 = vadd.f32 %v1550, %v1585
      %v1618 = vadd.f32 %v1551, %v1586
      %v1619 = vadd.f32 %v1552, %v1587
      %v1620 = vld [vmem:[#allocation2 + $0x121] sm:$0xff]
      %v1621 = vld [vmem:[#allocation2 + $0x129] sm:$0xff]
      %v1622 = vperm.slane %v670, 0
      %v1623 = vmul.f32 %v1395, %v1622
      %v1624 = vmul.f32 %v1396, %v1622
      %v1625 = vmul.f32 %v1397, %v1622
      %v1626 = vmul.f32 %v1398, %v1622
      %v1627 = vmul.f32 %v1399, %v1622
      %v1628 = vmul.f32 %v1400, %v1622
      %v1629 = vmul.f32 %v1401, %v1622
      %v1630 = vmul.f32 %v1402, %v1622
      %v1631 = vmul.f32 %v1403, %v1622
      %v1632 = vmul.f32 %v1404, %v1622
      %v1633 = vmul.f32 %v1405, %v1622
      %v1634 = vmul.f32 %v1406, %v1622
      %v1635 = vmul.f32 %v1407, %v1622
      %v1636 = vmul.f32 %v1408, %v1622
      %v1637 = vmul.f32 %v1409, %v1622
      %v1638 = vmul.f32 %v1410, %v1622
      %v1639 = vmul.f32 %v1411, %v1622
      %v1640 = vmul.f32 %v1412, %v1622
      %v1641 = vmul.f32 %v1413, %v1622
      %v1642 = vmul.f32 %v1414, %v1622
      %v1643 = vmul.f32 %v1415, %v1622
      %v1644 = vmul.f32 %v1416, %v1622
      %v1645 = vmul.f32 %v1417, %v1622
      %v1646 = vmul.f32 %v1418, %v1622
      %v1647 = vmul.f32 %v1419, %v1622
      %v1648 = vmul.f32 %v1420, %v1622
      %v1649 = vmul.f32 %v1486, %v1622
      %v1650 = vmul.f32 %v1487, %v1622
      %v1651 = vmul.f32 %v1553, %v1622
      %v1652 = vmul.f32 %v1554, %v1622
      %v1653 = vmul.f32 %v1620, %v1622
      %v1654 = vmul.f32 %v1621, %v1622
      %v1655 = vadd.f32 %v1588, %v1623
      %v1656 = vadd.f32 %v1589, %v1624
      %v1657 = vadd.f32 %v1590, %v1625
      %v1658 = vadd.f32 %v1591, %v1626
      %v1659 = vadd.f32 %v1592, %v1627
      %v1660 = vadd.f32 %v1593, %v1628
      %v1661 = vadd.f32 %v1594, %v1629
      %v1662 = vadd.f32 %v1595, %v1630
      %v1663 = vadd.f32 %v1596, %v1631
      %v1664 = vadd.f32 %v1597, %v1632
      %v1665 = vadd.f32 %v1598, %v1633
      %v1666 = vadd.f32 %v1599, %v1634
      %v1667 = vadd.f32 %v1600, %v1635
      %v1668 = vadd.f32 %v1601, %v1636
      %v1669 = vadd.f32 %v1602, %v1637
      %v1670 = vadd.f32 %v1603, %v1638
      %v1671 = vadd.f32 %v1604, %v1639
      %v1672 = vadd.f32 %v1605, %v1640
      %v1673 = vadd.f32 %v1606, %v1641
      %v1674 = vadd.f32 %v1607, %v1642
      %v1675 = vadd.f32 %v1608, %v1643
      %v1676 = vadd.f32 %v1609, %v1644
      %v1677 = vadd.f32 %v1610, %v1645
      %v1678 = vadd.f32 %v1611, %v1646
      %v1679 = vadd.f32 %v1612, %v1647
      %v1680 = vadd.f32 %v1613, %v1648
      %v1681 = vadd.f32 %v1614, %v1649
      %v1682 = vadd.f32 %v1615, %v1650
      %v1683 = vadd.f32 %v1616, %v1651
      %v1684 = vadd.f32 %v1617, %v1652
      %v1685 = vadd.f32 %v1618, %v1653
      %v1686 = vadd.f32 %v1619, %v1654
      %v1687 = vld [vmem:[#allocation2 + $0x131] sm:$0xff]
      %v1688 = vld [vmem:[#allocation2 + $0x139] sm:$0xff]
      %v1689 = vperm.slane %v670, 5
      %v1690 = vmul.f32 %v1397, %v1689
      %v1691 = vmul.f32 %v1398, %v1689
      %v1692 = vmul.f32 %v1399, %v1689
      %v1693 = vmul.f32 %v1400, %v1689
      %v1694 = vmul.f32 %v1401, %v1689
      %v1695 = vmul.f32 %v1402, %v1689
      %v1696 = vmul.f32 %v1403, %v1689
      %v1697 = vmul.f32 %v1404, %v1689
      %v1698 = vmul.f32 %v1405, %v1689
      %v1699 = vmul.f32 %v1406, %v1689
      %v1700 = vmul.f32 %v1407, %v1689
      %v1701 = vmul.f32 %v1408, %v1689
      %v1702 = vmul.f32 %v1409, %v1689
      %v1703 = vmul.f32 %v1410, %v1689
      %v1704 = vmul.f32 %v1411, %v1689
      %v1705 = vmul.f32 %v1412, %v1689
      %v1706 = vmul.f32 %v1413, %v1689
      %v1707 = vmul.f32 %v1414, %v1689
      %v1708 = vmul.f32 %v1415, %v1689
      %v1709 = vmul.f32 %v1416, %v1689
      %v1710 = vmul.f32 %v1417, %v1689
      %v1711 = vmul.f32 %v1418, %v1689
      %v1712 = vmul.f32 %v1419, %v1689
      %v1713 = vmul.f32 %v1420, %v1689
      %v1714 = vmul.f32 %v1486, %v1689
      %v1715 = vmul.f32 %v1487, %v1689
      %v1716 = vmul.f32 %v1553, %v1689
      %v1717 = vmul.f32 %v1554, %v1689
      %v1718 = vmul.f32 %v1620, %v1689
      %v1719 = vmul.f32 %v1621, %v1689
      %v1720 = vmul.f32 %v1687, %v1689
      %v1721 = vmul.f32 %v1688, %v1689
      %v1722 = vadd.f32 %v1655, %v1690
      %v1723 = vadd.f32 %v1656, %v1691
      %v1724 = vadd.f32 %v1657, %v1692
      %v1725 = vadd.f32 %v1658, %v1693
      %v1726 = vadd.f32 %v1659, %v1694
      %v1727 = vadd.f32 %v1660, %v1695
      %v1728 = vadd.f32 %v1661, %v1696
      %v1729 = vadd.f32 %v1662, %v1697
      %v1730 = vadd.f32 %v1663, %v1698
      %v1731 = vadd.f32 %v1664, %v1699
      %v1732 = vadd.f32 %v1665, %v1700
      %v1733 = vadd.f32 %v1666, %v1701
      %v1734 = vadd.f32 %v1667, %v1702
      %v1735 = vadd.f32 %v1668, %v1703
      %v1736 = vadd.f32 %v1669, %v1704
      %v1737 = vadd.f32 %v1670, %v1705
      %v1738 = vadd.f32 %v1671, %v1706
      %v1739 = vadd.f32 %v1672, %v1707
      %v1740 = vadd.f32 %v1673, %v1708
      %v1741 = vadd.f32 %v1674, %v1709
      %v1742 = vadd.f32 %v1675, %v1710
      %v1743 = vadd.f32 %v1676, %v1711
      %v1744 = vadd.f32 %v1677, %v1712
      %v1745 = vadd.f32 %v1678, %v1713
      %v1746 = vadd.f32 %v1679, %v1714
      %v1747 = vadd.f32 %v1680, %v1715
      %v1748 = vadd.f32 %v1681, %v1716
      %v1749 = vadd.f32 %v1682, %v1717
      %v1750 = vadd.f32 %v1683, %v1718
      %v1751 = vadd.f32 %v1684, %v1719
      %v1752 = vadd.f32 %v1685, %v1720
      %v1753 = vadd.f32 %v1686, %v1721
      %v1754 = vadd.f32 %v636, -1.0
      %v1755 = vadd.f32 %v637, -1.0
      %v1756 = vadd.f32 %v638, -1.0
      %v1757 = vadd.f32 %v639, -1.0
      %v1758 = vadd.f32 %v640, -1.0
      %v1759 = vadd.f32 %v641, -1.0
      %v1760 = vadd.f32 %v642, -1.0
      %v1761 = vadd.f32 %v643, -1.0
      %v1762 = vadd.f32 %v644, -1.0
      %v1763 = vadd.f32 %v645, -1.0
      %v1764 = vadd.f32 %v646, -1.0
      %v1765 = vadd.f32 %v647, -1.0
      %v1766 = vadd.f32 %v648, -1.0
      %v1767 = vadd.f32 %v649, -1.0
      %v1768 = vadd.f32 %v650, -1.0
      %v1769 = vadd.f32 %v651, -1.0
      %v1770 = vadd.f32 %v652, -1.0
      %v1771 = vadd.f32 %v653, -1.0
      %v1772 = vadd.f32 %v654, -1.0
      %v1773 = vadd.f32 %v655, -1.0
      %v1774 = vadd.f32 %v656, -1.0
      %v1775 = vadd.f32 %v657, -1.0
      %v1776 = vadd.f32 %v658, -1.0
      %v1777 = vadd.f32 %v659, -1.0
      %v1778 = vadd.f32 %v660, -1.0
      %v1779 = vadd.f32 %v661, -1.0
      %v1780 = vadd.f32 %v662, -1.0
      %v1781 = vadd.f32 %v663, -1.0
      %v1782 = vadd.f32 %v664, -1.0
      %v1783 = vadd.f32 %v665, -1.0
      %v1784 = vadd.f32 %v666, -1.0
      %v1785 = vadd.f32 %v667, -1.0
      %vm1786 = vcmp.ge.f32.partialorder %v1754, 0.0
      %vm1787 = vcmp.ge.f32.partialorder %v1755, 0.0
      %vm1788 = vcmp.ge.f32.partialorder %v1756, 0.0
      %vm1789 = vcmp.ge.f32.partialorder %v1757, 0.0
      %vm1790 = vcmp.ge.f32.partialorder %v1758, 0.0
      %vm1791 = vcmp.ge.f32.partialorder %v1759, 0.0
      %vm1792 = vcmp.ge.f32.partialorder %v1760, 0.0
      %vm1793 = vcmp.ge.f32.partialorder %v1761, 0.0
      %vm1794 = vcmp.ge.f32.partialorder %v1762, 0.0
      %vm1795 = vcmp.ge.f32.partialorder %v1763, 0.0
      %vm1796 = vcmp.ge.f32.partialorder %v1764, 0.0
      %vm1797 = vcmp.ge.f32.partialorder %v1765, 0.0
      %vm1798 = vcmp.ge.f32.partialorder %v1766, 0.0
      %vm1799 = vcmp.ge.f32.partialorder %v1767, 0.0
      %vm1800 = vcmp.ge.f32.partialorder %v1768, 0.0
      %vm1801 = vcmp.ge.f32.partialorder %v1769, 0.0
      %vm1802 = vcmp.ge.f32.partialorder %v1770, 0.0
      %vm1803 = vcmp.ge.f32.partialorder %v1771, 0.0
      %vm1804 = vcmp.ge.f32.partialorder %v1772, 0.0
      %vm1805 = vcmp.ge.f32.partialorder %v1773, 0.0
      %vm1806 = vcmp.ge.f32.partialorder %v1774, 0.0
      %vm1807 = vcmp.ge.f32.partialorder %v1775, 0.0
      %vm1808 = vcmp.ge.f32.partialorder %v1776, 0.0
      %vm1809 = vcmp.ge.f32.partialorder %v1777, 0.0
      %vm1810 = vcmp.ge.f32.partialorder %v1778, 0.0
      %vm1811 = vcmp.ge.f32.partialorder %v1779, 0.0
      %vm1812 = vcmp.ge.f32.partialorder %v1780, 0.0
      %vm1813 = vcmp.ge.f32.partialorder %v1781, 0.0
      %vm1814 = vcmp.ge.f32.partialorder %v1782, 0.0
      %vm1815 = vcmp.ge.f32.partialorder %v1783, 0.0
      %vm1816 = vcmp.ge.f32.partialorder %v1784, 0.0
      %vm1817 = vcmp.ge.f32.partialorder %v1785, 0.0
      %vm1818 = vcmp.le.f32.partialorder %v1754, 15.0
      %vm1819 = vcmp.le.f32.partialorder %v1755, 15.0
      %vm1820 = vcmp.le.f32.partialorder %v1756, 15.0
      %vm1821 = vcmp.le.f32.partialorder %v1757, 15.0
      %vm1822 = vcmp.le.f32.partialorder %v1758, 15.0
      %vm1823 = vcmp.le.f32.partialorder %v1759, 15.0
      %vm1824 = vcmp.le.f32.partialorder %v1760, 15.0
      %vm1825 = vcmp.le.f32.partialorder %v1761, 15.0
      %vm1826 = vcmp.le.f32.partialorder %v1762, 15.0
      %vm1827 = vcmp.le.f32.partialorder %v1763, 15.0
      %vm1828 = vcmp.le.f32.partialorder %v1764, 15.0
      %vm1829 = vcmp.le.f32.partialorder %v1765, 15.0
      %vm1830 = vcmp.le.f32.partialorder %v1766, 15.0
      %vm1831 = vcmp.le.f32.partialorder %v1767, 15.0
      %vm1832 = vcmp.le.f32.partialorder %v1768, 15.0
      %vm1833 = vcmp.le.f32.partialorder %v1769, 15.0
      %vm1834 = vcmp.le.f32.partialorder %v1770, 15.0
      %vm1835 = vcmp.le.f32.partialorder %v1771, 15.0
      %vm1836 = vcmp.le.f32.partialorder %v1772, 15.0
      %vm1837 = vcmp.le.f32.partialorder %v1773, 15.0
      %vm1838 = vcmp.le.f32.partialorder %v1774, 15.0
      %vm1839 = vcmp.le.f32.partialorder %v1775, 15.0
      %vm1840 = vcmp.le.f32.partialorder %v1776, 15.0
      %vm1841 = vcmp.le.f32.partialorder %v1777, 15.0
      %vm1842 = vcmp.le.f32.partialorder %v1778, 15.0
      %vm1843 = vcmp.le.f32.partialorder %v1779, 15.0
      %vm1844 = vcmp.le.f32.partialorder %v1780, 15.0
      %vm1845 = vcmp.le.f32.partialorder %v1781, 15.0
      %vm1846 = vcmp.le.f32.partialorder %v1782, 15.0
      %vm1847 = vcmp.le.f32.partialorder %v1783, 15.0
      %vm1848 = vcmp.le.f32.partialorder %v1784, 15.0
      %vm1849 = vcmp.le.f32.partialorder %v1785, 15.0
      %vm1850 = vmand %vm1786, %vm1818
      %vm1851 = vmand %vm1787, %vm1819
      %vm1852 = vmand %vm1788, %vm1820
      %vm1853 = vmand %vm1789, %vm1821
      %vm1854 = vmand %vm1790, %vm1822
      %vm1855 = vmand %vm1791, %vm1823
      %vm1856 = vmand %vm1792, %vm1824
      %vm1857 = vmand %vm1793, %vm1825
      %vm1858 = vmand %vm1794, %vm1826
      %vm1859 = vmand %vm1795, %vm1827
      %vm1860 = vmand %vm1796, %vm1828
      %vm1861 = vmand %vm1797, %vm1829
      %vm1862 = vmand %vm1798, %vm1830
      %vm1863 = vmand %vm1799, %vm1831
      %vm1864 = vmand %vm1800, %vm1832
      %vm1865 = vmand %vm1801, %vm1833
      %vm1866 = vmand %vm1802, %vm1834
      %vm1867 = vmand %vm1803, %vm1835
      %vm1868 = vmand %vm1804, %vm1836
      %vm1869 = vmand %vm1805, %vm1837
      %vm1870 = vmand %vm1806, %vm1838
      %vm1871 = vmand %vm1807, %vm1839
      %vm1872 = vmand %vm1808, %vm1840
      %vm1873 = vmand %vm1809, %vm1841
      %vm1874 = vmand %vm1810, %vm1842
      %vm1875 = vmand %vm1811, %vm1843
      %vm1876 = vmand %vm1812, %vm1844
      %vm1877 = vmand %vm1813, %vm1845
      %vm1878 = vmand %vm1814, %vm1846
      %vm1879 = vmand %vm1815, %vm1847
      %vm1880 = vmand %vm1816, %vm1848
      %vm1881 = vmand %vm1817, %vm1849
      %v1882 = vsel %vm1850, 1, 0
      %v1883 = vsel %vm1851, 1, 0
      %v1884 = vsel %vm1852, 1, 0
      %v1885 = vsel %vm1853, 1, 0
      %v1886 = vsel %vm1854, 1, 0
      %v1887 = vsel %vm1855, 1, 0
      %v1888 = vsel %vm1856, 1, 0
      %v1889 = vsel %vm1857, 1, 0
      %v1890 = vsel %vm1858, 1, 0
      %v1891 = vsel %vm1859, 1, 0
      %v1892 = vsel %vm1860, 1, 0
      %v1893 = vsel %vm1861, 1, 0
      %v1894 = vsel %vm1862, 1, 0
      %v1895 = vsel %vm1863, 1, 0
      %v1896 = vsel %vm1864, 1, 0
      %v1897 = vsel %vm1865, 1, 0
      %v1898 = vsel %vm1866, 1, 0
      %v1899 = vsel %vm1867, 1, 0
      %v1900 = vsel %vm1868, 1, 0
      %v1901 = vsel %vm1869, 1, 0
      %v1902 = vsel %vm1870, 1, 0
      %v1903 = vsel %vm1871, 1, 0
      %v1904 = vsel %vm1872, 1, 0
      %v1905 = vsel %vm1873, 1, 0
      %v1906 = vsel %vm1874, 1, 0
      %v1907 = vsel %vm1875, 1, 0
      %v1908 = vsel %vm1876, 1, 0
      %v1909 = vsel %vm1877, 1, 0
      %v1910 = vsel %vm1878, 1, 0
      %v1911 = vsel %vm1879, 1, 0
      %v1912 = vsel %vm1880, 1, 0
      %v1913 = vsel %vm1881, 1, 0
      %1914 = vset.pattern.permute.xlu0 0
      %1915 = vperm.xlu0 %1914, %v1882
      %v1916 = vpop.permute.xlu0 %1915
      %1917 = vset.pattern.permute.xlu0 0
      %1918 = vperm.xlu0 %1917, %v1883
      %v1919 = vpop.permute.xlu0 %1918
      %1920 = vset.pattern.permute.xlu0 0
      %1921 = vperm.xlu0 %1920, %v1884
      %v1922 = vpop.permute.xlu0 %1921
      %1923 = vset.pattern.permute.xlu0 0
      %1924 = vperm.xlu0 %1923, %v1885
      %v1925 = vpop.permute.xlu0 %1924
      %1926 = vset.pattern.permute.xlu0 0
      %1927 = vperm.xlu0 %1926, %v1886
      %v1928 = vpop.permute.xlu0 %1927
      %1929 = vset.pattern.permute.xlu0 0
      %1930 = vperm.xlu0 %1929, %v1887
      %v1931 = vpop.permute.xlu0 %1930
      %1932 = vset.pattern.permute.xlu0 0
      %1933 = vperm.xlu0 %1932, %v1888
      %v1934 = vpop.permute.xlu0 %1933
      %1935 = vset.pattern.permute.xlu0 0
      %1936 = vperm.xlu0 %1935, %v1889
      %v1937 = vpop.permute.xlu0 %1936
      %1938 = vset.pattern.permute.xlu0 0
      %1939 = vperm.xlu0 %1938, %v1890
      %v1940 = vpop.permute.xlu0 %1939
      %1941 = vset.pattern.permute.xlu0 0
      %1942 = vperm.xlu0 %1941, %v1891
      %v1943 = vpop.permute.xlu0 %1942
      %1944 = vset.pattern.permute.xlu0 0
      %1945 = vperm.xlu0 %1944, %v1892
      %v1946 = vpop.permute.xlu0 %1945
      %1947 = vset.pattern.permute.xlu0 0
      %1948 = vperm.xlu0 %1947, %v1893
      %v1949 = vpop.permute.xlu0 %1948
      %1950 = vset.pattern.permute.xlu0 0
      %1951 = vperm.xlu0 %1950, %v1894
      %v1952 = vpop.permute.xlu0 %1951
      %1953 = vset.pattern.permute.xlu0 0
      %1954 = vperm.xlu0 %1953, %v1895
      %v1955 = vpop.permute.xlu0 %1954
      %1956 = vset.pattern.permute.xlu0 0
      %1957 = vperm.xlu0 %1956, %v1896
      %v1958 = vpop.permute.xlu0 %1957
      %1959 = vset.pattern.permute.xlu0 0
      %1960 = vperm.xlu0 %1959, %v1897
      %v1961 = vpop.permute.xlu0 %1960
      %1962 = vset.pattern.permute.xlu0 0
      %1963 = vperm.xlu0 %1962, %v1898
      %v1964 = vpop.permute.xlu0 %1963
      %1965 = vset.pattern.permute.xlu0 0
      %1966 = vperm.xlu0 %1965, %v1899
      %v1967 = vpop.permute.xlu0 %1966
      %1968 = vset.pattern.permute.xlu0 0
      %1969 = vperm.xlu0 %1968, %v1900
      %v1970 = vpop.permute.xlu0 %1969
      %1971 = vset.pattern.permute.xlu0 0
      %1972 = vperm.xlu0 %1971, %v1901
      %v1973 = vpop.permute.xlu0 %1972
      %1974 = vset.pattern.permute.xlu0 0
      %1975 = vperm.xlu0 %1974, %v1902
      %v1976 = vpop.permute.xlu0 %1975
      %1977 = vset.pattern.permute.xlu0 0
      %1978 = vperm.xlu0 %1977, %v1903
      %v1979 = vpop.permute.xlu0 %1978
      %1980 = vset.pattern.permute.xlu0 0
      %1981 = vperm.xlu0 %1980, %v1904
      %v1982 = vpop.permute.xlu0 %1981
      %1983 = vset.pattern.permute.xlu0 0
      %1984 = vperm.xlu0 %1983, %v1905
      %v1985 = vpop.permute.xlu0 %1984
      %1986 = vset.pattern.permute.xlu0 0
      %1987 = vperm.xlu0 %1986, %v1906
      %v1988 = vpop.permute.xlu0 %1987
      %1989 = vset.pattern.permute.xlu0 0
      %1990 = vperm.xlu0 %1989, %v1907
      %v1991 = vpop.permute.xlu0 %1990
      %1992 = vset.pattern.permute.xlu0 0
      %1993 = vperm.xlu0 %1992, %v1908
      %v1994 = vpop.permute.xlu0 %1993
      %1995 = vset.pattern.permute.xlu0 0
      %1996 = vperm.xlu0 %1995, %v1909
      %v1997 = vpop.permute.xlu0 %1996
      %1998 = vset.pattern.permute.xlu0 0
      %1999 = vperm.xlu0 %1998, %v1910
      %v2000 = vpop.permute.xlu0 %1999
      %2001 = vset.pattern.permute.xlu0 0
      %2002 = vperm.xlu0 %2001, %v1911
      %v2003 = vpop.permute.xlu0 %2002
      %2004 = vset.pattern.permute.xlu0 0
      %2005 = vperm.xlu0 %2004, %v1912
      %v2006 = vpop.permute.xlu0 %2005
      %2007 = vset.pattern.permute.xlu0 0
      %2008 = vperm.xlu0 %2007, %v1913
      %v2009 = vpop.permute.xlu0 %2008
      %vm2010 = vcmp.eq.s32.totalorder %v1916, 1
      %vm2011 = vcmp.eq.s32.totalorder %v1919, 1
      %vm2012 = vcmp.eq.s32.totalorder %v1922, 1
      %vm2013 = vcmp.eq.s32.totalorder %v1925, 1
      %vm2014 = vcmp.eq.s32.totalorder %v1928, 1
      %vm2015 = vcmp.eq.s32.totalorder %v1931, 1
      %vm2016 = vcmp.eq.s32.totalorder %v1934, 1
      %vm2017 = vcmp.eq.s32.totalorder %v1937, 1
      %vm2018 = vcmp.eq.s32.totalorder %v1940, 1
      %vm2019 = vcmp.eq.s32.totalorder %v1943, 1
      %vm2020 = vcmp.eq.s32.totalorder %v1946, 1
      %vm2021 = vcmp.eq.s32.totalorder %v1949, 1
      %vm2022 = vcmp.eq.s32.totalorder %v1952, 1
      %vm2023 = vcmp.eq.s32.totalorder %v1955, 1
      %vm2024 = vcmp.eq.s32.totalorder %v1958, 1
      %vm2025 = vcmp.eq.s32.totalorder %v1961, 1
      %vm2026 = vcmp.eq.s32.totalorder %v1964, 1
      %vm2027 = vcmp.eq.s32.totalorder %v1967, 1
      %vm2028 = vcmp.eq.s32.totalorder %v1970, 1
      %vm2029 = vcmp.eq.s32.totalorder %v1973, 1
      %vm2030 = vcmp.eq.s32.totalorder %v1976, 1
      %vm2031 = vcmp.eq.s32.totalorder %v1979, 1
      %vm2032 = vcmp.eq.s32.totalorder %v1982, 1
      %vm2033 = vcmp.eq.s32.totalorder %v1985, 1
      %vm2034 = vcmp.eq.s32.totalorder %v1988, 1
      %vm2035 = vcmp.eq.s32.totalorder %v1991, 1
      %vm2036 = vcmp.eq.s32.totalorder %v1994, 1
      %vm2037 = vcmp.eq.s32.totalorder %v1997, 1
      %vm2038 = vcmp.eq.s32.totalorder %v2000, 1
      %vm2039 = vcmp.eq.s32.totalorder %v2003, 1
      %vm2040 = vcmp.eq.s32.totalorder %v2006, 1
      %vm2041 = vcmp.eq.s32.totalorder %v2009, 1
      %v2042 = vsel %vm2010, %v1722, 0.0
      %v2043 = vsel %vm2011, %v1723, 0.0
      %v2044 = vsel %vm2012, %v1724, 0.0
      %v2045 = vsel %vm2013, %v1725, 0.0
      %v2046 = vsel %vm2014, %v1726, 0.0
      %v2047 = vsel %vm2015, %v1727, 0.0
      %v2048 = vsel %vm2016, %v1728, 0.0
      %v2049 = vsel %vm2017, %v1729, 0.0
      %v2050 = vsel %vm2018, %v1730, 0.0
      %v2051 = vsel %vm2019, %v1731, 0.0
      %v2052 = vsel %vm2020, %v1732, 0.0
      %v2053 = vsel %vm2021, %v1733, 0.0
      %v2054 = vsel %vm2022, %v1734, 0.0
      %v2055 = vsel %vm2023, %v1735, 0.0
      %v2056 = vsel %vm2024, %v1736, 0.0
      %v2057 = vsel %vm2025, %v1737, 0.0
      %v2058 = vsel %vm2026, %v1738, 0.0
      %v2059 = vsel %vm2027, %v1739, 0.0
      %v2060 = vsel %vm2028, %v1740, 0.0
      %v2061 = vsel %vm2029, %v1741, 0.0
      %v2062 = vsel %vm2030, %v1742, 0.0
      %v2063 = vsel %vm2031, %v1743, 0.0
      %v2064 = vsel %vm2032, %v1744, 0.0
      %v2065 = vsel %vm2033, %v1745, 0.0
      %v2066 = vsel %vm2034, %v1746, 0.0
      %v2067 = vsel %vm2035, %v1747, 0.0
      %v2068 = vsel %vm2036, %v1748, 0.0
      %v2069 = vsel %vm2037, %v1749, 0.0
      %v2070 = vsel %vm2038, %v1750, 0.0
      %v2071 = vsel %vm2039, %v1751, 0.0
      %v2072 = vsel %vm2040, %v1752, 0.0
      %v2073 = vsel %vm2041, %v1753, 0.0
      %v2074 = vadd.f32 %v1357, %v2042
      %v2075 = vadd.f32 %v1358, %v2043
      %v2076 = vadd.f32 %v1359, %v2044
      %v2077 = vadd.f32 %v1360, %v2045
      %v2078 = vadd.f32 %v1361, %v2046
      %v2079 = vadd.f32 %v1362, %v2047
      %v2080 = vadd.f32 %v1363, %v2048
      %v2081 = vadd.f32 %v1364, %v2049
      %v2082 = vadd.f32 %v1365, %v2050
      %v2083 = vadd.f32 %v1366, %v2051
      %v2084 = vadd.f32 %v1367, %v2052
      %v2085 = vadd.f32 %v1368, %v2053
      %v2086 = vadd.f32 %v1369, %v2054
      %v2087 = vadd.f32 %v1370, %v2055
      %v2088 = vadd.f32 %v1371, %v2056
      %v2089 = vadd.f32 %v1372, %v2057
      %v2090 = vadd.f32 %v1373, %v2058
      %v2091 = vadd.f32 %v1374, %v2059
      %v2092 = vadd.f32 %v1375, %v2060
      %v2093 = vadd.f32 %v1376, %v2061
      %v2094 = vadd.f32 %v1377, %v2062
      %v2095 = vadd.f32 %v1378, %v2063
      %v2096 = vadd.f32 %v1379, %v2064
      %v2097 = vadd.f32 %v1380, %v2065
      %v2098 = vadd.f32 %v1381, %v2066
      %v2099 = vadd.f32 %v1382, %v2067
      %v2100 = vadd.f32 %v1383, %v2068
      %v2101 = vadd.f32 %v1384, %v2069
      %v2102 = vadd.f32 %v1385, %v2070
      %v2103 = vadd.f32 %v1386, %v2071
      %v2104 = vadd.f32 %v1387, %v2072
      %v2105 = vadd.f32 %v1388, %v2073
      %v2106 = vld [vmem:[#allocation2 + $0x2] sm:$0xff]
      %v2107 = vld [vmem:[#allocation2 + $0xa] sm:$0xff]
      %v2108 = vld [vmem:[#allocation2 + $0x12] sm:$0xff]
      %v2109 = vld [vmem:[#allocation2 + $0x1a] sm:$0xff]
      %v2110 = vld [vmem:[#allocation2 + $0x22] sm:$0xff]
      %v2111 = vld [vmem:[#allocation2 + $0x2a] sm:$0xff]
      %v2112 = vld [vmem:[#allocation2 + $0x32] sm:$0xff]
      %v2113 = vld [vmem:[#allocation2 + $0x3a] sm:$0xff]
      %v2114 = vld [vmem:[#allocation2 + $0x42] sm:$0xff]
      %v2115 = vld [vmem:[#allocation2 + $0x4a] sm:$0xff]
      %v2116 = vld [vmem:[#allocation2 + $0x52] sm:$0xff]
      %v2117 = vld [vmem:[#allocation2 + $0x5a] sm:$0xff]
      %v2118 = vld [vmem:[#allocation2 + $0x62] sm:$0xff]
      %v2119 = vld [vmem:[#allocation2 + $0x6a] sm:$0xff]
      %v2120 = vld [vmem:[#allocation2 + $0x72] sm:$0xff]
      %v2121 = vld [vmem:[#allocation2 + $0x7a] sm:$0xff]
      %v2122 = vld [vmem:[#allocation2 + $0x82] sm:$0xff]
      %v2123 = vld [vmem:[#allocation2 + $0x8a] sm:$0xff]
      %v2124 = vld [vmem:[#allocation2 + $0x92] sm:$0xff]
      %v2125 = vld [vmem:[#allocation2 + $0x9a] sm:$0xff]
      %v2126 = vld [vmem:[#allocation2 + $0xa2] sm:$0xff]
      %v2127 = vld [vmem:[#allocation2 + $0xaa] sm:$0xff]
      %v2128 = vld [vmem:[#allocation2 + $0xb2] sm:$0xff]
      %v2129 = vld [vmem:[#allocation2 + $0xba] sm:$0xff]
      %v2130 = vld [vmem:[#allocation2 + $0xc2] sm:$0xff]
      %v2131 = vld [vmem:[#allocation2 + $0xca] sm:$0xff]
      %v2132 = vld [vmem:[#allocation2 + $0xd2] sm:$0xff]
      %v2133 = vld [vmem:[#allocation2 + $0xda] sm:$0xff]
      %v2134 = vld [vmem:[#allocation2 + $0xe2] sm:$0xff]
      %v2135 = vld [vmem:[#allocation2 + $0xea] sm:$0xff]
      %v2136 = vld [vmem:[#allocation2 + $0xf2] sm:$0xff]
      %v2137 = vld [vmem:[#allocation2 + $0xfa] sm:$0xff]
      %v2138 = vperm.slane %v668, 2
      %v2139 = vmul.f32 %v2106, %v2138
      %v2140 = vmul.f32 %v2107, %v2138
      %v2141 = vmul.f32 %v2108, %v2138
      %v2142 = vmul.f32 %v2109, %v2138
      %v2143 = vmul.f32 %v2110, %v2138
      %v2144 = vmul.f32 %v2111, %v2138
      %v2145 = vmul.f32 %v2112, %v2138
      %v2146 = vmul.f32 %v2113, %v2138
      %v2147 = vmul.f32 %v2114, %v2138
      %v2148 = vmul.f32 %v2115, %v2138
      %v2149 = vmul.f32 %v2116, %v2138
      %v2150 = vmul.f32 %v2117, %v2138
      %v2151 = vmul.f32 %v2118, %v2138
      %v2152 = vmul.f32 %v2119, %v2138
      %v2153 = vmul.f32 %v2120, %v2138
      %v2154 = vmul.f32 %v2121, %v2138
      %v2155 = vmul.f32 %v2122, %v2138
      %v2156 = vmul.f32 %v2123, %v2138
      %v2157 = vmul.f32 %v2124, %v2138
      %v2158 = vmul.f32 %v2125, %v2138
      %v2159 = vmul.f32 %v2126, %v2138
      %v2160 = vmul.f32 %v2127, %v2138
      %v2161 = vmul.f32 %v2128, %v2138
      %v2162 = vmul.f32 %v2129, %v2138
      %v2163 = vmul.f32 %v2130, %v2138
      %v2164 = vmul.f32 %v2131, %v2138
      %v2165 = vmul.f32 %v2132, %v2138
      %v2166 = vmul.f32 %v2133, %v2138
      %v2167 = vmul.f32 %v2134, %v2138
      %v2168 = vmul.f32 %v2135, %v2138
      %v2169 = vmul.f32 %v2136, %v2138
      %v2170 = vmul.f32 %v2137, %v2138
      %v2171 = vadd.f32 %v2139, 0.0
      %v2172 = vadd.f32 %v2140, 0.0
      %v2173 = vadd.f32 %v2141, 0.0
      %v2174 = vadd.f32 %v2142, 0.0
      %v2175 = vadd.f32 %v2143, 0.0
      %v2176 = vadd.f32 %v2144, 0.0
      %v2177 = vadd.f32 %v2145, 0.0
      %v2178 = vadd.f32 %v2146, 0.0
      %v2179 = vadd.f32 %v2147, 0.0
      %v2180 = vadd.f32 %v2148, 0.0
      %v2181 = vadd.f32 %v2149, 0.0
      %v2182 = vadd.f32 %v2150, 0.0
      %v2183 = vadd.f32 %v2151, 0.0
      %v2184 = vadd.f32 %v2152, 0.0
      %v2185 = vadd.f32 %v2153, 0.0
      %v2186 = vadd.f32 %v2154, 0.0
      %v2187 = vadd.f32 %v2155, 0.0
      %v2188 = vadd.f32 %v2156, 0.0
      %v2189 = vadd.f32 %v2157, 0.0
      %v2190 = vadd.f32 %v2158, 0.0
      %v2191 = vadd.f32 %v2159, 0.0
      %v2192 = vadd.f32 %v2160, 0.0
      %v2193 = vadd.f32 %v2161, 0.0
      %v2194 = vadd.f32 %v2162, 0.0
      %v2195 = vadd.f32 %v2163, 0.0
      %v2196 = vadd.f32 %v2164, 0.0
      %v2197 = vadd.f32 %v2165, 0.0
      %v2198 = vadd.f32 %v2166, 0.0
      %v2199 = vadd.f32 %v2167, 0.0
      %v2200 = vadd.f32 %v2168, 0.0
      %v2201 = vadd.f32 %v2169, 0.0
      %v2202 = vadd.f32 %v2170, 0.0
      %v2203 = vld [vmem:[#allocation2 + $0x102] sm:$0xff]
      %v2204 = vld [vmem:[#allocation2 + $0x10a] sm:$0xff]
      %v2205 = vperm.slane %v668, 7
      %v2206 = vmul.f32 %v2108, %v2205
      %v2207 = vmul.f32 %v2109, %v2205
      %v2208 = vmul.f32 %v2110, %v2205
      %v2209 = vmul.f32 %v2111, %v2205
      %v2210 = vmul.f32 %v2112, %v2205
      %v2211 = vmul.f32 %v2113, %v2205
      %v2212 = vmul.f32 %v2114, %v2205
      %v2213 = vmul.f32 %v2115, %v2205
      %v2214 = vmul.f32 %v2116, %v2205
      %v2215 = vmul.f32 %v2117, %v2205
      %v2216 = vmul.f32 %v2118, %v2205
      %v2217 = vmul.f32 %v2119, %v2205
      %v2218 = vmul.f32 %v2120, %v2205
      %v2219 = vmul.f32 %v2121, %v2205
      %v2220 = vmul.f32 %v2122, %v2205
      %v2221 = vmul.f32 %v2123, %v2205
      %v2222 = vmul.f32 %v2124, %v2205
      %v2223 = vmul.f32 %v2125, %v2205
      %v2224 = vmul.f32 %v2126, %v2205
      %v2225 = vmul.f32 %v2127, %v2205
      %v2226 = vmul.f32 %v2128, %v2205
      %v2227 = vmul.f32 %v2129, %v2205
      %v2228 = vmul.f32 %v2130, %v2205
      %v2229 = vmul.f32 %v2131, %v2205
      %v2230 = vmul.f32 %v2132, %v2205
      %v2231 = vmul.f32 %v2133, %v2205
      %v2232 = vmul.f32 %v2134, %v2205
      %v2233 = vmul.f32 %v2135, %v2205
      %v2234 = vmul.f32 %v2136, %v2205
      %v2235 = vmul.f32 %v2137, %v2205
      %v2236 = vmul.f32 %v2203, %v2205
      %v2237 = vmul.f32 %v2204, %v2205
      %v2238 = vadd.f32 %v2171, %v2206
      %v2239 = vadd.f32 %v2172, %v2207
      %v2240 = vadd.f32 %v2173, %v2208
      %v2241 = vadd.f32 %v2174, %v2209
      %v2242 = vadd.f32 %v2175, %v2210
      %v2243 = vadd.f32 %v2176, %v2211
      %v2244 = vadd.f32 %v2177, %v2212
      %v2245 = vadd.f32 %v2178, %v2213
      %v2246 = vadd.f32 %v2179, %v2214
      %v2247 = vadd.f32 %v2180, %v2215
      %v2248 = vadd.f32 %v2181, %v2216
      %v2249 = vadd.f32 %v2182, %v2217
      %v2250 = vadd.f32 %v2183, %v2218
      %v2251 = vadd.f32 %v2184, %v2219
      %v2252 = vadd.f32 %v2185, %v2220
      %v2253 = vadd.f32 %v2186, %v2221
      %v2254 = vadd.f32 %v2187, %v2222
      %v2255 = vadd.f32 %v2188, %v2223
      %v2256 = vadd.f32 %v2189, %v2224
      %v2257 = vadd.f32 %v2190, %v2225
      %v2258 = vadd.f32 %v2191, %v2226
      %v2259 = vadd.f32 %v2192, %v2227
      %v2260 = vadd.f32 %v2193, %v2228
      %v2261 = vadd.f32 %v2194, %v2229
      %v2262 = vadd.f32 %v2195, %v2230
      %v2263 = vadd.f32 %v2196, %v2231
      %v2264 = vadd.f32 %v2197, %v2232
      %v2265 = vadd.f32 %v2198, %v2233
      %v2266 = vadd.f32 %v2199, %v2234
      %v2267 = vadd.f32 %v2200, %v2235
      %v2268 = vadd.f32 %v2201, %v2236
      %v2269 = vadd.f32 %v2202, %v2237
      %v2270 = vld [vmem:[#allocation2 + $0x112] sm:$0xff]
      %v2271 = vld [vmem:[#allocation2 + $0x11a] sm:$0xff]
      %v2272 = vperm.slane %v669, 4
      %v2273 = vmul.f32 %v2110, %v2272
      %v2274 = vmul.f32 %v2111, %v2272
      %v2275 = vmul.f32 %v2112, %v2272
      %v2276 = vmul.f32 %v2113, %v2272
      %v2277 = vmul.f32 %v2114, %v2272
      %v2278 = vmul.f32 %v2115, %v2272
      %v2279 = vmul.f32 %v2116, %v2272
      %v2280 = vmul.f32 %v2117, %v2272
      %v2281 = vmul.f32 %v2118, %v2272
      %v2282 = vmul.f32 %v2119, %v2272
      %v2283 = vmul.f32 %v2120, %v2272
      %v2284 = vmul.f32 %v2121, %v2272
      %v2285 = vmul.f32 %v2122, %v2272
      %v2286 = vmul.f32 %v2123, %v2272
      %v2287 = vmul.f32 %v2124, %v2272
      %v2288 = vmul.f32 %v2125, %v2272
      %v2289 = vmul.f32 %v2126, %v2272
      %v2290 = vmul.f32 %v2127, %v2272
      %v2291 = vmul.f32 %v2128, %v2272
      %v2292 = vmul.f32 %v2129, %v2272
      %v2293 = vmul.f32 %v2130, %v2272
      %v2294 = vmul.f32 %v2131, %v2272
      %v2295 = vmul.f32 %v2132, %v2272
      %v2296 = vmul.f32 %v2133, %v2272
      %v2297 = vmul.f32 %v2134, %v2272
      %v2298 = vmul.f32 %v2135, %v2272
      %v2299 = vmul.f32 %v2136, %v2272
      %v2300 = vmul.f32 %v2137, %v2272
      %v2301 = vmul.f32 %v2203, %v2272
      %v2302 = vmul.f32 %v2204, %v2272
      %v2303 = vmul.f32 %v2270, %v2272
      %v2304 = vmul.f32 %v2271, %v2272
      %v2305 = vadd.f32 %v2238, %v2273
      %v2306 = vadd.f32 %v2239, %v2274
      %v2307 = vadd.f32 %v2240, %v2275
      %v2308 = vadd.f32 %v2241, %v2276
      %v2309 = vadd.f32 %v2242, %v2277
      %v2310 = vadd.f32 %v2243, %v2278
      %v2311 = vadd.f32 %v2244, %v2279
      %v2312 = vadd.f32 %v2245, %v2280
      %v2313 = vadd.f32 %v2246, %v2281
      %v2314 = vadd.f32 %v2247, %v2282
      %v2315 = vadd.f32 %v2248, %v2283
      %v2316 = vadd.f32 %v2249, %v2284
      %v2317 = vadd.f32 %v2250, %v2285
      %v2318 = vadd.f32 %v2251, %v2286
      %v2319 = vadd.f32 %v2252, %v2287
      %v2320 = vadd.f32 %v2253, %v2288
      %v2321 = vadd.f32 %v2254, %v2289
      %v2322 = vadd.f32 %v2255, %v2290
      %v2323 = vadd.f32 %v2256, %v2291
      %v2324 = vadd.f32 %v2257, %v2292
      %v2325 = vadd.f32 %v2258, %v2293
      %v2326 = vadd.f32 %v2259, %v2294
      %v2327 = vadd.f32 %v2260, %v2295
      %v2328 = vadd.f32 %v2261, %v2296
      %v2329 = vadd.f32 %v2262, %v2297
      %v2330 = vadd.f32 %v2263, %v2298
      %v2331 = vadd.f32 %v2264, %v2299
      %v2332 = vadd.f32 %v2265, %v2300
      %v2333 = vadd.f32 %v2266, %v2301
      %v2334 = vadd.f32 %v2267, %v2302
      %v2335 = vadd.f32 %v2268, %v2303
      %v2336 = vadd.f32 %v2269, %v2304
      %v2337 = vld [vmem:[#allocation2 + $0x122] sm:$0xff]
      %v2338 = vld [vmem:[#allocation2 + $0x12a] sm:$0xff]
      %v2339 = vperm.slane %v670, 1
      %v2340 = vmul.f32 %v2112, %v2339
      %v2341 = vmul.f32 %v2113, %v2339
      %v2342 = vmul.f32 %v2114, %v2339
      %v2343 = vmul.f32 %v2115, %v2339
      %v2344 = vmul.f32 %v2116, %v2339
      %v2345 = vmul.f32 %v2117, %v2339
      %v2346 = vmul.f32 %v2118, %v2339
      %v2347 = vmul.f32 %v2119, %v2339
      %v2348 = vmul.f32 %v2120, %v2339
      %v2349 = vmul.f32 %v2121, %v2339
      %v2350 = vmul.f32 %v2122, %v2339
      %v2351 = vmul.f32 %v2123, %v2339
      %v2352 = vmul.f32 %v2124, %v2339
      %v2353 = vmul.f32 %v2125, %v2339
      %v2354 = vmul.f32 %v2126, %v2339
      %v2355 = vmul.f32 %v2127, %v2339
      %v2356 = vmul.f32 %v2128, %v2339
      %v2357 = vmul.f32 %v2129, %v2339
      %v2358 = vmul.f32 %v2130, %v2339
      %v2359 = vmul.f32 %v2131, %v2339
      %v2360 = vmul.f32 %v2132, %v2339
      %v2361 = vmul.f32 %v2133, %v2339
      %v2362 = vmul.f32 %v2134, %v2339
      %v2363 = vmul.f32 %v2135, %v2339
      %v2364 = vmul.f32 %v2136, %v2339
      %v2365 = vmul.f32 %v2137, %v2339
      %v2366 = vmul.f32 %v2203, %v2339
      %v2367 = vmul.f32 %v2204, %v2339
      %v2368 = vmul.f32 %v2270, %v2339
      %v2369 = vmul.f32 %v2271, %v2339
      %v2370 = vmul.f32 %v2337, %v2339
      %v2371 = vmul.f32 %v2338, %v2339
      %v2372 = vadd.f32 %v2305, %v2340
      %v2373 = vadd.f32 %v2306, %v2341
      %v2374 = vadd.f32 %v2307, %v2342
      %v2375 = vadd.f32 %v2308, %v2343
      %v2376 = vadd.f32 %v2309, %v2344
      %v2377 = vadd.f32 %v2310, %v2345
      %v2378 = vadd.f32 %v2311, %v2346
      %v2379 = vadd.f32 %v2312, %v2347
      %v2380 = vadd.f32 %v2313, %v2348
      %v2381 = vadd.f32 %v2314, %v2349
      %v2382 = vadd.f32 %v2315, %v2350
      %v2383 = vadd.f32 %v2316, %v2351
      %v2384 = vadd.f32 %v2317, %v2352
      %v2385 = vadd.f32 %v2318, %v2353
      %v2386 = vadd.f32 %v2319, %v2354
      %v2387 = vadd.f32 %v2320, %v2355
      %v2388 = vadd.f32 %v2321, %v2356
      %v2389 = vadd.f32 %v2322, %v2357
      %v2390 = vadd.f32 %v2323, %v2358
      %v2391 = vadd.f32 %v2324, %v2359
      %v2392 = vadd.f32 %v2325, %v2360
      %v2393 = vadd.f32 %v2326, %v2361
      %v2394 = vadd.f32 %v2327, %v2362
      %v2395 = vadd.f32 %v2328, %v2363
      %v2396 = vadd.f32 %v2329, %v2364
      %v2397 = vadd.f32 %v2330, %v2365
      %v2398 = vadd.f32 %v2331, %v2366
      %v2399 = vadd.f32 %v2332, %v2367
      %v2400 = vadd.f32 %v2333, %v2368
      %v2401 = vadd.f32 %v2334, %v2369
      %v2402 = vadd.f32 %v2335, %v2370
      %v2403 = vadd.f32 %v2336, %v2371
      %v2404 = vld [vmem:[#allocation2 + $0x132] sm:$0xff]
      %v2405 = vld [vmem:[#allocation2 + $0x13a] sm:$0xff]
      %v2406 = vperm.slane %v670, 6
      %v2407 = vmul.f32 %v2114, %v2406
      %v2408 = vmul.f32 %v2115, %v2406
      %v2409 = vmul.f32 %v2116, %v2406
      %v2410 = vmul.f32 %v2117, %v2406
      %v2411 = vmul.f32 %v2118, %v2406
      %v2412 = vmul.f32 %v2119, %v2406
      %v2413 = vmul.f32 %v2120, %v2406
      %v2414 = vmul.f32 %v2121, %v2406
      %v2415 = vmul.f32 %v2122, %v2406
      %v2416 = vmul.f32 %v2123, %v2406
      %v2417 = vmul.f32 %v2124, %v2406
      %v2418 = vmul.f32 %v2125, %v2406
      %v2419 = vmul.f32 %v2126, %v2406
      %v2420 = vmul.f32 %v2127, %v2406
      %v2421 = vmul.f32 %v2128, %v2406
      %v2422 = vmul.f32 %v2129, %v2406
      %v2423 = vmul.f32 %v2130, %v2406
      %v2424 = vmul.f32 %v2131, %v2406
      %v2425 = vmul.f32 %v2132, %v2406
      %v2426 = vmul.f32 %v2133, %v2406
      %v2427 = vmul.f32 %v2134, %v2406
      %v2428 = vmul.f32 %v2135, %v2406
      %v2429 = vmul.f32 %v2136, %v2406
      %v2430 = vmul.f32 %v2137, %v2406
      %v2431 = vmul.f32 %v2203, %v2406
      %v2432 = vmul.f32 %v2204, %v2406
      %v2433 = vmul.f32 %v2270, %v2406
      %v2434 = vmul.f32 %v2271, %v2406
      %v2435 = vmul.f32 %v2337, %v2406
      %v2436 = vmul.f32 %v2338, %v2406
      %v2437 = vmul.f32 %v2404, %v2406
      %v2438 = vmul.f32 %v2405, %v2406
      %v2439 = vadd.f32 %v2372, %v2407
      %v2440 = vadd.f32 %v2373, %v2408
      %v2441 = vadd.f32 %v2374, %v2409
      %v2442 = vadd.f32 %v2375, %v2410
      %v2443 = vadd.f32 %v2376, %v2411
      %v2444 = vadd.f32 %v2377, %v2412
      %v2445 = vadd.f32 %v2378, %v2413
      %v2446 = vadd.f32 %v2379, %v2414
      %v2447 = vadd.f32 %v2380, %v2415
      %v2448 = vadd.f32 %v2381, %v2416
      %v2449 = vadd.f32 %v2382, %v2417
      %v2450 = vadd.f32 %v2383, %v2418
      %v2451 = vadd.f32 %v2384, %v2419
      %v2452 = vadd.f32 %v2385, %v2420
      %v2453 = vadd.f32 %v2386, %v2421
      %v2454 = vadd.f32 %v2387, %v2422
      %v2455 = vadd.f32 %v2388, %v2423
      %v2456 = vadd.f32 %v2389, %v2424
      %v2457 = vadd.f32 %v2390, %v2425
      %v2458 = vadd.f32 %v2391, %v2426
      %v2459 = vadd.f32 %v2392, %v2427
      %v2460 = vadd.f32 %v2393, %v2428
      %v2461 = vadd.f32 %v2394, %v2429
      %v2462 = vadd.f32 %v2395, %v2430
      %v2463 = vadd.f32 %v2396, %v2431
      %v2464 = vadd.f32 %v2397, %v2432
      %v2465 = vadd.f32 %v2398, %v2433
      %v2466 = vadd.f32 %v2399, %v2434
      %v2467 = vadd.f32 %v2400, %v2435
      %v2468 = vadd.f32 %v2401, %v2436
      %v2469 = vadd.f32 %v2402, %v2437
      %v2470 = vadd.f32 %v2403, %v2438
      %v2471 = vadd.f32 %v2074, %v2439
      %v2472 = vadd.f32 %v2075, %v2440
      %v2473 = vadd.f32 %v2076, %v2441
      %v2474 = vadd.f32 %v2077, %v2442
      %v2475 = vadd.f32 %v2078, %v2443
      %v2476 = vadd.f32 %v2079, %v2444
      %v2477 = vadd.f32 %v2080, %v2445
      %v2478 = vadd.f32 %v2081, %v2446
      %v2479 = vadd.f32 %v2082, %v2447
      %v2480 = vadd.f32 %v2083, %v2448
      %v2481 = vadd.f32 %v2084, %v2449
      %v2482 = vadd.f32 %v2085, %v2450
      %v2483 = vadd.f32 %v2086, %v2451
      %v2484 = vadd.f32 %v2087, %v2452
      %v2485 = vadd.f32 %v2088, %v2453
      %v2486 = vadd.f32 %v2089, %v2454
      %v2487 = vadd.f32 %v2090, %v2455
      %v2488 = vadd.f32 %v2091, %v2456
      %v2489 = vadd.f32 %v2092, %v2457
      %v2490 = vadd.f32 %v2093, %v2458
      %v2491 = vadd.f32 %v2094, %v2459
      %v2492 = vadd.f32 %v2095, %v2460
      %v2493 = vadd.f32 %v2096, %v2461
      %v2494 = vadd.f32 %v2097, %v2462
      %v2495 = vadd.f32 %v2098, %v2463
      %v2496 = vadd.f32 %v2099, %v2464
      %v2497 = vadd.f32 %v2100, %v2465
      %v2498 = vadd.f32 %v2101, %v2466
      %v2499 = vadd.f32 %v2102, %v2467
      %v2500 = vadd.f32 %v2103, %v2468
      %v2501 = vadd.f32 %v2104, %v2469
      %v2502 = vadd.f32 %v2105, %v2470
      %v2503 = vld [vmem:[#allocation2 + $0x3] sm:$0xff]
      %v2504 = vld [vmem:[#allocation2 + $0xb] sm:$0xff]
      %v2505 = vld [vmem:[#allocation2 + $0x13] sm:$0xff]
      %v2506 = vld [vmem:[#allocation2 + $0x1b] sm:$0xff]
      %v2507 = vld [vmem:[#allocation2 + $0x23] sm:$0xff]
      %v2508 = vld [vmem:[#allocation2 + $0x2b] sm:$0xff]
      %v2509 = vld [vmem:[#allocation2 + $0x33] sm:$0xff]
      %v2510 = vld [vmem:[#allocation2 + $0x3b] sm:$0xff]
      %v2511 = vld [vmem:[#allocation2 + $0x43] sm:$0xff]
      %v2512 = vld [vmem:[#allocation2 + $0x4b] sm:$0xff]
      %v2513 = vld [vmem:[#allocation2 + $0x53] sm:$0xff]
      %v2514 = vld [vmem:[#allocation2 + $0x5b] sm:$0xff]
      %v2515 = vld [vmem:[#allocation2 + $0x63] sm:$0xff]
      %v2516 = vld [vmem:[#allocation2 + $0x6b] sm:$0xff]
      %v2517 = vld [vmem:[#allocation2 + $0x73] sm:$0xff]
      %v2518 = vld [vmem:[#allocation2 + $0x7b] sm:$0xff]
      %v2519 = vld [vmem:[#allocation2 + $0x83] sm:$0xff]
      %v2520 = vld [vmem:[#allocation2 + $0x8b] sm:$0xff]
      %v2521 = vld [vmem:[#allocation2 + $0x93] sm:$0xff]
      %v2522 = vld [vmem:[#allocation2 + $0x9b] sm:$0xff]
      %v2523 = vld [vmem:[#allocation2 + $0xa3] sm:$0xff]
      %v2524 = vld [vmem:[#allocation2 + $0xab] sm:$0xff]
      %v2525 = vld [vmem:[#allocation2 + $0xb3] sm:$0xff]
      %v2526 = vld [vmem:[#allocation2 + $0xbb] sm:$0xff]
      %v2527 = vld [vmem:[#allocation2 + $0xc3] sm:$0xff]
      %v2528 = vld [vmem:[#allocation2 + $0xcb] sm:$0xff]
      %v2529 = vld [vmem:[#allocation2 + $0xd3] sm:$0xff]
      %v2530 = vld [vmem:[#allocation2 + $0xdb] sm:$0xff]
      %v2531 = vld [vmem:[#allocation2 + $0xe3] sm:$0xff]
      %v2532 = vld [vmem:[#allocation2 + $0xeb] sm:$0xff]
      %v2533 = vld [vmem:[#allocation2 + $0xf3] sm:$0xff]
      %v2534 = vld [vmem:[#allocation2 + $0xfb] sm:$0xff]
      %v2535 = vperm.slane %v668, 3
      %v2536 = vmul.f32 %v2503, %v2535
      %v2537 = vmul.f32 %v2504, %v2535
      %v2538 = vmul.f32 %v2505, %v2535
      %v2539 = vmul.f32 %v2506, %v2535
      %v2540 = vmul.f32 %v2507, %v2535
      %v2541 = vmul.f32 %v2508, %v2535
      %v2542 = vmul.f32 %v2509, %v2535
      %v2543 = vmul.f32 %v2510, %v2535
      %v2544 = vmul.f32 %v2511, %v2535
      %v2545 = vmul.f32 %v2512, %v2535
      %v2546 = vmul.f32 %v2513, %v2535
      %v2547 = vmul.f32 %v2514, %v2535
      %v2548 = vmul.f32 %v2515, %v2535
      %v2549 = vmul.f32 %v2516, %v2535
      %v2550 = vmul.f32 %v2517, %v2535
      %v2551 = vmul.f32 %v2518, %v2535
      %v2552 = vmul.f32 %v2519, %v2535
      %v2553 = vmul.f32 %v2520, %v2535
      %v2554 = vmul.f32 %v2521, %v2535
      %v2555 = vmul.f32 %v2522, %v2535
      %v2556 = vmul.f32 %v2523, %v2535
      %v2557 = vmul.f32 %v2524, %v2535
      %v2558 = vmul.f32 %v2525, %v2535
      %v2559 = vmul.f32 %v2526, %v2535
      %v2560 = vmul.f32 %v2527, %v2535
      %v2561 = vmul.f32 %v2528, %v2535
      %v2562 = vmul.f32 %v2529, %v2535
      %v2563 = vmul.f32 %v2530, %v2535
      %v2564 = vmul.f32 %v2531, %v2535
      %v2565 = vmul.f32 %v2532, %v2535
      %v2566 = vmul.f32 %v2533, %v2535
      %v2567 = vmul.f32 %v2534, %v2535
      %v2568 = vadd.f32 %v2536, 0.0
      %v2569 = vadd.f32 %v2537, 0.0
      %v2570 = vadd.f32 %v2538, 0.0
      %v2571 = vadd.f32 %v2539, 0.0
      %v2572 = vadd.f32 %v2540, 0.0
      %v2573 = vadd.f32 %v2541, 0.0
      %v2574 = vadd.f32 %v2542, 0.0
      %v2575 = vadd.f32 %v2543, 0.0
      %v2576 = vadd.f32 %v2544, 0.0
      %v2577 = vadd.f32 %v2545, 0.0
      %v2578 = vadd.f32 %v2546, 0.0
      %v2579 = vadd.f32 %v2547, 0.0
      %v2580 = vadd.f32 %v2548, 0.0
      %v2581 = vadd.f32 %v2549, 0.0
      %v2582 = vadd.f32 %v2550, 0.0
      %v2583 = vadd.f32 %v2551, 0.0
      %v2584 = vadd.f32 %v2552, 0.0
      %v2585 = vadd.f32 %v2553, 0.0
      %v2586 = vadd.f32 %v2554, 0.0
      %v2587 = vadd.f32 %v2555, 0.0
      %v2588 = vadd.f32 %v2556, 0.0
      %v2589 = vadd.f32 %v2557, 0.0
      %v2590 = vadd.f32 %v2558, 0.0
      %v2591 = vadd.f32 %v2559, 0.0
      %v2592 = vadd.f32 %v2560, 0.0
      %v2593 = vadd.f32 %v2561, 0.0
      %v2594 = vadd.f32 %v2562, 0.0
      %v2595 = vadd.f32 %v2563, 0.0
      %v2596 = vadd.f32 %v2564, 0.0
      %v2597 = vadd.f32 %v2565, 0.0
      %v2598 = vadd.f32 %v2566, 0.0
      %v2599 = vadd.f32 %v2567, 0.0
      %v2600 = vld [vmem:[#allocation2 + $0x103] sm:$0xff]
      %v2601 = vld [vmem:[#allocation2 + $0x10b] sm:$0xff]
      %v2602 = vperm.slane %v669, 0
      %v2603 = vmul.f32 %v2505, %v2602
      %v2604 = vmul.f32 %v2506, %v2602
      %v2605 = vmul.f32 %v2507, %v2602
      %v2606 = vmul.f32 %v2508, %v2602
      %v2607 = vmul.f32 %v2509, %v2602
      %v2608 = vmul.f32 %v2510, %v2602
      %v2609 = vmul.f32 %v2511, %v2602
      %v2610 = vmul.f32 %v2512, %v2602
      %v2611 = vmul.f32 %v2513, %v2602
      %v2612 = vmul.f32 %v2514, %v2602
      %v2613 = vmul.f32 %v2515, %v2602
      %v2614 = vmul.f32 %v2516, %v2602
      %v2615 = vmul.f32 %v2517, %v2602
      %v2616 = vmul.f32 %v2518, %v2602
      %v2617 = vmul.f32 %v2519, %v2602
      %v2618 = vmul.f32 %v2520, %v2602
      %v2619 = vmul.f32 %v2521, %v2602
      %v2620 = vmul.f32 %v2522, %v2602
      %v2621 = vmul.f32 %v2523, %v2602
      %v2622 = vmul.f32 %v2524, %v2602
      %v2623 = vmul.f32 %v2525, %v2602
      %v2624 = vmul.f32 %v2526, %v2602
      %v2625 = vmul.f32 %v2527, %v2602
      %v2626 = vmul.f32 %v2528, %v2602
      %v2627 = vmul.f32 %v2529, %v2602
      %v2628 = vmul.f32 %v2530, %v2602
      %v2629 = vmul.f32 %v2531, %v2602
      %v2630 = vmul.f32 %v2532, %v2602
      %v2631 = vmul.f32 %v2533, %v2602
      %v2632 = vmul.f32 %v2534, %v2602
      %v2633 = vmul.f32 %v2600, %v2602
      %v2634 = vmul.f32 %v2601, %v2602
      %v2635 = vadd.f32 %v2568, %v2603
      %v2636 = vadd.f32 %v2569, %v2604
      %v2637 = vadd.f32 %v2570, %v2605
      %v2638 = vadd.f32 %v2571, %v2606
      %v2639 = vadd.f32 %v2572, %v2607
      %v2640 = vadd.f32 %v2573, %v2608
      %v2641 = vadd.f32 %v2574, %v2609
      %v2642 = vadd.f32 %v2575, %v2610
      %v2643 = vadd.f32 %v2576, %v2611
      %v2644 = vadd.f32 %v2577, %v2612
      %v2645 = vadd.f32 %v2578, %v2613
      %v2646 = vadd.f32 %v2579, %v2614
      %v2647 = vadd.f32 %v2580, %v2615
      %v2648 = vadd.f32 %v2581, %v2616
      %v2649 = vadd.f32 %v2582, %v2617
      %v2650 = vadd.f32 %v2583, %v2618
      %v2651 = vadd.f32 %v2584, %v2619
      %v2652 = vadd.f32 %v2585, %v2620
      %v2653 = vadd.f32 %v2586, %v2621
      %v2654 = vadd.f32 %v2587, %v2622
      %v2655 = vadd.f32 %v2588, %v2623
      %v2656 = vadd.f32 %v2589, %v2624
      %v2657 = vadd.f32 %v2590, %v2625
      %v2658 = vadd.f32 %v2591, %v2626
      %v2659 = vadd.f32 %v2592, %v2627
      %v2660 = vadd.f32 %v2593, %v2628
      %v2661 = vadd.f32 %v2594, %v2629
      %v2662 = vadd.f32 %v2595, %v2630
      %v2663 = vadd.f32 %v2596, %v2631
      %v2664 = vadd.f32 %v2597, %v2632
      %v2665 = vadd.f32 %v2598, %v2633
      %v2666 = vadd.f32 %v2599, %v2634
      %v2667 = vld [vmem:[#allocation2 + $0x113] sm:$0xff]
      %v2668 = vld [vmem:[#allocation2 + $0x11b] sm:$0xff]
      %v2669 = vperm.slane %v669, 5
      %v2670 = vmul.f32 %v2507, %v2669
      %v2671 = vmul.f32 %v2508, %v2669
      %v2672 = vmul.f32 %v2509, %v2669
      %v2673 = vmul.f32 %v2510, %v2669
      %v2674 = vmul.f32 %v2511, %v2669
      %v2675 = vmul.f32 %v2512, %v2669
      %v2676 = vmul.f32 %v2513, %v2669
      %v2677 = vmul.f32 %v2514, %v2669
      %v2678 = vmul.f32 %v2515, %v2669
      %v2679 = vmul.f32 %v2516, %v2669
      %v2680 = vmul.f32 %v2517, %v2669
      %v2681 = vmul.f32 %v2518, %v2669
      %v2682 = vmul.f32 %v2519, %v2669
      %v2683 = vmul.f32 %v2520, %v2669
      %v2684 = vmul.f32 %v2521, %v2669
      %v2685 = vmul.f32 %v2522, %v2669
      %v2686 = vmul.f32 %v2523, %v2669
      %v2687 = vmul.f32 %v2524, %v2669
      %v2688 = vmul.f32 %v2525, %v2669
      %v2689 = vmul.f32 %v2526, %v2669
      %v2690 = vmul.f32 %v2527, %v2669
      %v2691 = vmul.f32 %v2528, %v2669
      %v2692 = vmul.f32 %v2529, %v2669
      %v2693 = vmul.f32 %v2530, %v2669
      %v2694 = vmul.f32 %v2531, %v2669
      %v2695 = vmul.f32 %v2532, %v2669
      %v2696 = vmul.f32 %v2533, %v2669
      %v2697 = vmul.f32 %v2534, %v2669
      %v2698 = vmul.f32 %v2600, %v2669
      %v2699 = vmul.f32 %v2601, %v2669
      %v2700 = vmul.f32 %v2667, %v2669
      %v2701 = vmul.f32 %v2668, %v2669
      %v2702 = vadd.f32 %v2635, %v2670
      %v2703 = vadd.f32 %v2636, %v2671
      %v2704 = vadd.f32 %v2637, %v2672
      %v2705 = vadd.f32 %v2638, %v2673
      %v2706 = vadd.f32 %v2639, %v2674
      %v2707 = vadd.f32 %v2640, %v2675
      %v2708 = vadd.f32 %v2641, %v2676
      %v2709 = vadd.f32 %v2642, %v2677
      %v2710 = vadd.f32 %v2643, %v2678
      %v2711 = vadd.f32 %v2644, %v2679
      %v2712 = vadd.f32 %v2645, %v2680
      %v2713 = vadd.f32 %v2646, %v2681
      %v2714 = vadd.f32 %v2647, %v2682
      %v2715 = vadd.f32 %v2648, %v2683
      %v2716 = vadd.f32 %v2649, %v2684
      %v2717 = vadd.f32 %v2650, %v2685
      %v2718 = vadd.f32 %v2651, %v2686
      %v2719 = vadd.f32 %v2652, %v2687
      %v2720 = vadd.f32 %v2653, %v2688
      %v2721 = vadd.f32 %v2654, %v2689
      %v2722 = vadd.f32 %v2655, %v2690
      %v2723 = vadd.f32 %v2656, %v2691
      %v2724 = vadd.f32 %v2657, %v2692
      %v2725 = vadd.f32 %v2658, %v2693
      %v2726 = vadd.f32 %v2659, %v2694
      %v2727 = vadd.f32 %v2660, %v2695
      %v2728 = vadd.f32 %v2661, %v2696
      %v2729 = vadd.f32 %v2662, %v2697
      %v2730 = vadd.f32 %v2663, %v2698
      %v2731 = vadd.f32 %v2664, %v2699
      %v2732 = vadd.f32 %v2665, %v2700
      %v2733 = vadd.f32 %v2666, %v2701
      %v2734 = vld [vmem:[#allocation2 + $0x123] sm:$0xff]
      %v2735 = vld [vmem:[#allocation2 + $0x12b] sm:$0xff]
      %v2736 = vperm.slane %v670, 2
      %v2737 = vmul.f32 %v2509, %v2736
      %v2738 = vmul.f32 %v2510, %v2736
      %v2739 = vmul.f32 %v2511, %v2736
      %v2740 = vmul.f32 %v2512, %v2736
      %v2741 = vmul.f32 %v2513, %v2736
      %v2742 = vmul.f32 %v2514, %v2736
      %v2743 = vmul.f32 %v2515, %v2736
      %v2744 = vmul.f32 %v2516, %v2736
      %v2745 = vmul.f32 %v2517, %v2736
      %v2746 = vmul.f32 %v2518, %v2736
      %v2747 = vmul.f32 %v2519, %v2736
      %v2748 = vmul.f32 %v2520, %v2736
      %v2749 = vmul.f32 %v2521, %v2736
      %v2750 = vmul.f32 %v2522, %v2736
      %v2751 = vmul.f32 %v2523, %v2736
      %v2752 = vmul.f32 %v2524, %v2736
      %v2753 = vmul.f32 %v2525, %v2736
      %v2754 = vmul.f32 %v2526, %v2736
      %v2755 = vmul.f32 %v2527, %v2736
      %v2756 = vmul.f32 %v2528, %v2736
      %v2757 = vmul.f32 %v2529, %v2736
      %v2758 = vmul.f32 %v2530, %v2736
      %v2759 = vmul.f32 %v2531, %v2736
      %v2760 = vmul.f32 %v2532, %v2736
      %v2761 = vmul.f32 %v2533, %v2736
      %v2762 = vmul.f32 %v2534, %v2736
      %v2763 = vmul.f32 %v2600, %v2736
      %v2764 = vmul.f32 %v2601, %v2736
      %v2765 = vmul.f32 %v2667, %v2736
      %v2766 = vmul.f32 %v2668, %v2736
      %v2767 = vmul.f32 %v2734, %v2736
      %v2768 = vmul.f32 %v2735, %v2736
      %v2769 = vadd.f32 %v2702, %v2737
      %v2770 = vadd.f32 %v2703, %v2738
      %v2771 = vadd.f32 %v2704, %v2739
      %v2772 = vadd.f32 %v2705, %v2740
      %v2773 = vadd.f32 %v2706, %v2741
      %v2774 = vadd.f32 %v2707, %v2742
      %v2775 = vadd.f32 %v2708, %v2743
      %v2776 = vadd.f32 %v2709, %v2744
      %v2777 = vadd.f32 %v2710, %v2745
      %v2778 = vadd.f32 %v2711, %v2746
      %v2779 = vadd.f32 %v2712, %v2747
      %v2780 = vadd.f32 %v2713, %v2748
      %v2781 = vadd.f32 %v2714, %v2749
      %v2782 = vadd.f32 %v2715, %v2750
      %v2783 = vadd.f32 %v2716, %v2751
      %v2784 = vadd.f32 %v2717, %v2752
      %v2785 = vadd.f32 %v2718, %v2753
      %v2786 = vadd.f32 %v2719, %v2754
      %v2787 = vadd.f32 %v2720, %v2755
      %v2788 = vadd.f32 %v2721, %v2756
      %v2789 = vadd.f32 %v2722, %v2757
      %v2790 = vadd.f32 %v2723, %v2758
      %v2791 = vadd.f32 %v2724, %v2759
      %v2792 = vadd.f32 %v2725, %v2760
      %v2793 = vadd.f32 %v2726, %v2761
      %v2794 = vadd.f32 %v2727, %v2762
      %v2795 = vadd.f32 %v2728, %v2763
      %v2796 = vadd.f32 %v2729, %v2764
      %v2797 = vadd.f32 %v2730, %v2765
      %v2798 = vadd.f32 %v2731, %v2766
      %v2799 = vadd.f32 %v2732, %v2767
      %v2800 = vadd.f32 %v2733, %v2768
      %v2801 = vld [vmem:[#allocation2 + $0x133] sm:$0xff]
      %v2802 = vld [vmem:[#allocation2 + $0x13b] sm:$0xff]
      %v2803 = vperm.slane %v670, 7
      %v2804 = vmul.f32 %v2511, %v2803
      %v2805 = vmul.f32 %v2512, %v2803
      %v2806 = vmul.f32 %v2513, %v2803
      %v2807 = vmul.f32 %v2514, %v2803
      %v2808 = vmul.f32 %v2515, %v2803
      %v2809 = vmul.f32 %v2516, %v2803
      %v2810 = vmul.f32 %v2517, %v2803
      %v2811 = vmul.f32 %v2518, %v2803
      %v2812 = vmul.f32 %v2519, %v2803
      %v2813 = vmul.f32 %v2520, %v2803
      %v2814 = vmul.f32 %v2521, %v2803
      %v2815 = vmul.f32 %v2522, %v2803
      %v2816 = vmul.f32 %v2523, %v2803
      %v2817 = vmul.f32 %v2524, %v2803
      %v2818 = vmul.f32 %v2525, %v2803
      %v2819 = vmul.f32 %v2526, %v2803
      %v2820 = vmul.f32 %v2527, %v2803
      %v2821 = vmul.f32 %v2528, %v2803
      %v2822 = vmul.f32 %v2529, %v2803
      %v2823 = vmul.f32 %v2530, %v2803
      %v2824 = vmul.f32 %v2531, %v2803
      %v2825 = vmul.f32 %v2532, %v2803
      %v2826 = vmul.f32 %v2533, %v2803
      %v2827 = vmul.f32 %v2534, %v2803
      %v2828 = vmul.f32 %v2600, %v2803
      %v2829 = vmul.f32 %v2601, %v2803
      %v2830 = vmul.f32 %v2667, %v2803
      %v2831 = vmul.f32 %v2668, %v2803
      %v2832 = vmul.f32 %v2734, %v2803
      %v2833 = vmul.f32 %v2735, %v2803
      %v2834 = vmul.f32 %v2801, %v2803
      %v2835 = vmul.f32 %v2802, %v2803
      %v2836 = vadd.f32 %v2769, %v2804
      %v2837 = vadd.f32 %v2770, %v2805
      %v2838 = vadd.f32 %v2771, %v2806
      %v2839 = vadd.f32 %v2772, %v2807
      %v2840 = vadd.f32 %v2773, %v2808
      %v2841 = vadd.f32 %v2774, %v2809
      %v2842 = vadd.f32 %v2775, %v2810
      %v2843 = vadd.f32 %v2776, %v2811
      %v2844 = vadd.f32 %v2777, %v2812
      %v2845 = vadd.f32 %v2778, %v2813
      %v2846 = vadd.f32 %v2779, %v2814
      %v2847 = vadd.f32 %v2780, %v2815
      %v2848 = vadd.f32 %v2781, %v2816
      %v2849 = vadd.f32 %v2782, %v2817
      %v2850 = vadd.f32 %v2783, %v2818
      %v2851 = vadd.f32 %v2784, %v2819
      %v2852 = vadd.f32 %v2785, %v2820
      %v2853 = vadd.f32 %v2786, %v2821
      %v2854 = vadd.f32 %v2787, %v2822
      %v2855 = vadd.f32 %v2788, %v2823
      %v2856 = vadd.f32 %v2789, %v2824
      %v2857 = vadd.f32 %v2790, %v2825
      %v2858 = vadd.f32 %v2791, %v2826
      %v2859 = vadd.f32 %v2792, %v2827
      %v2860 = vadd.f32 %v2793, %v2828
      %v2861 = vadd.f32 %v2794, %v2829
      %v2862 = vadd.f32 %v2795, %v2830
      %v2863 = vadd.f32 %v2796, %v2831
      %v2864 = vadd.f32 %v2797, %v2832
      %v2865 = vadd.f32 %v2798, %v2833
      %v2866 = vadd.f32 %v2799, %v2834
      %v2867 = vadd.f32 %v2800, %v2835
      %v2868 = vadd.f32 %v636, 1.0
      %v2869 = vadd.f32 %v637, 1.0
      %v2870 = vadd.f32 %v638, 1.0
      %v2871 = vadd.f32 %v639, 1.0
      %v2872 = vadd.f32 %v640, 1.0
      %v2873 = vadd.f32 %v641, 1.0
      %v2874 = vadd.f32 %v642, 1.0
      %v2875 = vadd.f32 %v643, 1.0
      %v2876 = vadd.f32 %v644, 1.0
      %v2877 = vadd.f32 %v645, 1.0
      %v2878 = vadd.f32 %v646, 1.0
      %v2879 = vadd.f32 %v647, 1.0
      %v2880 = vadd.f32 %v648, 1.0
      %v2881 = vadd.f32 %v649, 1.0
      %v2882 = vadd.f32 %v650, 1.0
      %v2883 = vadd.f32 %v651, 1.0
      %v2884 = vadd.f32 %v652, 1.0
      %v2885 = vadd.f32 %v653, 1.0
      %v2886 = vadd.f32 %v654, 1.0
      %v2887 = vadd.f32 %v655, 1.0
      %v2888 = vadd.f32 %v656, 1.0
      %v2889 = vadd.f32 %v657, 1.0
      %v2890 = vadd.f32 %v658, 1.0
      %v2891 = vadd.f32 %v659, 1.0
      %v2892 = vadd.f32 %v660, 1.0
      %v2893 = vadd.f32 %v661, 1.0
      %v2894 = vadd.f32 %v662, 1.0
      %v2895 = vadd.f32 %v663, 1.0
      %v2896 = vadd.f32 %v664, 1.0
      %v2897 = vadd.f32 %v665, 1.0
      %v2898 = vadd.f32 %v666, 1.0
      %v2899 = vadd.f32 %v667, 1.0
      %vm2900 = vcmp.ge.f32.partialorder %v2868, 0.0
      %vm2901 = vcmp.ge.f32.partialorder %v2869, 0.0
      %vm2902 = vcmp.ge.f32.partialorder %v2870, 0.0
      %vm2903 = vcmp.ge.f32.partialorder %v2871, 0.0
      %vm2904 = vcmp.ge.f32.partialorder %v2872, 0.0
      %vm2905 = vcmp.ge.f32.partialorder %v2873, 0.0
      %vm2906 = vcmp.ge.f32.partialorder %v2874, 0.0
      %vm2907 = vcmp.ge.f32.partialorder %v2875, 0.0
      %vm2908 = vcmp.ge.f32.partialorder %v2876, 0.0
      %vm2909 = vcmp.ge.f32.partialorder %v2877, 0.0
      %vm2910 = vcmp.ge.f32.partialorder %v2878, 0.0
      %vm2911 = vcmp.ge.f32.partialorder %v2879, 0.0
      %vm2912 = vcmp.ge.f32.partialorder %v2880, 0.0
      %vm2913 = vcmp.ge.f32.partialorder %v2881, 0.0
      %vm2914 = vcmp.ge.f32.partialorder %v2882, 0.0
      %vm2915 = vcmp.ge.f32.partialorder %v2883, 0.0
      %vm2916 = vcmp.ge.f32.partialorder %v2884, 0.0
      %vm2917 = vcmp.ge.f32.partialorder %v2885, 0.0
      %vm2918 = vcmp.ge.f32.partialorder %v2886, 0.0
      %vm2919 = vcmp.ge.f32.partialorder %v2887, 0.0
      %vm2920 = vcmp.ge.f32.partialorder %v2888, 0.0
      %vm2921 = vcmp.ge.f32.partialorder %v2889, 0.0
      %vm2922 = vcmp.ge.f32.partialorder %v2890, 0.0
      %vm2923 = vcmp.ge.f32.partialorder %v2891, 0.0
      %vm2924 = vcmp.ge.f32.partialorder %v2892, 0.0
      %vm2925 = vcmp.ge.f32.partialorder %v2893, 0.0
      %vm2926 = vcmp.ge.f32.partialorder %v2894, 0.0
      %vm2927 = vcmp.ge.f32.partialorder %v2895, 0.0
      %vm2928 = vcmp.ge.f32.partialorder %v2896, 0.0
      %vm2929 = vcmp.ge.f32.partialorder %v2897, 0.0
      %vm2930 = vcmp.ge.f32.partialorder %v2898, 0.0
      %vm2931 = vcmp.ge.f32.partialorder %v2899, 0.0
      %vm2932 = vcmp.le.f32.partialorder %v2868, 15.0
      %vm2933 = vcmp.le.f32.partialorder %v2869, 15.0
      %vm2934 = vcmp.le.f32.partialorder %v2870, 15.0
      %vm2935 = vcmp.le.f32.partialorder %v2871, 15.0
      %vm2936 = vcmp.le.f32.partialorder %v2872, 15.0
      %vm2937 = vcmp.le.f32.partialorder %v2873, 15.0
      %vm2938 = vcmp.le.f32.partialorder %v2874, 15.0
      %vm2939 = vcmp.le.f32.partialorder %v2875, 15.0
      %vm2940 = vcmp.le.f32.partialorder %v2876, 15.0
      %vm2941 = vcmp.le.f32.partialorder %v2877, 15.0
      %vm2942 = vcmp.le.f32.partialorder %v2878, 15.0
      %vm2943 = vcmp.le.f32.partialorder %v2879, 15.0
      %vm2944 = vcmp.le.f32.partialorder %v2880, 15.0
      %vm2945 = vcmp.le.f32.partialorder %v2881, 15.0
      %vm2946 = vcmp.le.f32.partialorder %v2882, 15.0
      %vm2947 = vcmp.le.f32.partialorder %v2883, 15.0
      %vm2948 = vcmp.le.f32.partialorder %v2884, 15.0
      %vm2949 = vcmp.le.f32.partialorder %v2885, 15.0
      %vm2950 = vcmp.le.f32.partialorder %v2886, 15.0
      %vm2951 = vcmp.le.f32.partialorder %v2887, 15.0
      %vm2952 = vcmp.le.f32.partialorder %v2888, 15.0
      %vm2953 = vcmp.le.f32.partialorder %v2889, 15.0
      %vm2954 = vcmp.le.f32.partialorder %v2890, 15.0
      %vm2955 = vcmp.le.f32.partialorder %v2891, 15.0
      %vm2956 = vcmp.le.f32.partialorder %v2892, 15.0
      %vm2957 = vcmp.le.f32.partialorder %v2893, 15.0
      %vm2958 = vcmp.le.f32.partialorder %v2894, 15.0
      %vm2959 = vcmp.le.f32.partialorder %v2895, 15.0
      %vm2960 = vcmp.le.f32.partialorder %v2896, 15.0
      %vm2961 = vcmp.le.f32.partialorder %v2897, 15.0
      %vm2962 = vcmp.le.f32.partialorder %v2898, 15.0
      %vm2963 = vcmp.le.f32.partialorder %v2899, 15.0
      %vm2964 = vmand %vm2900, %vm2932
      %vm2965 = vmand %vm2901, %vm2933
      %vm2966 = vmand %vm2902, %vm2934
      %vm2967 = vmand %vm2903, %vm2935
      %vm2968 = vmand %vm2904, %vm2936
      %vm2969 = vmand %vm2905, %vm2937
      %vm2970 = vmand %vm2906, %vm2938
      %vm2971 = vmand %vm2907, %vm2939
      %vm2972 = vmand %vm2908, %vm2940
      %vm2973 = vmand %vm2909, %vm2941
      %vm2974 = vmand %vm2910, %vm2942
      %vm2975 = vmand %vm2911, %vm2943
      %vm2976 = vmand %vm2912, %vm2944
      %vm2977 = vmand %vm2913, %vm2945
      %vm2978 = vmand %vm2914, %vm2946
      %vm2979 = vmand %vm2915, %vm2947
      %vm2980 = vmand %vm2916, %vm2948
      %vm2981 = vmand %vm2917, %vm2949
      %vm2982 = vmand %vm2918, %vm2950
      %vm2983 = vmand %vm2919, %vm2951
      %vm2984 = vmand %vm2920, %vm2952
      %vm2985 = vmand %vm2921, %vm2953
      %vm2986 = vmand %vm2922, %vm2954
      %vm2987 = vmand %vm2923, %vm2955
      %vm2988 = vmand %vm2924, %vm2956
      %vm2989 = vmand %vm2925, %vm2957
      %vm2990 = vmand %vm2926, %vm2958
      %vm2991 = vmand %vm2927, %vm2959
      %vm2992 = vmand %vm2928, %vm2960
      %vm2993 = vmand %vm2929, %vm2961
      %vm2994 = vmand %vm2930, %vm2962
      %vm2995 = vmand %vm2931, %vm2963
      %v2996 = vsel %vm2964, 1, 0
      %v2997 = vsel %vm2965, 1, 0
      %v2998 = vsel %vm2966, 1, 0
      %v2999 = vsel %vm2967, 1, 0
      %v3000 = vsel %vm2968, 1, 0
      %v3001 = vsel %vm2969, 1, 0
      %v3002 = vsel %vm2970, 1, 0
      %v3003 = vsel %vm2971, 1, 0
      %v3004 = vsel %vm2972, 1, 0
      %v3005 = vsel %vm2973, 1, 0
      %v3006 = vsel %vm2974, 1, 0
      %v3007 = vsel %vm2975, 1, 0
      %v3008 = vsel %vm2976, 1, 0
      %v3009 = vsel %vm2977, 1, 0
      %v3010 = vsel %vm2978, 1, 0
      %v3011 = vsel %vm2979, 1, 0
      %v3012 = vsel %vm2980, 1, 0
      %v3013 = vsel %vm2981, 1, 0
      %v3014 = vsel %vm2982, 1, 0
      %v3015 = vsel %vm2983, 1, 0
      %v3016 = vsel %vm2984, 1, 0
      %v3017 = vsel %vm2985, 1, 0
      %v3018 = vsel %vm2986, 1, 0
      %v3019 = vsel %vm2987, 1, 0
      %v3020 = vsel %vm2988, 1, 0
      %v3021 = vsel %vm2989, 1, 0
      %v3022 = vsel %vm2990, 1, 0
      %v3023 = vsel %vm2991, 1, 0
      %v3024 = vsel %vm2992, 1, 0
      %v3025 = vsel %vm2993, 1, 0
      %v3026 = vsel %vm2994, 1, 0
      %v3027 = vsel %vm2995, 1, 0
      %3028 = vset.pattern.permute.xlu0 0
      %3029 = vperm.xlu0 %3028, %v2996
      %v3030 = vpop.permute.xlu0 %3029
      %3031 = vset.pattern.permute.xlu0 0
      %3032 = vperm.xlu0 %3031, %v2997
      %v3033 = vpop.permute.xlu0 %3032
      %3034 = vset.pattern.permute.xlu0 0
      %3035 = vperm.xlu0 %3034, %v2998
      %v3036 = vpop.permute.xlu0 %3035
      %3037 = vset.pattern.permute.xlu0 0
      %3038 = vperm.xlu0 %3037, %v2999
      %v3039 = vpop.permute.xlu0 %3038
      %3040 = vset.pattern.permute.xlu0 0
      %3041 = vperm.xlu0 %3040, %v3000
      %v3042 = vpop.permute.xlu0 %3041
      %3043 = vset.pattern.permute.xlu0 0
      %3044 = vperm.xlu0 %3043, %v3001
      %v3045 = vpop.permute.xlu0 %3044
      %3046 = vset.pattern.permute.xlu0 0
      %3047 = vperm.xlu0 %3046, %v3002
      %v3048 = vpop.permute.xlu0 %3047
      %3049 = vset.pattern.permute.xlu0 0
      %3050 = vperm.xlu0 %3049, %v3003
      %v3051 = vpop.permute.xlu0 %3050
      %3052 = vset.pattern.permute.xlu0 0
      %3053 = vperm.xlu0 %3052, %v3004
      %v3054 = vpop.permute.xlu0 %3053
      %3055 = vset.pattern.permute.xlu0 0
      %3056 = vperm.xlu0 %3055, %v3005
      %v3057 = vpop.permute.xlu0 %3056
      %3058 = vset.pattern.permute.xlu0 0
      %3059 = vperm.xlu0 %3058, %v3006
      %v3060 = vpop.permute.xlu0 %3059
      %3061 = vset.pattern.permute.xlu0 0
      %3062 = vperm.xlu0 %3061, %v3007
      %v3063 = vpop.permute.xlu0 %3062
      %3064 = vset.pattern.permute.xlu0 0
      %3065 = vperm.xlu0 %3064, %v3008
      %v3066 = vpop.permute.xlu0 %3065
      %3067 = vset.pattern.permute.xlu0 0
      %3068 = vperm.xlu0 %3067, %v3009
      %v3069 = vpop.permute.xlu0 %3068
      %3070 = vset.pattern.permute.xlu0 0
      %3071 = vperm.xlu0 %3070, %v3010
      %v3072 = vpop.permute.xlu0 %3071
      %3073 = vset.pattern.permute.xlu0 0
      %3074 = vperm.xlu0 %3073, %v3011
      %v3075 = vpop.permute.xlu0 %3074
      %3076 = vset.pattern.permute.xlu0 0
      %3077 = vperm.xlu0 %3076, %v3012
      %v3078 = vpop.permute.xlu0 %3077
      %3079 = vset.pattern.permute.xlu0 0
      %3080 = vperm.xlu0 %3079, %v3013
      %v3081 = vpop.permute.xlu0 %3080
      %3082 = vset.pattern.permute.xlu0 0
      %3083 = vperm.xlu0 %3082, %v3014
      %v3084 = vpop.permute.xlu0 %3083
      %3085 = vset.pattern.permute.xlu0 0
      %3086 = vperm.xlu0 %3085, %v3015
      %v3087 = vpop.permute.xlu0 %3086
      %3088 = vset.pattern.permute.xlu0 0
      %3089 = vperm.xlu0 %3088, %v3016
      %v3090 = vpop.permute.xlu0 %3089
      %3091 = vset.pattern.permute.xlu0 0
      %3092 = vperm.xlu0 %3091, %v3017
      %v3093 = vpop.permute.xlu0 %3092
      %3094 = vset.pattern.permute.xlu0 0
      %3095 = vperm.xlu0 %3094, %v3018
      %v3096 = vpop.permute.xlu0 %3095
      %3097 = vset.pattern.permute.xlu0 0
      %3098 = vperm.xlu0 %3097, %v3019
      %v3099 = vpop.permute.xlu0 %3098
      %3100 = vset.pattern.permute.xlu0 0
      %3101 = vperm.xlu0 %3100, %v3020
      %v3102 = vpop.permute.xlu0 %3101
      %3103 = vset.pattern.permute.xlu0 0
      %3104 = vperm.xlu0 %3103, %v3021
      %v3105 = vpop.permute.xlu0 %3104
      %3106 = vset.pattern.permute.xlu0 0
      %3107 = vperm.xlu0 %3106, %v3022
      %v3108 = vpop.permute.xlu0 %3107
      %3109 = vset.pattern.permute.xlu0 0
      %3110 = vperm.xlu0 %3109, %v3023
      %v3111 = vpop.permute.xlu0 %3110
      %3112 = vset.pattern.permute.xlu0 0
      %3113 = vperm.xlu0 %3112, %v3024
      %v3114 = vpop.permute.xlu0 %3113
      %3115 = vset.pattern.permute.xlu0 0
      %3116 = vperm.xlu0 %3115, %v3025
      %v3117 = vpop.permute.xlu0 %3116
      %3118 = vset.pattern.permute.xlu0 0
      %3119 = vperm.xlu0 %3118, %v3026
      %v3120 = vpop.permute.xlu0 %3119
      %3121 = vset.pattern.permute.xlu0 0
      %3122 = vperm.xlu0 %3121, %v3027
      %v3123 = vpop.permute.xlu0 %3122
      %vm3124 = vcmp.eq.s32.totalorder %v3030, 1
      %vm3125 = vcmp.eq.s32.totalorder %v3033, 1
      %vm3126 = vcmp.eq.s32.totalorder %v3036, 1
      %vm3127 = vcmp.eq.s32.totalorder %v3039, 1
      %vm3128 = vcmp.eq.s32.totalorder %v3042, 1
      %vm3129 = vcmp.eq.s32.totalorder %v3045, 1
      %vm3130 = vcmp.eq.s32.totalorder %v3048, 1
      %vm3131 = vcmp.eq.s32.totalorder %v3051, 1
      %vm3132 = vcmp.eq.s32.totalorder %v3054, 1
      %vm3133 = vcmp.eq.s32.totalorder %v3057, 1
      %vm3134 = vcmp.eq.s32.totalorder %v3060, 1
      %vm3135 = vcmp.eq.s32.totalorder %v3063, 1
      %vm3136 = vcmp.eq.s32.totalorder %v3066, 1
      %vm3137 = vcmp.eq.s32.totalorder %v3069, 1
      %vm3138 = vcmp.eq.s32.totalorder %v3072, 1
      %vm3139 = vcmp.eq.s32.totalorder %v3075, 1
      %vm3140 = vcmp.eq.s32.totalorder %v3078, 1
      %vm3141 = vcmp.eq.s32.totalorder %v3081, 1
      %vm3142 = vcmp.eq.s32.totalorder %v3084, 1
      %vm3143 = vcmp.eq.s32.totalorder %v3087, 1
      %vm3144 = vcmp.eq.s32.totalorder %v3090, 1
      %vm3145 = vcmp.eq.s32.totalorder %v3093, 1
      %vm3146 = vcmp.eq.s32.totalorder %v3096, 1
      %vm3147 = vcmp.eq.s32.totalorder %v3099, 1
      %vm3148 = vcmp.eq.s32.totalorder %v3102, 1
      %vm3149 = vcmp.eq.s32.totalorder %v3105, 1
      %vm3150 = vcmp.eq.s32.totalorder %v3108, 1
      %vm3151 = vcmp.eq.s32.totalorder %v3111, 1
      %vm3152 = vcmp.eq.s32.totalorder %v3114, 1
      %vm3153 = vcmp.eq.s32.totalorder %v3117, 1
      %vm3154 = vcmp.eq.s32.totalorder %v3120, 1
      %vm3155 = vcmp.eq.s32.totalorder %v3123, 1
      %v3156 = vsel %vm3124, %v2836, 0.0
      %v3157 = vsel %vm3125, %v2837, 0.0
      %v3158 = vsel %vm3126, %v2838, 0.0
      %v3159 = vsel %vm3127, %v2839, 0.0
      %v3160 = vsel %vm3128, %v2840, 0.0
      %v3161 = vsel %vm3129, %v2841, 0.0
      %v3162 = vsel %vm3130, %v2842, 0.0
      %v3163 = vsel %vm3131, %v2843, 0.0
      %v3164 = vsel %vm3132, %v2844, 0.0
      %v3165 = vsel %vm3133, %v2845, 0.0
      %v3166 = vsel %vm3134, %v2846, 0.0
      %v3167 = vsel %vm3135, %v2847, 0.0
      %v3168 = vsel %vm3136, %v2848, 0.0
      %v3169 = vsel %vm3137, %v2849, 0.0
      %v3170 = vsel %vm3138, %v2850, 0.0
      %v3171 = vsel %vm3139, %v2851, 0.0
      %v3172 = vsel %vm3140, %v2852, 0.0
      %v3173 = vsel %vm3141, %v2853, 0.0
      %v3174 = vsel %vm3142, %v2854, 0.0
      %v3175 = vsel %vm3143, %v2855, 0.0
      %v3176 = vsel %vm3144, %v2856, 0.0
      %v3177 = vsel %vm3145, %v2857, 0.0
      %v3178 = vsel %vm3146, %v2858, 0.0
      %v3179 = vsel %vm3147, %v2859, 0.0
      %v3180 = vsel %vm3148, %v2860, 0.0
      %v3181 = vsel %vm3149, %v2861, 0.0
      %v3182 = vsel %vm3150, %v2862, 0.0
      %v3183 = vsel %vm3151, %v2863, 0.0
      %v3184 = vsel %vm3152, %v2864, 0.0
      %v3185 = vsel %vm3153, %v2865, 0.0
      %v3186 = vsel %vm3154, %v2866, 0.0
      %v3187 = vsel %vm3155, %v2867, 0.0
      %v3188 = vadd.f32 %v2471, %v3156
      %v3189 = vadd.f32 %v2472, %v3157
      %v3190 = vadd.f32 %v2473, %v3158
      %v3191 = vadd.f32 %v2474, %v3159
      %v3192 = vadd.f32 %v2475, %v3160
      %v3193 = vadd.f32 %v2476, %v3161
      %v3194 = vadd.f32 %v2477, %v3162
      %v3195 = vadd.f32 %v2478, %v3163
      %v3196 = vadd.f32 %v2479, %v3164
      %v3197 = vadd.f32 %v2480, %v3165
      %v3198 = vadd.f32 %v2481, %v3166
      %v3199 = vadd.f32 %v2482, %v3167
      %v3200 = vadd.f32 %v2483, %v3168
      %v3201 = vadd.f32 %v2484, %v3169
      %v3202 = vadd.f32 %v2485, %v3170
      %v3203 = vadd.f32 %v2486, %v3171
      %v3204 = vadd.f32 %v2487, %v3172
      %v3205 = vadd.f32 %v2488, %v3173
      %v3206 = vadd.f32 %v2489, %v3174
      %v3207 = vadd.f32 %v2490, %v3175
      %v3208 = vadd.f32 %v2491, %v3176
      %v3209 = vadd.f32 %v2492, %v3177
      %v3210 = vadd.f32 %v2493, %v3178
      %v3211 = vadd.f32 %v2494, %v3179
      %v3212 = vadd.f32 %v2495, %v3180
      %v3213 = vadd.f32 %v2496, %v3181
      %v3214 = vadd.f32 %v2497, %v3182
      %v3215 = vadd.f32 %v2498, %v3183
      %v3216 = vadd.f32 %v2499, %v3184
      %v3217 = vadd.f32 %v2500, %v3185
      %v3218 = vadd.f32 %v2501, %v3186
      %v3219 = vadd.f32 %v2502, %v3187
      %v3220 = vld [vmem:[#allocation2 + $0x4] sm:$0xff]
      %v3221 = vld [vmem:[#allocation2 + $0xc] sm:$0xff]
      %v3222 = vld [vmem:[#allocation2 + $0x14] sm:$0xff]
      %v3223 = vld [vmem:[#allocation2 + $0x1c] sm:$0xff]
      %v3224 = vld [vmem:[#allocation2 + $0x24] sm:$0xff]
      %v3225 = vld [vmem:[#allocation2 + $0x2c] sm:$0xff]
      %v3226 = vld [vmem:[#allocation2 + $0x34] sm:$0xff]
      %v3227 = vld [vmem:[#allocation2 + $0x3c] sm:$0xff]
      %v3228 = vld [vmem:[#allocation2 + $0x44] sm:$0xff]
      %v3229 = vld [vmem:[#allocation2 + $0x4c] sm:$0xff]
      %v3230 = vld [vmem:[#allocation2 + $0x54] sm:$0xff]
      %v3231 = vld [vmem:[#allocation2 + $0x5c] sm:$0xff]
      %v3232 = vld [vmem:[#allocation2 + $0x64] sm:$0xff]
      %v3233 = vld [vmem:[#allocation2 + $0x6c] sm:$0xff]
      %v3234 = vld [vmem:[#allocation2 + $0x74] sm:$0xff]
      %v3235 = vld [vmem:[#allocation2 + $0x7c] sm:$0xff]
      %v3236 = vld [vmem:[#allocation2 + $0x84] sm:$0xff]
      %v3237 = vld [vmem:[#allocation2 + $0x8c] sm:$0xff]
      %v3238 = vld [vmem:[#allocation2 + $0x94] sm:$0xff]
      %v3239 = vld [vmem:[#allocation2 + $0x9c] sm:$0xff]
      %v3240 = vld [vmem:[#allocation2 + $0xa4] sm:$0xff]
      %v3241 = vld [vmem:[#allocation2 + $0xac] sm:$0xff]
      %v3242 = vld [vmem:[#allocation2 + $0xb4] sm:$0xff]
      %v3243 = vld [vmem:[#allocation2 + $0xbc] sm:$0xff]
      %v3244 = vld [vmem:[#allocation2 + $0xc4] sm:$0xff]
      %v3245 = vld [vmem:[#allocation2 + $0xcc] sm:$0xff]
      %v3246 = vld [vmem:[#allocation2 + $0xd4] sm:$0xff]
      %v3247 = vld [vmem:[#allocation2 + $0xdc] sm:$0xff]
      %v3248 = vld [vmem:[#allocation2 + $0xe4] sm:$0xff]
      %v3249 = vld [vmem:[#allocation2 + $0xec] sm:$0xff]
      %v3250 = vld [vmem:[#allocation2 + $0xf4] sm:$0xff]
      %v3251 = vld [vmem:[#allocation2 + $0xfc] sm:$0xff]
      %v3252 = vperm.slane %v668, 4
      %v3253 = vmul.f32 %v3220, %v3252
      %v3254 = vmul.f32 %v3221, %v3252
      %v3255 = vmul.f32 %v3222, %v3252
      %v3256 = vmul.f32 %v3223, %v3252
      %v3257 = vmul.f32 %v3224, %v3252
      %v3258 = vmul.f32 %v3225, %v3252
      %v3259 = vmul.f32 %v3226, %v3252
      %v3260 = vmul.f32 %v3227, %v3252
      %v3261 = vmul.f32 %v3228, %v3252
      %v3262 = vmul.f32 %v3229, %v3252
      %v3263 = vmul.f32 %v3230, %v3252
      %v3264 = vmul.f32 %v3231, %v3252
      %v3265 = vmul.f32 %v3232, %v3252
      %v3266 = vmul.f32 %v3233, %v3252
      %v3267 = vmul.f32 %v3234, %v3252
      %v3268 = vmul.f32 %v3235, %v3252
      %v3269 = vmul.f32 %v3236, %v3252
      %v3270 = vmul.f32 %v3237, %v3252
      %v3271 = vmul.f32 %v3238, %v3252
      %v3272 = vmul.f32 %v3239, %v3252
      %v3273 = vmul.f32 %v3240, %v3252
      %v3274 = vmul.f32 %v3241, %v3252
      %v3275 = vmul.f32 %v3242, %v3252
      %v3276 = vmul.f32 %v3243, %v3252
      %v3277 = vmul.f32 %v3244, %v3252
      %v3278 = vmul.f32 %v3245, %v3252
      %v3279 = vmul.f32 %v3246, %v3252
      %v3280 = vmul.f32 %v3247, %v3252
      %v3281 = vmul.f32 %v3248, %v3252
      %v3282 = vmul.f32 %v3249, %v3252
      %v3283 = vmul.f32 %v3250, %v3252
      %v3284 = vmul.f32 %v3251, %v3252
      %v3285 = vadd.f32 %v3253, 0.0
      %v3286 = vadd.f32 %v3254, 0.0
      %v3287 = vadd.f32 %v3255, 0.0
      %v3288 = vadd.f32 %v3256, 0.0
      %v3289 = vadd.f32 %v3257, 0.0
      %v3290 = vadd.f32 %v3258, 0.0
      %v3291 = vadd.f32 %v3259, 0.0
      %v3292 = vadd.f32 %v3260, 0.0
      %v3293 = vadd.f32 %v3261, 0.0
      %v3294 = vadd.f32 %v3262, 0.0
      %v3295 = vadd.f32 %v3263, 0.0
      %v3296 = vadd.f32 %v3264, 0.0
      %v3297 = vadd.f32 %v3265, 0.0
      %v3298 = vadd.f32 %v3266, 0.0
      %v3299 = vadd.f32 %v3267, 0.0
      %v3300 = vadd.f32 %v3268, 0.0
      %v3301 = vadd.f32 %v3269, 0.0
      %v3302 = vadd.f32 %v3270, 0.0
      %v3303 = vadd.f32 %v3271, 0.0
      %v3304 = vadd.f32 %v3272, 0.0
      %v3305 = vadd.f32 %v3273, 0.0
      %v3306 = vadd.f32 %v3274, 0.0
      %v3307 = vadd.f32 %v3275, 0.0
      %v3308 = vadd.f32 %v3276, 0.0
      %v3309 = vadd.f32 %v3277, 0.0
      %v3310 = vadd.f32 %v3278, 0.0
      %v3311 = vadd.f32 %v3279, 0.0
      %v3312 = vadd.f32 %v3280, 0.0
      %v3313 = vadd.f32 %v3281, 0.0
      %v3314 = vadd.f32 %v3282, 0.0
      %v3315 = vadd.f32 %v3283, 0.0
      %v3316 = vadd.f32 %v3284, 0.0
      %v3317 = vld [vmem:[#allocation2 + $0x104] sm:$0xff]
      %v3318 = vld [vmem:[#allocation2 + $0x10c] sm:$0xff]
      %v3319 = vperm.slane %v669, 1
      %v3320 = vmul.f32 %v3222, %v3319
      %v3321 = vmul.f32 %v3223, %v3319
      %v3322 = vmul.f32 %v3224, %v3319
      %v3323 = vmul.f32 %v3225, %v3319
      %v3324 = vmul.f32 %v3226, %v3319
      %v3325 = vmul.f32 %v3227, %v3319
      %v3326 = vmul.f32 %v3228, %v3319
      %v3327 = vmul.f32 %v3229, %v3319
      %v3328 = vmul.f32 %v3230, %v3319
      %v3329 = vmul.f32 %v3231, %v3319
      %v3330 = vmul.f32 %v3232, %v3319
      %v3331 = vmul.f32 %v3233, %v3319
      %v3332 = vmul.f32 %v3234, %v3319
      %v3333 = vmul.f32 %v3235, %v3319
      %v3334 = vmul.f32 %v3236, %v3319
      %v3335 = vmul.f32 %v3237, %v3319
      %v3336 = vmul.f32 %v3238, %v3319
      %v3337 = vmul.f32 %v3239, %v3319
      %v3338 = vmul.f32 %v3240, %v3319
      %v3339 = vmul.f32 %v3241, %v3319
      %v3340 = vmul.f32 %v3242, %v3319
      %v3341 = vmul.f32 %v3243, %v3319
      %v3342 = vmul.f32 %v3244, %v3319
      %v3343 = vmul.f32 %v3245, %v3319
      %v3344 = vmul.f32 %v3246, %v3319
      %v3345 = vmul.f32 %v3247, %v3319
      %v3346 = vmul.f32 %v3248, %v3319
      %v3347 = vmul.f32 %v3249, %v3319
      %v3348 = vmul.f32 %v3250, %v3319
      %v3349 = vmul.f32 %v3251, %v3319
      %v3350 = vmul.f32 %v3317, %v3319
      %v3351 = vmul.f32 %v3318, %v3319
      %v3352 = vadd.f32 %v3285, %v3320
      %v3353 = vadd.f32 %v3286, %v3321
      %v3354 = vadd.f32 %v3287, %v3322
      %v3355 = vadd.f32 %v3288, %v3323
      %v3356 = vadd.f32 %v3289, %v3324
      %v3357 = vadd.f32 %v3290, %v3325
      %v3358 = vadd.f32 %v3291, %v3326
      %v3359 = vadd.f32 %v3292, %v3327
      %v3360 = vadd.f32 %v3293, %v3328
      %v3361 = vadd.f32 %v3294, %v3329
      %v3362 = vadd.f32 %v3295, %v3330
      %v3363 = vadd.f32 %v3296, %v3331
      %v3364 = vadd.f32 %v3297, %v3332
      %v3365 = vadd.f32 %v3298, %v3333
      %v3366 = vadd.f32 %v3299, %v3334
      %v3367 = vadd.f32 %v3300, %v3335
      %v3368 = vadd.f32 %v3301, %v3336
      %v3369 = vadd.f32 %v3302, %v3337
      %v3370 = vadd.f32 %v3303, %v3338
      %v3371 = vadd.f32 %v3304, %v3339
      %v3372 = vadd.f32 %v3305, %v3340
      %v3373 = vadd.f32 %v3306, %v3341
      %v3374 = vadd.f32 %v3307, %v3342
      %v3375 = vadd.f32 %v3308, %v3343
      %v3376 = vadd.f32 %v3309, %v3344
      %v3377 = vadd.f32 %v3310, %v3345
      %v3378 = vadd.f32 %v3311, %v3346
      %v3379 = vadd.f32 %v3312, %v3347
      %v3380 = vadd.f32 %v3313, %v3348
      %v3381 = vadd.f32 %v3314, %v3349
      %v3382 = vadd.f32 %v3315, %v3350
      %v3383 = vadd.f32 %v3316, %v3351
      %v3384 = vld [vmem:[#allocation2 + $0x114] sm:$0xff]
      %v3385 = vld [vmem:[#allocation2 + $0x11c] sm:$0xff]
      %v3386 = vperm.slane %v669, 6
      %v3387 = vmul.f32 %v3224, %v3386
      %v3388 = vmul.f32 %v3225, %v3386
      %v3389 = vmul.f32 %v3226, %v3386
      %v3390 = vmul.f32 %v3227, %v3386
      %v3391 = vmul.f32 %v3228, %v3386
      %v3392 = vmul.f32 %v3229, %v3386
      %v3393 = vmul.f32 %v3230, %v3386
      %v3394 = vmul.f32 %v3231, %v3386
      %v3395 = vmul.f32 %v3232, %v3386
      %v3396 = vmul.f32 %v3233, %v3386
      %v3397 = vmul.f32 %v3234, %v3386
      %v3398 = vmul.f32 %v3235, %v3386
      %v3399 = vmul.f32 %v3236, %v3386
      %v3400 = vmul.f32 %v3237, %v3386
      %v3401 = vmul.f32 %v3238, %v3386
      %v3402 = vmul.f32 %v3239, %v3386
      %v3403 = vmul.f32 %v3240, %v3386
      %v3404 = vmul.f32 %v3241, %v3386
      %v3405 = vmul.f32 %v3242, %v3386
      %v3406 = vmul.f32 %v3243, %v3386
      %v3407 = vmul.f32 %v3244, %v3386
      %v3408 = vmul.f32 %v3245, %v3386
      %v3409 = vmul.f32 %v3246, %v3386
      %v3410 = vmul.f32 %v3247, %v3386
      %v3411 = vmul.f32 %v3248, %v3386
      %v3412 = vmul.f32 %v3249, %v3386
      %v3413 = vmul.f32 %v3250, %v3386
      %v3414 = vmul.f32 %v3251, %v3386
      %v3415 = vmul.f32 %v3317, %v3386
      %v3416 = vmul.f32 %v3318, %v3386
      %v3417 = vmul.f32 %v3384, %v3386
      %v3418 = vmul.f32 %v3385, %v3386
      %v3419 = vadd.f32 %v3352, %v3387
      %v3420 = vadd.f32 %v3353, %v3388
      %v3421 = vadd.f32 %v3354, %v3389
      %v3422 = vadd.f32 %v3355, %v3390
      %v3423 = vadd.f32 %v3356, %v3391
      %v3424 = vadd.f32 %v3357, %v3392
      %v3425 = vadd.f32 %v3358, %v3393
      %v3426 = vadd.f32 %v3359, %v3394
      %v3427 = vadd.f32 %v3360, %v3395
      %v3428 = vadd.f32 %v3361, %v3396
      %v3429 = vadd.f32 %v3362, %v3397
      %v3430 = vadd.f32 %v3363, %v3398
      %v3431 = vadd.f32 %v3364, %v3399
      %v3432 = vadd.f32 %v3365, %v3400
      %v3433 = vadd.f32 %v3366, %v3401
      %v3434 = vadd.f32 %v3367, %v3402
      %v3435 = vadd.f32 %v3368, %v3403
      %v3436 = vadd.f32 %v3369, %v3404
      %v3437 = vadd.f32 %v3370, %v3405
      %v3438 = vadd.f32 %v3371, %v3406
      %v3439 = vadd.f32 %v3372, %v3407
      %v3440 = vadd.f32 %v3373, %v3408
      %v3441 = vadd.f32 %v3374, %v3409
      %v3442 = vadd.f32 %v3375, %v3410
      %v3443 = vadd.f32 %v3376, %v3411
      %v3444 = vadd.f32 %v3377, %v3412
      %v3445 = vadd.f32 %v3378, %v3413
      %v3446 = vadd.f32 %v3379, %v3414
      %v3447 = vadd.f32 %v3380, %v3415
      %v3448 = vadd.f32 %v3381, %v3416
      %v3449 = vadd.f32 %v3382, %v3417
      %v3450 = vadd.f32 %v3383, %v3418
      %v3451 = vld [vmem:[#allocation2 + $0x124] sm:$0xff]
      %v3452 = vld [vmem:[#allocation2 + $0x12c] sm:$0xff]
      %v3453 = vperm.slane %v670, 3
      %v3454 = vmul.f32 %v3226, %v3453
      %v3455 = vmul.f32 %v3227, %v3453
      %v3456 = vmul.f32 %v3228, %v3453
      %v3457 = vmul.f32 %v3229, %v3453
      %v3458 = vmul.f32 %v3230, %v3453
      %v3459 = vmul.f32 %v3231, %v3453
      %v3460 = vmul.f32 %v3232, %v3453
      %v3461 = vmul.f32 %v3233, %v3453
      %v3462 = vmul.f32 %v3234, %v3453
      %v3463 = vmul.f32 %v3235, %v3453
      %v3464 = vmul.f32 %v3236, %v3453
      %v3465 = vmul.f32 %v3237, %v3453
      %v3466 = vmul.f32 %v3238, %v3453
      %v3467 = vmul.f32 %v3239, %v3453
      %v3468 = vmul.f32 %v3240, %v3453
      %v3469 = vmul.f32 %v3241, %v3453
      %v3470 = vmul.f32 %v3242, %v3453
      %v3471 = vmul.f32 %v3243, %v3453
      %v3472 = vmul.f32 %v3244, %v3453
      %v3473 = vmul.f32 %v3245, %v3453
      %v3474 = vmul.f32 %v3246, %v3453
      %v3475 = vmul.f32 %v3247, %v3453
      %v3476 = vmul.f32 %v3248, %v3453
      %v3477 = vmul.f32 %v3249, %v3453
      %v3478 = vmul.f32 %v3250, %v3453
      %v3479 = vmul.f32 %v3251, %v3453
      %v3480 = vmul.f32 %v3317, %v3453
      %v3481 = vmul.f32 %v3318, %v3453
      %v3482 = vmul.f32 %v3384, %v3453
      %v3483 = vmul.f32 %v3385, %v3453
      %v3484 = vmul.f32 %v3451, %v3453
      %v3485 = vmul.f32 %v3452, %v3453
      %v3486 = vadd.f32 %v3419, %v3454
      %v3487 = vadd.f32 %v3420, %v3455
      %v3488 = vadd.f32 %v3421, %v3456
      %v3489 = vadd.f32 %v3422, %v3457
      %v3490 = vadd.f32 %v3423, %v3458
      %v3491 = vadd.f32 %v3424, %v3459
      %v3492 = vadd.f32 %v3425, %v3460
      %v3493 = vadd.f32 %v3426, %v3461
      %v3494 = vadd.f32 %v3427, %v3462
      %v3495 = vadd.f32 %v3428, %v3463
      %v3496 = vadd.f32 %v3429, %v3464
      %v3497 = vadd.f32 %v3430, %v3465
      %v3498 = vadd.f32 %v3431, %v3466
      %v3499 = vadd.f32 %v3432, %v3467
      %v3500 = vadd.f32 %v3433, %v3468
      %v3501 = vadd.f32 %v3434, %v3469
      %v3502 = vadd.f32 %v3435, %v3470
      %v3503 = vadd.f32 %v3436, %v3471
      %v3504 = vadd.f32 %v3437, %v3472
      %v3505 = vadd.f32 %v3438, %v3473
      %v3506 = vadd.f32 %v3439, %v3474
      %v3507 = vadd.f32 %v3440, %v3475
      %v3508 = vadd.f32 %v3441, %v3476
      %v3509 = vadd.f32 %v3442, %v3477
      %v3510 = vadd.f32 %v3443, %v3478
      %v3511 = vadd.f32 %v3444, %v3479
      %v3512 = vadd.f32 %v3445, %v3480
      %v3513 = vadd.f32 %v3446, %v3481
      %v3514 = vadd.f32 %v3447, %v3482
      %v3515 = vadd.f32 %v3448, %v3483
      %v3516 = vadd.f32 %v3449, %v3484
      %v3517 = vadd.f32 %v3450, %v3485
      %v3518 = vld [vmem:[#allocation2 + $0x134] sm:$0xff]
      %v3519 = vld [vmem:[#allocation2 + $0x13c] sm:$0xff]
      %v3520 = vperm.slane %v671, 0
      %v3521 = vmul.f32 %v3228, %v3520
      %v3522 = vmul.f32 %v3229, %v3520
      %v3523 = vmul.f32 %v3230, %v3520
      %v3524 = vmul.f32 %v3231, %v3520
      %v3525 = vmul.f32 %v3232, %v3520
      %v3526 = vmul.f32 %v3233, %v3520
      %v3527 = vmul.f32 %v3234, %v3520
      %v3528 = vmul.f32 %v3235, %v3520
      %v3529 = vmul.f32 %v3236, %v3520
      %v3530 = vmul.f32 %v3237, %v3520
      %v3531 = vmul.f32 %v3238, %v3520
      %v3532 = vmul.f32 %v3239, %v3520
      %v3533 = vmul.f32 %v3240, %v3520
      %v3534 = vmul.f32 %v3241, %v3520
      %v3535 = vmul.f32 %v3242, %v3520
      %v3536 = vmul.f32 %v3243, %v3520
      %v3537 = vmul.f32 %v3244, %v3520
      %v3538 = vmul.f32 %v3245, %v3520
      %v3539 = vmul.f32 %v3246, %v3520
      %v3540 = vmul.f32 %v3247, %v3520
      %v3541 = vmul.f32 %v3248, %v3520
      %v3542 = vmul.f32 %v3249, %v3520
      %v3543 = vmul.f32 %v3250, %v3520
      %v3544 = vmul.f32 %v3251, %v3520
      %v3545 = vmul.f32 %v3317, %v3520
      %v3546 = vmul.f32 %v3318, %v3520
      %v3547 = vmul.f32 %v3384, %v3520
      %v3548 = vmul.f32 %v3385, %v3520
      %v3549 = vmul.f32 %v3451, %v3520
      %v3550 = vmul.f32 %v3452, %v3520
      %v3551 = vmul.f32 %v3518, %v3520
      %v3552 = vmul.f32 %v3519, %v3520
      %v3553 = vadd.f32 %v3486, %v3521
      %v3554 = vadd.f32 %v3487, %v3522
      %v3555 = vadd.f32 %v3488, %v3523
      %v3556 = vadd.f32 %v3489, %v3524
      %v3557 = vadd.f32 %v3490, %v3525
      %v3558 = vadd.f32 %v3491, %v3526
      %v3559 = vadd.f32 %v3492, %v3527
      %v3560 = vadd.f32 %v3493, %v3528
      %v3561 = vadd.f32 %v3494, %v3529
      %v3562 = vadd.f32 %v3495, %v3530
      %v3563 = vadd.f32 %v3496, %v3531
      %v3564 = vadd.f32 %v3497, %v3532
      %v3565 = vadd.f32 %v3498, %v3533
      %v3566 = vadd.f32 %v3499, %v3534
      %v3567 = vadd.f32 %v3500, %v3535
      %v3568 = vadd.f32 %v3501, %v3536
      %v3569 = vadd.f32 %v3502, %v3537
      %v3570 = vadd.f32 %v3503, %v3538
      %v3571 = vadd.f32 %v3504, %v3539
      %v3572 = vadd.f32 %v3505, %v3540
      %v3573 = vadd.f32 %v3506, %v3541
      %v3574 = vadd.f32 %v3507, %v3542
      %v3575 = vadd.f32 %v3508, %v3543
      %v3576 = vadd.f32 %v3509, %v3544
      %v3577 = vadd.f32 %v3510, %v3545
      %v3578 = vadd.f32 %v3511, %v3546
      %v3579 = vadd.f32 %v3512, %v3547
      %v3580 = vadd.f32 %v3513, %v3548
      %v3581 = vadd.f32 %v3514, %v3549
      %v3582 = vadd.f32 %v3515, %v3550
      %v3583 = vadd.f32 %v3516, %v3551
      %v3584 = vadd.f32 %v3517, %v3552
      %v3585 = vadd.f32 %v636, 2.0
      %v3586 = vadd.f32 %v637, 2.0
      %v3587 = vadd.f32 %v638, 2.0
      %v3588 = vadd.f32 %v639, 2.0
      %v3589 = vadd.f32 %v640, 2.0
      %v3590 = vadd.f32 %v641, 2.0
      %v3591 = vadd.f32 %v642, 2.0
      %v3592 = vadd.f32 %v643, 2.0
      %v3593 = vadd.f32 %v644, 2.0
      %v3594 = vadd.f32 %v645, 2.0
      %v3595 = vadd.f32 %v646, 2.0
      %v3596 = vadd.f32 %v647, 2.0
      %v3597 = vadd.f32 %v648, 2.0
      %v3598 = vadd.f32 %v649, 2.0
      %v3599 = vadd.f32 %v650, 2.0
      %v3600 = vadd.f32 %v651, 2.0
      %v3601 = vadd.f32 %v652, 2.0
      %v3602 = vadd.f32 %v653, 2.0
      %v3603 = vadd.f32 %v654, 2.0
      %v3604 = vadd.f32 %v655, 2.0
      %v3605 = vadd.f32 %v656, 2.0
      %v3606 = vadd.f32 %v657, 2.0
      %v3607 = vadd.f32 %v658, 2.0
      %v3608 = vadd.f32 %v659, 2.0
      %v3609 = vadd.f32 %v660, 2.0
      %v3610 = vadd.f32 %v661, 2.0
      %v3611 = vadd.f32 %v662, 2.0
      %v3612 = vadd.f32 %v663, 2.0
      %v3613 = vadd.f32 %v664, 2.0
      %v3614 = vadd.f32 %v665, 2.0
      %v3615 = vadd.f32 %v666, 2.0
      %v3616 = vadd.f32 %v667, 2.0
      %vm3617 = vcmp.ge.f32.partialorder %v3585, 0.0
      %vm3618 = vcmp.ge.f32.partialorder %v3586, 0.0
      %vm3619 = vcmp.ge.f32.partialorder %v3587, 0.0
      %vm3620 = vcmp.ge.f32.partialorder %v3588, 0.0
      %vm3621 = vcmp.ge.f32.partialorder %v3589, 0.0
      %vm3622 = vcmp.ge.f32.partialorder %v3590, 0.0
      %vm3623 = vcmp.ge.f32.partialorder %v3591, 0.0
      %vm3624 = vcmp.ge.f32.partialorder %v3592, 0.0
      %vm3625 = vcmp.ge.f32.partialorder %v3593, 0.0
      %vm3626 = vcmp.ge.f32.partialorder %v3594, 0.0
      %vm3627 = vcmp.ge.f32.partialorder %v3595, 0.0
      %vm3628 = vcmp.ge.f32.partialorder %v3596, 0.0
      %vm3629 = vcmp.ge.f32.partialorder %v3597, 0.0
      %vm3630 = vcmp.ge.f32.partialorder %v3598, 0.0
      %vm3631 = vcmp.ge.f32.partialorder %v3599, 0.0
      %vm3632 = vcmp.ge.f32.partialorder %v3600, 0.0
      %vm3633 = vcmp.ge.f32.partialorder %v3601, 0.0
      %vm3634 = vcmp.ge.f32.partialorder %v3602, 0.0
      %vm3635 = vcmp.ge.f32.partialorder %v3603, 0.0
      %vm3636 = vcmp.ge.f32.partialorder %v3604, 0.0
      %vm3637 = vcmp.ge.f32.partialorder %v3605, 0.0
      %vm3638 = vcmp.ge.f32.partialorder %v3606, 0.0
      %vm3639 = vcmp.ge.f32.partialorder %v3607, 0.0
      %vm3640 = vcmp.ge.f32.partialorder %v3608, 0.0
      %vm3641 = vcmp.ge.f32.partialorder %v3609, 0.0
      %vm3642 = vcmp.ge.f32.partialorder %v3610, 0.0
      %vm3643 = vcmp.ge.f32.partialorder %v3611, 0.0
      %vm3644 = vcmp.ge.f32.partialorder %v3612, 0.0
      %vm3645 = vcmp.ge.f32.partialorder %v3613, 0.0
      %vm3646 = vcmp.ge.f32.partialorder %v3614, 0.0
      %vm3647 = vcmp.ge.f32.partialorder %v3615, 0.0
      %vm3648 = vcmp.ge.f32.partialorder %v3616, 0.0
      %vm3649 = vcmp.le.f32.partialorder %v3585, 15.0
      %vm3650 = vcmp.le.f32.partialorder %v3586, 15.0
      %vm3651 = vcmp.le.f32.partialorder %v3587, 15.0
      %vm3652 = vcmp.le.f32.partialorder %v3588, 15.0
      %vm3653 = vcmp.le.f32.partialorder %v3589, 15.0
      %vm3654 = vcmp.le.f32.partialorder %v3590, 15.0
      %vm3655 = vcmp.le.f32.partialorder %v3591, 15.0
      %vm3656 = vcmp.le.f32.partialorder %v3592, 15.0
      %vm3657 = vcmp.le.f32.partialorder %v3593, 15.0
      %vm3658 = vcmp.le.f32.partialorder %v3594, 15.0
      %vm3659 = vcmp.le.f32.partialorder %v3595, 15.0
      %vm3660 = vcmp.le.f32.partialorder %v3596, 15.0
      %vm3661 = vcmp.le.f32.partialorder %v3597, 15.0
      %vm3662 = vcmp.le.f32.partialorder %v3598, 15.0
      %vm3663 = vcmp.le.f32.partialorder %v3599, 15.0
      %vm3664 = vcmp.le.f32.partialorder %v3600, 15.0
      %vm3665 = vcmp.le.f32.partialorder %v3601, 15.0
      %vm3666 = vcmp.le.f32.partialorder %v3602, 15.0
      %vm3667 = vcmp.le.f32.partialorder %v3603, 15.0
      %vm3668 = vcmp.le.f32.partialorder %v3604, 15.0
      %vm3669 = vcmp.le.f32.partialorder %v3605, 15.0
      %vm3670 = vcmp.le.f32.partialorder %v3606, 15.0
      %vm3671 = vcmp.le.f32.partialorder %v3607, 15.0
      %vm3672 = vcmp.le.f32.partialorder %v3608, 15.0
      %vm3673 = vcmp.le.f32.partialorder %v3609, 15.0
      %vm3674 = vcmp.le.f32.partialorder %v3610, 15.0
      %vm3675 = vcmp.le.f32.partialorder %v3611, 15.0
      %vm3676 = vcmp.le.f32.partialorder %v3612, 15.0
      %vm3677 = vcmp.le.f32.partialorder %v3613, 15.0
      %vm3678 = vcmp.le.f32.partialorder %v3614, 15.0
      %vm3679 = vcmp.le.f32.partialorder %v3615, 15.0
      %vm3680 = vcmp.le.f32.partialorder %v3616, 15.0
      %vm3681 = vmand %vm3617, %vm3649
      %vm3682 = vmand %vm3618, %vm3650
      %vm3683 = vmand %vm3619, %vm3651
      %vm3684 = vmand %vm3620, %vm3652
      %vm3685 = vmand %vm3621, %vm3653
      %vm3686 = vmand %vm3622, %vm3654
      %vm3687 = vmand %vm3623, %vm3655
      %vm3688 = vmand %vm3624, %vm3656
      %vm3689 = vmand %vm3625, %vm3657
      %vm3690 = vmand %vm3626, %vm3658
      %vm3691 = vmand %vm3627, %vm3659
      %vm3692 = vmand %vm3628, %vm3660
      %vm3693 = vmand %vm3629, %vm3661
      %vm3694 = vmand %vm3630, %vm3662
      %vm3695 = vmand %vm3631, %vm3663
      %vm3696 = vmand %vm3632, %vm3664
      %vm3697 = vmand %vm3633, %vm3665
      %vm3698 = vmand %vm3634, %vm3666
      %vm3699 = vmand %vm3635, %vm3667
      %vm3700 = vmand %vm3636, %vm3668
      %vm3701 = vmand %vm3637, %vm3669
      %vm3702 = vmand %vm3638, %vm3670
      %vm3703 = vmand %vm3639, %vm3671
      %vm3704 = vmand %vm3640, %vm3672
      %vm3705 = vmand %vm3641, %vm3673
      %vm3706 = vmand %vm3642, %vm3674
      %vm3707 = vmand %vm3643, %vm3675
      %vm3708 = vmand %vm3644, %vm3676
      %vm3709 = vmand %vm3645, %vm3677
      %vm3710 = vmand %vm3646, %vm3678
      %vm3711 = vmand %vm3647, %vm3679
      %vm3712 = vmand %vm3648, %vm3680
      %v3713 = vsel %vm3681, 1, 0
      %v3714 = vsel %vm3682, 1, 0
      %v3715 = vsel %vm3683, 1, 0
      %v3716 = vsel %vm3684, 1, 0
      %v3717 = vsel %vm3685, 1, 0
      %v3718 = vsel %vm3686, 1, 0
      %v3719 = vsel %vm3687, 1, 0
      %v3720 = vsel %vm3688, 1, 0
      %v3721 = vsel %vm3689, 1, 0
      %v3722 = vsel %vm3690, 1, 0
      %v3723 = vsel %vm3691, 1, 0
      %v3724 = vsel %vm3692, 1, 0
      %v3725 = vsel %vm3693, 1, 0
      %v3726 = vsel %vm3694, 1, 0
      %v3727 = vsel %vm3695, 1, 0
      %v3728 = vsel %vm3696, 1, 0
      %v3729 = vsel %vm3697, 1, 0
      %v3730 = vsel %vm3698, 1, 0
      %v3731 = vsel %vm3699, 1, 0
      %v3732 = vsel %vm3700, 1, 0
      %v3733 = vsel %vm3701, 1, 0
      %v3734 = vsel %vm3702, 1, 0
      %v3735 = vsel %vm3703, 1, 0
      %v3736 = vsel %vm3704, 1, 0
      %v3737 = vsel %vm3705, 1, 0
      %v3738 = vsel %vm3706, 1, 0
      %v3739 = vsel %vm3707, 1, 0
      %v3740 = vsel %vm3708, 1, 0
      %v3741 = vsel %vm3709, 1, 0
      %v3742 = vsel %vm3710, 1, 0
      %v3743 = vsel %vm3711, 1, 0
      %v3744 = vsel %vm3712, 1, 0
      %3745 = vset.pattern.permute.xlu0 0
      %3746 = vperm.xlu0 %3745, %v3713
      %v3747 = vpop.permute.xlu0 %3746
      %3748 = vset.pattern.permute.xlu0 0
      %3749 = vperm.xlu0 %3748, %v3714
      %v3750 = vpop.permute.xlu0 %3749
      %3751 = vset.pattern.permute.xlu0 0
      %3752 = vperm.xlu0 %3751, %v3715
      %v3753 = vpop.permute.xlu0 %3752
      %3754 = vset.pattern.permute.xlu0 0
      %3755 = vperm.xlu0 %3754, %v3716
      %v3756 = vpop.permute.xlu0 %3755
      %3757 = vset.pattern.permute.xlu0 0
      %3758 = vperm.xlu0 %3757, %v3717
      %v3759 = vpop.permute.xlu0 %3758
      %3760 = vset.pattern.permute.xlu0 0
      %3761 = vperm.xlu0 %3760, %v3718
      %v3762 = vpop.permute.xlu0 %3761
      %3763 = vset.pattern.permute.xlu0 0
      %3764 = vperm.xlu0 %3763, %v3719
      %v3765 = vpop.permute.xlu0 %3764
      %3766 = vset.pattern.permute.xlu0 0
      %3767 = vperm.xlu0 %3766, %v3720
      %v3768 = vpop.permute.xlu0 %3767
      %3769 = vset.pattern.permute.xlu0 0
      %3770 = vperm.xlu0 %3769, %v3721
      %v3771 = vpop.permute.xlu0 %3770
      %3772 = vset.pattern.permute.xlu0 0
      %3773 = vperm.xlu0 %3772, %v3722
      %v3774 = vpop.permute.xlu0 %3773
      %3775 = vset.pattern.permute.xlu0 0
      %3776 = vperm.xlu0 %3775, %v3723
      %v3777 = vpop.permute.xlu0 %3776
      %3778 = vset.pattern.permute.xlu0 0
      %3779 = vperm.xlu0 %3778, %v3724
      %v3780 = vpop.permute.xlu0 %3779
      %3781 = vset.pattern.permute.xlu0 0
      %3782 = vperm.xlu0 %3781, %v3725
      %v3783 = vpop.permute.xlu0 %3782
      %3784 = vset.pattern.permute.xlu0 0
      %3785 = vperm.xlu0 %3784, %v3726
      %v3786 = vpop.permute.xlu0 %3785
      %3787 = vset.pattern.permute.xlu0 0
      %3788 = vperm.xlu0 %3787, %v3727
      %v3789 = vpop.permute.xlu0 %3788
      %3790 = vset.pattern.permute.xlu0 0
      %3791 = vperm.xlu0 %3790, %v3728
      %v3792 = vpop.permute.xlu0 %3791
      %3793 = vset.pattern.permute.xlu0 0
      %3794 = vperm.xlu0 %3793, %v3729
      %v3795 = vpop.permute.xlu0 %3794
      %3796 = vset.pattern.permute.xlu0 0
      %3797 = vperm.xlu0 %3796, %v3730
      %v3798 = vpop.permute.xlu0 %3797
      %3799 = vset.pattern.permute.xlu0 0
      %3800 = vperm.xlu0 %3799, %v3731
      %v3801 = vpop.permute.xlu0 %3800
      %3802 = vset.pattern.permute.xlu0 0
      %3803 = vperm.xlu0 %3802, %v3732
      %v3804 = vpop.permute.xlu0 %3803
      %3805 = vset.pattern.permute.xlu0 0
      %3806 = vperm.xlu0 %3805, %v3733
      %v3807 = vpop.permute.xlu0 %3806
      %3808 = vset.pattern.permute.xlu0 0
      %3809 = vperm.xlu0 %3808, %v3734
      %v3810 = vpop.permute.xlu0 %3809
      %3811 = vset.pattern.permute.xlu0 0
      %3812 = vperm.xlu0 %3811, %v3735
      %v3813 = vpop.permute.xlu0 %3812
      %3814 = vset.pattern.permute.xlu0 0
      %3815 = vperm.xlu0 %3814, %v3736
      %v3816 = vpop.permute.xlu0 %3815
      %3817 = vset.pattern.permute.xlu0 0
      %3818 = vperm.xlu0 %3817, %v3737
      %v3819 = vpop.permute.xlu0 %3818
      %3820 = vset.pattern.permute.xlu0 0
      %3821 = vperm.xlu0 %3820, %v3738
      %v3822 = vpop.permute.xlu0 %3821
      %3823 = vset.pattern.permute.xlu0 0
      %3824 = vperm.xlu0 %3823, %v3739
      %v3825 = vpop.permute.xlu0 %3824
      %3826 = vset.pattern.permute.xlu0 0
      %3827 = vperm.xlu0 %3826, %v3740
      %v3828 = vpop.permute.xlu0 %3827
      %3829 = vset.pattern.permute.xlu0 0
      %3830 = vperm.xlu0 %3829, %v3741
      %v3831 = vpop.permute.xlu0 %3830
      %3832 = vset.pattern.permute.xlu0 0
      %3833 = vperm.xlu0 %3832, %v3742
      %v3834 = vpop.permute.xlu0 %3833
      %3835 = vset.pattern.permute.xlu0 0
      %3836 = vperm.xlu0 %3835, %v3743
      %v3837 = vpop.permute.xlu0 %3836
      %3838 = vset.pattern.permute.xlu0 0
      %3839 = vperm.xlu0 %3838, %v3744
      %v3840 = vpop.permute.xlu0 %3839
      %vm3841 = vcmp.eq.s32.totalorder %v3747, 1
      %vm3842 = vcmp.eq.s32.totalorder %v3750, 1
      %vm3843 = vcmp.eq.s32.totalorder %v3753, 1
      %vm3844 = vcmp.eq.s32.totalorder %v3756, 1
      %vm3845 = vcmp.eq.s32.totalorder %v3759, 1
      %vm3846 = vcmp.eq.s32.totalorder %v3762, 1
      %vm3847 = vcmp.eq.s32.totalorder %v3765, 1
      %vm3848 = vcmp.eq.s32.totalorder %v3768, 1
      %vm3849 = vcmp.eq.s32.totalorder %v3771, 1
      %vm3850 = vcmp.eq.s32.totalorder %v3774, 1
      %vm3851 = vcmp.eq.s32.totalorder %v3777, 1
      %vm3852 = vcmp.eq.s32.totalorder %v3780, 1
      %vm3853 = vcmp.eq.s32.totalorder %v3783, 1
      %vm3854 = vcmp.eq.s32.totalorder %v3786, 1
      %vm3855 = vcmp.eq.s32.totalorder %v3789, 1
      %vm3856 = vcmp.eq.s32.totalorder %v3792, 1
      %vm3857 = vcmp.eq.s32.totalorder %v3795, 1
      %vm3858 = vcmp.eq.s32.totalorder %v3798, 1
      %vm3859 = vcmp.eq.s32.totalorder %v3801, 1
      %vm3860 = vcmp.eq.s32.totalorder %v3804, 1
      %vm3861 = vcmp.eq.s32.totalorder %v3807, 1
      %vm3862 = vcmp.eq.s32.totalorder %v3810, 1
      %vm3863 = vcmp.eq.s32.totalorder %v3813, 1
      %vm3864 = vcmp.eq.s32.totalorder %v3816, 1
      %vm3865 = vcmp.eq.s32.totalorder %v3819, 1
      %vm3866 = vcmp.eq.s32.totalorder %v3822, 1
      %vm3867 = vcmp.eq.s32.totalorder %v3825, 1
      %vm3868 = vcmp.eq.s32.totalorder %v3828, 1
      %vm3869 = vcmp.eq.s32.totalorder %v3831, 1
      %vm3870 = vcmp.eq.s32.totalorder %v3834, 1
      %vm3871 = vcmp.eq.s32.totalorder %v3837, 1
      %vm3872 = vcmp.eq.s32.totalorder %v3840, 1
      %v3873 = vsel %vm3841, %v3553, 0.0
      %v3874 = vsel %vm3842, %v3554, 0.0
      %v3875 = vsel %vm3843, %v3555, 0.0
      %v3876 = vsel %vm3844, %v3556, 0.0
      %v3877 = vsel %vm3845, %v3557, 0.0
      %v3878 = vsel %vm3846, %v3558, 0.0
      %v3879 = vsel %vm3847, %v3559, 0.0
      %v3880 = vsel %vm3848, %v3560, 0.0
      %v3881 = vsel %vm3849, %v3561, 0.0
      %v3882 = vsel %vm3850, %v3562, 0.0
      %v3883 = vsel %vm3851, %v3563, 0.0
      %v3884 = vsel %vm3852, %v3564, 0.0
      %v3885 = vsel %vm3853, %v3565, 0.0
      %v3886 = vsel %vm3854, %v3566, 0.0
      %v3887 = vsel %vm3855, %v3567, 0.0
      %v3888 = vsel %vm3856, %v3568, 0.0
      %v3889 = vsel %vm3857, %v3569, 0.0
      %v3890 = vsel %vm3858, %v3570, 0.0
      %v3891 = vsel %vm3859, %v3571, 0.0
      %v3892 = vsel %vm3860, %v3572, 0.0
      %v3893 = vsel %vm3861, %v3573, 0.0
      %v3894 = vsel %vm3862, %v3574, 0.0
      %v3895 = vsel %vm3863, %v3575, 0.0
      %v3896 = vsel %vm3864, %v3576, 0.0
      %v3897 = vsel %vm3865, %v3577, 0.0
      %v3898 = vsel %vm3866, %v3578, 0.0
      %v3899 = vsel %vm3867, %v3579, 0.0
      %v3900 = vsel %vm3868, %v3580, 0.0
      %v3901 = vsel %vm3869, %v3581, 0.0
      %v3902 = vsel %vm3870, %v3582, 0.0
      %v3903 = vsel %vm3871, %v3583, 0.0
      %v3904 = vsel %vm3872, %v3584, 0.0
      %v3905 = vadd.f32 %v3188, %v3873
      %v3906 = vadd.f32 %v3189, %v3874
      %v3907 = vadd.f32 %v3190, %v3875
      %v3908 = vadd.f32 %v3191, %v3876
      %v3909 = vadd.f32 %v3192, %v3877
      %v3910 = vadd.f32 %v3193, %v3878
      %v3911 = vadd.f32 %v3194, %v3879
      %v3912 = vadd.f32 %v3195, %v3880
      %v3913 = vadd.f32 %v3196, %v3881
      %v3914 = vadd.f32 %v3197, %v3882
      %v3915 = vadd.f32 %v3198, %v3883
      %v3916 = vadd.f32 %v3199, %v3884
      %v3917 = vadd.f32 %v3200, %v3885
      %v3918 = vadd.f32 %v3201, %v3886
      %v3919 = vadd.f32 %v3202, %v3887
      %v3920 = vadd.f32 %v3203, %v3888
      %v3921 = vadd.f32 %v3204, %v3889
      %v3922 = vadd.f32 %v3205, %v3890
      %v3923 = vadd.f32 %v3206, %v3891
      %v3924 = vadd.f32 %v3207, %v3892
      %v3925 = vadd.f32 %v3208, %v3893
      %v3926 = vadd.f32 %v3209, %v3894
      %v3927 = vadd.f32 %v3210, %v3895
      %v3928 = vadd.f32 %v3211, %v3896
      %v3929 = vadd.f32 %v3212, %v3897
      %v3930 = vadd.f32 %v3213, %v3898
      %v3931 = vadd.f32 %v3214, %v3899
      %v3932 = vadd.f32 %v3215, %v3900
      %v3933 = vadd.f32 %v3216, %v3901
      %v3934 = vadd.f32 %v3217, %v3902
      %v3935 = vadd.f32 %v3218, %v3903
      %v3936 = vadd.f32 %v3219, %v3904
      %v3937 = vld [vmem:[%s5] sm:$0x1]
      %v3939 = vperm.slane %v3937, 0
      %v3941 = vadd.f32 %v3905, %v3939
      %v3942 = vadd.f32 %v3906, %v3939
      %v3943 = vadd.f32 %v3907, %v3939
      %v3944 = vadd.f32 %v3908, %v3939
      %v3945 = vadd.f32 %v3909, %v3939
      %v3946 = vadd.f32 %v3910, %v3939
      %v3947 = vadd.f32 %v3911, %v3939
      %v3948 = vadd.f32 %v3912, %v3939
      %v3949 = vadd.f32 %v3913, %v3939
      %v3950 = vadd.f32 %v3914, %v3939
      %v3951 = vadd.f32 %v3915, %v3939
      %v3952 = vadd.f32 %v3916, %v3939
      %v3953 = vadd.f32 %v3917, %v3939
      %v3954 = vadd.f32 %v3918, %v3939
      %v3955 = vadd.f32 %v3919, %v3939
      %v3956 = vadd.f32 %v3920, %v3939
      %v3957 = vadd.f32 %v3921, %v3939
      %v3958 = vadd.f32 %v3922, %v3939
      %v3959 = vadd.f32 %v3923, %v3939
      %v3960 = vadd.f32 %v3924, %v3939
      %v3961 = vadd.f32 %v3925, %v3939
      %v3962 = vadd.f32 %v3926, %v3939
      %v3963 = vadd.f32 %v3927, %v3939
      %v3964 = vadd.f32 %v3928, %v3939
      %v3965 = vadd.f32 %v3929, %v3939
      %v3966 = vadd.f32 %v3930, %v3939
      %v3967 = vadd.f32 %v3931, %v3939
      %v3968 = vadd.f32 %v3932, %v3939
      %v3969 = vadd.f32 %v3933, %v3939
      %v3970 = vadd.f32 %v3934, %v3939
      %v3971 = vadd.f32 %v3935, %v3939
      %v3972 = vadd.f32 %v3936, %v3939
      %v3973 = vmax.f32 %v3941, 0.0
      %v3974 = vmax.f32 %v3942, 0.0
      %v3975 = vmax.f32 %v3943, 0.0
      %v3976 = vmax.f32 %v3944, 0.0
      %v3977 = vmax.f32 %v3945, 0.0
      %v3978 = vmax.f32 %v3946, 0.0
      %v3979 = vmax.f32 %v3947, 0.0
      %v3980 = vmax.f32 %v3948, 0.0
      %v3981 = vmax.f32 %v3949, 0.0
      %v3982 = vmax.f32 %v3950, 0.0
      %v3983 = vmax.f32 %v3951, 0.0
      %v3984 = vmax.f32 %v3952, 0.0
      %v3985 = vmax.f32 %v3953, 0.0
      %v3986 = vmax.f32 %v3954, 0.0
      %v3987 = vmax.f32 %v3955, 0.0
      %v3988 = vmax.f32 %v3956, 0.0
      %v3989 = vmax.f32 %v3957, 0.0
      %v3990 = vmax.f32 %v3958, 0.0
      %v3991 = vmax.f32 %v3959, 0.0
      %v3992 = vmax.f32 %v3960, 0.0
      %v3993 = vmax.f32 %v3961, 0.0
      %v3994 = vmax.f32 %v3962, 0.0
      %v3995 = vmax.f32 %v3963, 0.0
      %v3996 = vmax.f32 %v3964, 0.0
      %v3997 = vmax.f32 %v3965, 0.0
      %v3998 = vmax.f32 %v3966, 0.0
      %v3999 = vmax.f32 %v3967, 0.0
      %v4000 = vmax.f32 %v3968, 0.0
      %v4001 = vmax.f32 %v3969, 0.0
      %v4002 = vmax.f32 %v3970, 0.0
      %v4003 = vmax.f32 %v3971, 0.0
      %v4004 = vmax.f32 %v3972, 0.0
      %v4005 = vld [vmem:[%s6] sm:$0xff]
      %v4006 = vpack.c.bf16 %v3974, %v3973
      %v4007 = vpack.c.bf16 %v3976, %v3975
      %v4008 = vpack.c.bf16 %v3978, %v3977
      %v4009 = vpack.c.bf16 %v3980, %v3979
      %v4010 = vpack.c.bf16 %v3982, %v3981
      %v4011 = vpack.c.bf16 %v3984, %v3983
      %v4012 = vpack.c.bf16 %v3986, %v3985
      %v4013 = vpack.c.bf16 %v3988, %v3987
      %v4014 = vpack.c.bf16 %v3990, %v3989
      %v4015 = vpack.c.bf16 %v3992, %v3991
      %v4016 = vpack.c.bf16 %v3994, %v3993
      %v4017 = vpack.c.bf16 %v3996, %v3995
      %v4018 = vpack.c.bf16 %v3998, %v3997
      %v4019 = vpack.c.bf16 %v4000, %v3999
      %v4020 = vpack.c.bf16 %v4002, %v4001
      %v4021 = vpack.c.bf16 %v4004, %v4003
      %v4022 = vpack.c.bf16 %v4005, %v4005
      %v4023 = vld [vmem:[%s7] sm:$0x1]
      %v4025 = vperm.slane %v4023, 0
      %v4028 = vsel %vm388, %v4006, 0
      %v4031 = vsel %vm388, %v4007, 0
      %v4034 = vsel %vm388, %v4008, 0
      %v4037 = vsel %vm388, %v4009, 0
      %v4040 = vsel %vm388, %v4010, 0
      %v4043 = vsel %vm388, %v4011, 0
      %v4046 = vsel %vm388, %v4012, 0
      %v4049 = vsel %vm388, %v4013, 0
      %v4052 = vsel %vm388, %v4014, 0
      %v4055 = vsel %vm388, %v4015, 0
      %v4058 = vsel %vm388, %v4016, 0
      %v4061 = vsel %vm388, %v4017, 0
      %v4064 = vsel %vm388, %v4018, 0
      %v4067 = vsel %vm388, %v4019, 0
      %v4070 = vsel %vm388, %v4020, 0
      %v4073 = vsel %vm388, %v4021, 0
      %v4076 = vsel %vm437, %v4022, 0
      %4078 = vmatpush.bf16.msra.mxu0 0
      %4079 = vmatpush.bf16.msra.mxu0 0
      %4080 = vmatpush.bf16.msra.mxu0 0
      %4081 = vmatpush.bf16.msra.mxu0 0
      %4082 = vmatpush.bf16.msra.mxu0 0
      %4083 = vmatpush.bf16.msra.mxu0 0
      %4084 = vmatpush.bf16.msra.mxu0 0
      %4085 = vmatpush.bf16.msra.mxu0 %v4076
      %4086 = vmatmul.bf16.gmra.mxu0 %v4028
      %v4087 = vpop.f32.mrf.mxu0
      %v4088 = vadd.f32 %v4025, %v4087
      %v4089 = vpop.f32.mrf.mxu0
      %v4090 = vadd.f32 %v4025, %v4089
      %4091 = vmatmul.bf16.gmra.mxu0 %v4031
      %v4092 = vpop.f32.mrf.mxu0
      %v4093 = vadd.f32 %v4025, %v4092
      %v4094 = vpop.f32.mrf.mxu0
      %v4095 = vadd.f32 %v4025, %v4094
      %4096 = vmatmul.bf16.gmra.mxu0 %v4034
      %v4097 = vpop.f32.mrf.mxu0
      %v4098 = vadd.f32 %v4025, %v4097
      %v4099 = vpop.f32.mrf.mxu0
      %v4100 = vadd.f32 %v4025, %v4099
      %4101 = vmatmul.bf16.gmra.mxu0 %v4037
      %v4102 = vpop.f32.mrf.mxu0
      %v4103 = vadd.f32 %v4025, %v4102
      %v4104 = vpop.f32.mrf.mxu0
      %v4105 = vadd.f32 %v4025, %v4104
      %4106 = vmatmul.bf16.gmra.mxu0 %v4040
      %v4107 = vpop.f32.mrf.mxu0
      %v4108 = vadd.f32 %v4025, %v4107
      %v4109 = vpop.f32.mrf.mxu0
      %v4110 = vadd.f32 %v4025, %v4109
      %4111 = vmatmul.bf16.gmra.mxu0 %v4043
      %v4112 = vpop.f32.mrf.mxu0
      %v4113 = vadd.f32 %v4025, %v4112
      %v4114 = vpop.f32.mrf.mxu0
      %v4115 = vadd.f32 %v4025, %v4114
      %4116 = vmatmul.bf16.gmra.mxu0 %v4046
      %v4117 = vpop.f32.mrf.mxu0
      %v4118 = vadd.f32 %v4025, %v4117
      %v4119 = vpop.f32.mrf.mxu0
      %v4120 = vadd.f32 %v4025, %v4119
      %4121 = vmatmul.bf16.gmra.mxu0 %v4049
      %v4122 = vpop.f32.mrf.mxu0
      %v4123 = vadd.f32 %v4025, %v4122
      %v4124 = vpop.f32.mrf.mxu0
      %v4125 = vadd.f32 %v4025, %v4124
      %4126 = vmatmul.bf16.gmra.mxu0 %v4052
      %v4127 = vpop.f32.mrf.mxu0
      %v4128 = vadd.f32 %v4025, %v4127
      %v4129 = vpop.f32.mrf.mxu0
      %v4130 = vadd.f32 %v4025, %v4129
      %4131 = vmatmul.bf16.gmra.mxu0 %v4055
      %v4132 = vpop.f32.mrf.mxu0
      %v4133 = vadd.f32 %v4025, %v4132
      %v4134 = vpop.f32.mrf.mxu0
      %v4135 = vadd.f32 %v4025, %v4134
      %4136 = vmatmul.bf16.gmra.mxu0 %v4058
      %v4137 = vpop.f32.mrf.mxu0
      %v4138 = vadd.f32 %v4025, %v4137
      %v4139 = vpop.f32.mrf.mxu0
      %v4140 = vadd.f32 %v4025, %v4139
      %4141 = vmatmul.bf16.gmra.mxu0 %v4061
      %v4142 = vpop.f32.mrf.mxu0
      %v4143 = vadd.f32 %v4025, %v4142
      %v4144 = vpop.f32.mrf.mxu0
      %v4145 = vadd.f32 %v4025, %v4144
      %4146 = vmatmul.bf16.gmra.mxu0 %v4064
      %v4147 = vpop.f32.mrf.mxu0
      %v4148 = vadd.f32 %v4025, %v4147
      %v4149 = vpop.f32.mrf.mxu0
      %v4150 = vadd.f32 %v4025, %v4149
      %4151 = vmatmul.bf16.gmra.mxu0 %v4067
      %v4152 = vpop.f32.mrf.mxu0
      %v4153 = vadd.f32 %v4025, %v4152
      %v4154 = vpop.f32.mrf.mxu0
      %v4155 = vadd.f32 %v4025, %v4154
      %4156 = vmatmul.bf16.gmra.mxu0 %v4070
      %v4157 = vpop.f32.mrf.mxu0
      %v4158 = vadd.f32 %v4025, %v4157
      %v4159 = vpop.f32.mrf.mxu0
      %v4160 = vadd.f32 %v4025, %v4159
      %4161 = vmatmul.bf16.gmra.mxu0 %v4073
      %v4162 = vpop.f32.mrf.mxu0
      %v4163 = vadd.f32 %v4025, %v4162
      %v4164 = vpop.f32.mrf.mxu0
      %v4165 = vadd.f32 %v4025, %v4164
      %4166 = vdwg.mxu0
      %v4167 = vld [vmem:[%s8] sm:$0xff]
      %v4169 = vsel %vm388, %v334, 0
      %v4172 = vsel %vm388, %v335, 0
      %v4175 = vsel %vm388, %v336, 0
      %v4178 = vsel %vm388, %v337, 0
      %v4181 = vsel %vm388, %v338, 0
      %v4184 = vsel %vm388, %v339, 0
      %v4187 = vsel %vm388, %v340, 0
      %v4190 = vsel %vm388, %v341, 0
      %v4193 = vsel %vm388, %v342, 0
      %v4196 = vsel %vm388, %v343, 0
      %v4199 = vsel %vm388, %v344, 0
      %v4202 = vsel %vm388, %v345, 0
      %v4205 = vsel %vm388, %v346, 0
      %v4208 = vsel %vm388, %v347, 0
      %v4211 = vsel %vm388, %v348, 0
      %v4214 = vsel %vm388, %v349, 0
      %v4217 = vsel %vm388, %v350, 0
      %v4220 = vsel %vm388, %v351, 0
      %v4223 = vsel %vm388, %v352, 0
      %v4226 = vsel %vm388, %v353, 0
      %v4229 = vsel %vm388, %v354, 0
      %v4232 = vsel %vm388, %v355, 0
      %v4235 = vsel %vm388, %v356, 0
      %v4238 = vsel %vm388, %v357, 0
      %v4241 = vsel %vm388, %v358, 0
      %v4244 = vsel %vm388, %v359, 0
      %v4247 = vsel %vm388, %v360, 0
      %v4250 = vsel %vm388, %v361, 0
      %v4253 = vsel %vm388, %v362, 0
      %v4256 = vsel %vm388, %v363, 0
      %v4259 = vsel %vm388, %v364, 0
      %v4262 = vsel %vm388, %v365, 0
      %4264 = vmatpush.msra.mxu0 0.0
      %4265 = vmatpush.msra.mxu0 0.0
      %4266 = vmatpush.msra.mxu0 0.0
      %4267 = vmatpush.msra.mxu0 0.0
      %4268 = vmatpush.msra.mxu0 0.0
      %4269 = vmatpush.msra.mxu0 0.0
      %4270 = vmatpush.msra.mxu0 0.0
      %4271 = vmatpush.msra.mxu0 0.0
      %4272 = vmatpush.msra.mxu0 0.0
      %4273 = vmatpush.msra.mxu0 0.0
      %4274 = vmatpush.msra.mxu0 0.0
      %4275 = vmatpush.msra.mxu0 0.0
      %4276 = vmatpush.msra.mxu0 0.0
      %4277 = vmatpush.msra.mxu0 0.0
      %4278 = vmatpush.msra.mxu0 0.0
      %4279 = vmatpush.msra.mxu0 %v4167
      %4280 = vmatmul.f32.gmra.mxu0 %v4169
      %v4281 = vpop.f32.mrf.mxu0
      %v4282 = vadd.f32 0.0, %v4281
      %4283 = vmatmul.f32.gmra.mxu0 %v4172
      %v4284 = vpop.f32.mrf.mxu0
      %v4285 = vadd.f32 0.0, %v4284
      %4286 = vmatmul.f32.gmra.mxu0 %v4175
      %v4287 = vpop.f32.mrf.mxu0
      %v4288 = vadd.f32 0.0, %v4287
      %4289 = vmatmul.f32.gmra.mxu0 %v4178
      %v4290 = vpop.f32.mrf.mxu0
      %v4291 = vadd.f32 0.0, %v4290
      %4292 = vmatmul.f32.gmra.mxu0 %v4181
      %v4293 = vpop.f32.mrf.mxu0
      %v4294 = vadd.f32 0.0, %v4293
      %4295 = vmatmul.f32.gmra.mxu0 %v4184
      %v4296 = vpop.f32.mrf.mxu0
      %v4297 = vadd.f32 0.0, %v4296
      %4298 = vmatmul.f32.gmra.mxu0 %v4187
      %v4299 = vpop.f32.mrf.mxu0
      %v4300 = vadd.f32 0.0, %v4299
      %4301 = vmatmul.f32.gmra.mxu0 %v4190
      %v4302 = vpop.f32.mrf.mxu0
      %v4303 = vadd.f32 0.0, %v4302
      %4304 = vmatmul.f32.gmra.mxu0 %v4193
      %v4305 = vpop.f32.mrf.mxu0
      %v4306 = vadd.f32 0.0, %v4305
      %4307 = vmatmul.f32.gmra.mxu0 %v4196
      %v4308 = vpop.f32.mrf.mxu0
      %v4309 = vadd.f32 0.0, %v4308
      %4310 = vmatmul.f32.gmra.mxu0 %v4199
      %v4311 = vpop.f32.mrf.mxu0
      %v4312 = vadd.f32 0.0, %v4311
      %4313 = vmatmul.f32.gmra.mxu0 %v4202
      %v4314 = vpop.f32.mrf.mxu0
      %v4315 = vadd.f32 0.0, %v4314
      %4316 = vmatmul.f32.gmra.mxu0 %v4205
      %v4317 = vpop.f32.mrf.mxu0
      %v4318 = vadd.f32 0.0, %v4317
      %4319 = vmatmul.f32.gmra.mxu0 %v4208
      %v4320 = vpop.f32.mrf.mxu0
      %v4321 = vadd.f32 0.0, %v4320
      %4322 = vmatmul.f32.gmra.mxu0 %v4211
      %v4323 = vpop.f32.mrf.mxu0
      %v4324 = vadd.f32 0.0, %v4323
      %4325 = vmatmul.f32.gmra.mxu0 %v4214
      %v4326 = vpop.f32.mrf.mxu0
      %v4327 = vadd.f32 0.0, %v4326
      %4328 = vmatmul.f32.gmra.mxu0 %v4217
      %v4329 = vpop.f32.mrf.mxu0
      %v4330 = vadd.f32 0.0, %v4329
      %4331 = vmatmul.f32.gmra.mxu0 %v4220
      %v4332 = vpop.f32.mrf.mxu0
      %v4333 = vadd.f32 0.0, %v4332
      %4334 = vmatmul.f32.gmra.mxu0 %v4223
      %v4335 = vpop.f32.mrf.mxu0
      %v4336 = vadd.f32 0.0, %v4335
      %4337 = vmatmul.f32.gmra.mxu0 %v4226
      %v4338 = vpop.f32.mrf.mxu0
      %v4339 = vadd.f32 0.0, %v4338
      %4340 = vmatmul.f32.gmra.mxu0 %v4229
      %v4341 = vpop.f32.mrf.mxu0
      %v4342 = vadd.f32 0.0, %v4341
      %4343 = vmatmul.f32.gmra.mxu0 %v4232
      %v4344 = vpop.f32.mrf.mxu0
      %v4345 = vadd.f32 0.0, %v4344
      %4346 = vmatmul.f32.gmra.mxu0 %v4235
      %v4347 = vpop.f32.mrf.mxu0
      %v4348 = vadd.f32 0.0, %v4347
      %4349 = vmatmul.f32.gmra.mxu0 %v4238
      %v4350 = vpop.f32.mrf.mxu0
      %v4351 = vadd.f32 0.0, %v4350
      %4352 = vmatmul.f32.gmra.mxu0 %v4241
      %v4353 = vpop.f32.mrf.mxu0
      %v4354 = vadd.f32 0.0, %v4353
      %4355 = vmatmul.f32.gmra.mxu0 %v4244
      %v4356 = vpop.f32.mrf.mxu0
      %v4357 = vadd.f32 0.0, %v4356
      %4358 = vmatmul.f32.gmra.mxu0 %v4247
      %v4359 = vpop.f32.mrf.mxu0
      %v4360 = vadd.f32 0.0, %v4359
      %4361 = vmatmul.f32.gmra.mxu0 %v4250
      %v4362 = vpop.f32.mrf.mxu0
      %v4363 = vadd.f32 0.0, %v4362
      %4364 = vmatmul.f32.gmra.mxu0 %v4253
      %v4365 = vpop.f32.mrf.mxu0
      %v4366 = vadd.f32 0.0, %v4365
      %4367 = vmatmul.f32.gmra.mxu0 %v4256
      %v4368 = vpop.f32.mrf.mxu0
      %v4369 = vadd.f32 0.0, %v4368
      %4370 = vmatmul.f32.gmra.mxu0 %v4259
      %v4371 = vpop.f32.mrf.mxu0
      %v4372 = vadd.f32 0.0, %v4371
      %4373 = vmatmul.f32.gmra.mxu0 %v4262
      %v4374 = vpop.f32.mrf.mxu0
      %v4375 = vadd.f32 0.0, %v4374
      %4376 = vdwg.mxu0
      %v4377 = vadd.f32 %v4088, %v4282
      %v4378 = vadd.f32 %v4090, %v4285
      %v4379 = vadd.f32 %v4093, %v4288
      %v4380 = vadd.f32 %v4095, %v4291
      %v4381 = vadd.f32 %v4098, %v4294
      %v4382 = vadd.f32 %v4100, %v4297
      %v4383 = vadd.f32 %v4103, %v4300
      %v4384 = vadd.f32 %v4105, %v4303
      %v4385 = vadd.f32 %v4108, %v4306
      %v4386 = vadd.f32 %v4110, %v4309
      %v4387 = vadd.f32 %v4113, %v4312
      %v4388 = vadd.f32 %v4115, %v4315
      %v4389 = vadd.f32 %v4118, %v4318
      %v4390 = vadd.f32 %v4120, %v4321
      %v4391 = vadd.f32 %v4123, %v4324
      %v4392 = vadd.f32 %v4125, %v4327
      %v4393 = vadd.f32 %v4128, %v4330
      %v4394 = vadd.f32 %v4130, %v4333
      %v4395 = vadd.f32 %v4133, %v4336
      %v4396 = vadd.f32 %v4135, %v4339
      %v4397 = vadd.f32 %v4138, %v4342
      %v4398 = vadd.f32 %v4140, %v4345
      %v4399 = vadd.f32 %v4143, %v4348
      %v4400 = vadd.f32 %v4145, %v4351
      %v4401 = vadd.f32 %v4148, %v4354
      %v4402 = vadd.f32 %v4150, %v4357
      %v4403 = vadd.f32 %v4153, %v4360
      %v4404 = vadd.f32 %v4155, %v4363
      %v4405 = vadd.f32 %v4158, %v4366
      %v4406 = vadd.f32 %v4160, %v4369
      %v4407 = vadd.f32 %v4163, %v4372
      %v4408 = vadd.f32 %v4165, %v4375
      %vm4409 = vcmask 130048
      %4410 = vst.msk [vmem:[%s332] sm:$0xff] %vm4409, %v4377
      %4411 = vst.msk [vmem:[%s332 + $0x8] sm:$0xff] %vm4409, %v4378
      %4412 = vst.msk [vmem:[%s332 + $0x10] sm:$0xff] %vm4409, %v4379
      %4413 = vst.msk [vmem:[%s332 + $0x18] sm:$0xff] %vm4409, %v4380
      %4414 = vst.msk [vmem:[%s332 + $0x20] sm:$0xff] %vm4409, %v4381
      %4415 = vst.msk [vmem:[%s332 + $0x28] sm:$0xff] %vm4409, %v4382
      %4416 = vst.msk [vmem:[%s332 + $0x30] sm:$0xff] %vm4409, %v4383
      %4417 = vst.msk [vmem:[%s332 + $0x38] sm:$0xff] %vm4409, %v4384
      %4418 = vst.msk [vmem:[%s332 + $0x40] sm:$0xff] %vm4409, %v4385
      %4419 = vst.msk [vmem:[%s332 + $0x48] sm:$0xff] %vm4409, %v4386
      %4420 = vst.msk [vmem:[%s332 + $0x50] sm:$0xff] %vm4409, %v4387
      %4421 = vst.msk [vmem:[%s332 + $0x58] sm:$0xff] %vm4409, %v4388
      %4422 = vst.msk [vmem:[%s332 + $0x60] sm:$0xff] %vm4409, %v4389
      %4423 = vst.msk [vmem:[%s332 + $0x68] sm:$0xff] %vm4409, %v4390
      %4424 = vst.msk [vmem:[%s332 + $0x70] sm:$0xff] %vm4409, %v4391
      %4425 = vst.msk [vmem:[%s332 + $0x78] sm:$0xff] %vm4409, %v4392
      %4426 = vst.msk [vmem:[%s332 + $0x80] sm:$0xff] %vm4409, %v4393
      %4427 = vst.msk [vmem:[%s332 + $0x88] sm:$0xff] %vm4409, %v4394
      %4428 = vst.msk [vmem:[%s332 + $0x90] sm:$0xff] %vm4409, %v4395
      %4429 = vst.msk [vmem:[%s332 + $0x98] sm:$0xff] %vm4409, %v4396
      %4430 = vst.msk [vmem:[%s332 + $0xa0] sm:$0xff] %vm4409, %v4397
      %4431 = vst.msk [vmem:[%s332 + $0xa8] sm:$0xff] %vm4409, %v4398
      %4432 = vst.msk [vmem:[%s332 + $0xb0] sm:$0xff] %vm4409, %v4399
      %4433 = vst.msk [vmem:[%s332 + $0xb8] sm:$0xff] %vm4409, %v4400
      %4434 = vst.msk [vmem:[%s332 + $0xc0] sm:$0xff] %vm4409, %v4401
      %4435 = vst.msk [vmem:[%s332 + $0xc8] sm:$0xff] %vm4409, %v4402
      %4436 = vst.msk [vmem:[%s332 + $0xd0] sm:$0xff] %vm4409, %v4403
      %4437 = vst.msk [vmem:[%s332 + $0xd8] sm:$0xff] %vm4409, %v4404
      %4438 = vst.msk [vmem:[%s332 + $0xe0] sm:$0xff] %vm4409, %v4405
      %4439 = vst.msk [vmem:[%s332 + $0xe8] sm:$0xff] %vm4409, %v4406
      %4440 = vst.msk [vmem:[%s332 + $0xf0] sm:$0xff] %vm4409, %v4407
      %4441 = vst.msk [vmem:[%s332 + $0xf8] sm:$0xff] %vm4409, %v4408
      %p4442 = scmp.lt.s32.totalorder %s20, 1
      %s4443 = scalar_select %p4442, %s20, 1
      %s4444 = smul.addr %s4443, 32
      %s4445 = smul.addr %s4444, 8
      %s4446 = scalar_lea.vmem %s9, %s4445
      // Predicated region
      $region57: #{tpu_custom_call.1} parent=55 // pred_check
        %p4447 = pneg %p232
      $region58: #{tpu_custom_call.1} parent=55 // pred_check_branch
        %4449 = sbr.rel (%p4447) target = $region60
      $region59: #{tpu_custom_call.1} parent=55 // pred_region
        _
      $region60: #{tpu_custom_call.1} parent=55 // pred_fallthru
        _
    $region56: #{tpu_custom_call.1} parent=5 // pred_fallthru
      _
    %p4450 = scmp.le.s32.totalorder 2, %s15
    // Predicated region
    $region61: #{tpu_custom_call.1} parent=5 // pred_check
      %p4451 = pneg %p4450
    $region62: #{tpu_custom_call.1} parent=5 // pred_check_branch
      %4453 = sbr.rel (%p4451) target = $region64
    $region63: #{tpu_custom_call.1} parent=5 // pred_region
      %s4454 = ssub.s32 %s15, 2
      // Predicated region
      $region65: #{tpu_custom_call.1} parent=63 // pred_check
        %p4455 = pneg %p238
      $region66: #{tpu_custom_call.1} parent=63 // pred_check_branch
        %4457 = sbr.rel (%p4455) target = $region68
      $region67: #{tpu_custom_call.1} parent=63 // pred_region
        %p4458 = scmp.lt.s32.totalorder %s21, 1
        %s4459 = scalar_select %p4458, %s21, 1
        %s4460 = smul.addr %s4459, 32
        %s4461 = smul.addr %s4460, 8
        %s4462 = scalar_lea.vmem %s9, %s4461
      $region68: #{tpu_custom_call.1} parent=63 // pred_fallthru
        _
    $region64: #{tpu_custom_call.1} parent=5 // pred_fallthru
      _
  $region6: #{tpu_custom_call.1} parent=0 // loop_footer
    %s19 = sadd.s32 1, %s15
  $region7: #{tpu_custom_call.1} parent=0 // loop_footer_branch
    %14 = sbr.rel target = $region3
  $region8: #{tpu_custom_call.1} parent=0 // loop_exit
    _

</llo_original>
